<compile_context>
chip_gen: v7x
topology: tpu7x:2x2x1
jax: 0.10.0
libtpu: 0.0.40
codegen_flags: <defaults>
</compile_context>

<pallas_src>
import jax
import jax.numpy as jnp
from jax.experimental import pallas as pl
from jax.experimental.pallas import tpu as pltpu


def _round_up(x, m):
    return ((x + m - 1) // m) * m


def _pick_tiles(S, F):
    """Per-generation seq/FFN tile targets, capped to the (padded) problem size."""
    try:
        kind = jax.devices()[0].device_kind.lower()
    except Exception:  # pragma: no cover - be robust on unusual backends
        kind = ""
    if "v5" in kind:
        ts_t, tf_t = 256, 512
    elif "v6" in kind:
        ts_t, tf_t = 768, 512
    else:  # v7x and default
        ts_t, tf_t = 512, 512
    ts = min(ts_t, max(128, _round_up(S, 128)))
    tf = min(tf_t, max(128, _round_up(F, 128)))
    return ts, tf


# ---------------- Pallas kernel ----------------
def glm_mlp_kernel(x_ref, wgu_ref, wd_ref, o_ref, acc_ref):
    """One (seq_tile, ffn_tile) step: merged gate/up matmul -> SiLU*up -> partial down proj."""
    tf = wd_ref.shape[0]  # static FFN tile size

    # init accumulator at the start of each FFN reduction sweep
    @pl.when(pl.program_id(1) == 0)
    def _():
        acc_ref[...] = jnp.zeros_like(acc_ref)

    x = x_ref[...]                                                      # [ts, H] bf16
    # single N = 2*tf matmul for gate and up (merged dense_h_to_4h tile)
    gu = jnp.dot(x, wgu_ref[...], preferred_element_type=jnp.float32)  # [ts, 2*tf] f32
    gate = gu[:, :tf]                                                   # free lane slice
    up = gu[:, tf:]
    act = (gate * jax.nn.sigmoid(gate)) * up                            # SiluAndMul, f32 math

    # partial down projection for this FFN tile, accumulate in f32
    acc_ref[...] += jnp.dot(act.astype(wd_ref.dtype), wd_ref[...],
                            preferred_element_type=jnp.float32)         # [ts, H]

    # finalize: write the output tile once per seq tile (lane-dense store)
    @pl.when(pl.program_id(1) == pl.num_programs(1) - 1)
    def _():
        o_ref[...] = acc_ref[...].astype(o_ref.dtype)


# ---------------- pallas_call wrapper ----------------
def glm_mlp(hidden_states, w_gate, w_up, w_down, *, ts=None, tf=None):
    S, H = hidden_states.shape
    F = w_gate.shape[1]
    assert w_gate.shape == (H, F) and w_up.shape == (H, F) and w_down.shape == (F, H)

    if ts is None or tf is None:
        ats, atf = _pick_tiles(S, F)
        ts = ts if ts is not None else ats
        tf = tf if tf is not None else atf
    assert ts % 8 == 0 and tf % 128 == 0

    S_pad = _round_up(S, ts)
    F_pad = _round_up(F, tf)

    # pad ragged seq (zero rows, sliced off after) and ragged FFN (exact: silu(0)*up == 0,
    # and the matching zero rows of w_down contribute nothing).
    x = hidden_states
    if S_pad != S:
        x = jnp.pad(x, ((0, S_pad - S), (0, 0)))
    wg, wu, wd = w_gate, w_up, w_down
    if F_pad != F:
        wg = jnp.pad(wg, ((0, 0), (0, F_pad - F)))
        wu = jnp.pad(wu, ((0, 0), (0, F_pad - F)))
        wd = jnp.pad(wd, ((0, F_pad - F), (0, 0)))

    # Merge gate+up at tf granularity: block j's columns are [gate_j | up_j] (each tf wide).
    # (In a real deployment this re-layout happens once at weight-load time.)
    nj = F_pad // tf
    wgu = jnp.concatenate([wg.reshape(H, nj, tf), wu.reshape(H, nj, tf)], axis=2)
    wgu = wgu.reshape(H, nj * 2 * tf)

    grid = (S_pad // ts, nj)

    # VMEM budget: double-buffered x/out + merged gate/up tile + down tile + f32 acc.
    itm = jnp.dtype(hidden_states.dtype).itemsize
    wtm = jnp.dtype(w_gate.dtype).itemsize
    need = (2 * ts * H * itm            # x (double-buffered)
            + 2 * ts * H * itm          # out (double-buffered)
            + 2 * H * (2 * tf) * wtm    # merged gate/up weight tiles
            + 2 * tf * H * wtm          # down weight tiles
            + ts * H * 4)               # f32 accumulator
    vmem_limit = int(min(max(need + (4 << 20), 32 << 20), 100 << 20))

    out = pl.pallas_call(
        glm_mlp_kernel,
        out_shape=jax.ShapeDtypeStruct((S_pad, H), hidden_states.dtype),
        grid_spec=pltpu.PrefetchScalarGridSpec(
            num_scalar_prefetch=0,
            grid=grid,
            in_specs=[
                pl.BlockSpec((ts, H), lambda i, j: (i, 0)),        # hidden tile
                pl.BlockSpec((H, 2 * tf), lambda i, j: (0, j)),    # merged gate|up tile
                pl.BlockSpec((tf, H), lambda i, j: (j, 0)),        # down weight tile
            ],
            out_specs=pl.BlockSpec((ts, H), lambda i, j: (i, 0)),
            scratch_shapes=[pltpu.VMEM((ts, H), jnp.float32)],     # f32 accumulator
        ),
        compiler_params=pltpu.CompilerParams(
            dimension_semantics=("parallel", "arbitrary"),
            vmem_limit_bytes=vmem_limit),
    )(x, wgu, wd)

    return out[:S] if S_pad != S else out


# ---------------- pure-JAX reference (same dtypes) ----------------
def glm_mlp_ref(x, w_gate, w_up, w_down):
    gate = jnp.dot(x, w_gate, preferred_element_type=jnp.float32)
    up = jnp.dot(x, w_up, preferred_element_type=jnp.float32)
    act = (gate * jax.nn.sigmoid(gate)) * up
    out = jnp.dot(act.astype(w_down.dtype), w_down,
                  preferred_element_type=jnp.float32)
    return out.astype(x.dtype)


if __name__ == "__main__":
    key = jax.random.PRNGKey(0)
    kx, kg, ku, kd = jax.random.split(key, 4)

    # Small shapes; SEQ and FFN deliberately NOT tile multiples to exercise padding.
    SEQ, HIDDEN, FFN = 200, 256, 320

    x = jax.random.normal(kx, (SEQ, HIDDEN), jnp.float32).astype(jnp.bfloat16)
    w_gate = (0.02 * jax.random.normal(kg, (HIDDEN, FFN), jnp.float32)).astype(jnp.bfloat16)
    w_up = (0.02 * jax.random.normal(ku, (HIDDEN, FFN), jnp.float32)).astype(jnp.bfloat16)
    w_down = (0.02 * jax.random.normal(kd, (FFN, HIDDEN), jnp.float32)).astype(jnp.bfloat16)

    ref = jax.block_until_ready(glm_mlp_ref(x, w_gate, w_up, w_down))

    # 1) auto-tiled (single FFN tile on these small shapes)
    out = jax.block_until_ready(jax.jit(glm_mlp)(x, w_gate, w_up, w_down))
    assert out.shape == (SEQ, HIDDEN)
    assert bool(jnp.all(jnp.isfinite(out.astype(jnp.float32))))
    err = float(jnp.max(jnp.abs(out.astype(jnp.float32) - ref.astype(jnp.float32))))
    assert err < 5e-2, f"max_err={err}"

    # 2) forced small tiles: exercises the multi-step FFN reduction / accumulator path
    out2 = jax.block_until_ready(
        jax.jit(lambda a, b, c, d: glm_mlp(a, b, c, d, ts=128, tf=128))(
            x, w_gate, w_up, w_down))
    err2 = float(jnp.max(jnp.abs(out2.astype(jnp.float32) - ref.astype(jnp.float32))))
    assert err2 < 5e-2, f"max_err(multi-tile)={err2}"

    print("KERNEL_OK")
</pallas_src>

<mosaic_0001>
module attributes {stable_mosaic.version = 11 : i64} {
  func.func @glm_mlp_kernel(%arg0: i32, %arg1: i32, %arg2: memref<256x256xbf16, #tpu.memory_space<vmem>>, %arg3: memref<256x768xbf16, #tpu.memory_space<vmem>>, %arg4: memref<384x256xbf16, #tpu.memory_space<vmem>>, %arg5: memref<256x256xbf16, #tpu.memory_space<vmem>>, %arg6: memref<256x256xf32, #tpu.memory_space<vmem>>) attributes {dimension_semantics = [#tpu.dimension_semantics<parallel>, #tpu.dimension_semantics<arbitrary>], iteration_bounds = array<i64: 1, 1>, scalar_prefetch = 0 : i64, scratch_operands = 1 : i64, tpu.core_type = #tpu.core_type<tc>, window_params = [{transform_indices = @transform_0, window_bounds = array<i64: 256, 256>}, {transform_indices = @transform_1, window_bounds = array<i64: 256, 768>}, {transform_indices = @transform_2, window_bounds = array<i64: 384, 256>}, {transform_indices = @transform_3, window_bounds = array<i64: 256, 256>}]} {
    %c0_i32 = arith.constant 0 : i32
    %0 = arith.cmpi eq, %arg1, %c0_i32 : i32
    %1 = arith.extui %0 : i1 to i32
    %c0_i32_0 = arith.constant 0 : i32
    %2 = arith.cmpi ne, %1, %c0_i32_0 : i32
    scf.if %2 {
      %cst_14 = arith.constant 0.000000e+00 : f32
      %24 = vector.broadcast %cst_14 : f32 to vector<256x256xf32>
      %c0_15 = arith.constant 0 : index
      %c0_16 = arith.constant 0 : index
      %25 = vector.load %arg6[%c0_15, %c0_16] : memref<256x256xf32, #tpu.memory_space<vmem>>, vector<256x256xf32>
      tpu.vector_store %arg6[%c0_15, %c0_16], %24 {strides = array<i32>} : memref<256x256xf32, #tpu.memory_space<vmem>>, vector<256x256xf32>,
    } else {
    }
    %c0 = arith.constant 0 : index
    %c0_1 = arith.constant 0 : index
    %3 = vector.load %arg2[%c0, %c0_1] : memref<256x256xbf16, #tpu.memory_space<vmem>>, vector<256x256xbf16>
    %c0_2 = arith.constant 0 : index
    %c0_3 = arith.constant 0 : index
    %4 = vector.load %arg3[%c0_2, %c0_3] : memref<256x768xbf16, #tpu.memory_space<vmem>>, vector<256x768xbf16>
    %cst = arith.constant dense<0.000000e+00> : vector<256x768xf32>
    %5 = tpu.matmul %3, %4, %cst {dimension_numbers = #tpu.dot_dimension_numbers<[1], [0], [0], [1], [0, 0, 1, 1], [], []>} : vector<256x256xbf16>, vector<256x768xbf16>, vector<256x768xf32> -> vector<256x768xf32>
    %6 = vector.extract_strided_slice %5 {offsets = [0, 0], sizes = [256, 384], strides = [1, 1]} : vector<256x768xf32> to vector<256x384xf32>
    %7 = vector.extract_strided_slice %5 {offsets = [0, 384], sizes = [256, 384], strides = [1, 1]} : vector<256x768xf32> to vector<256x384xf32>
    %8 = arith.negf %6 : vector<256x384xf32>
    %9 = math.exp %8 : vector<256x384xf32>
    %cst_4 = arith.constant 1.000000e+00 : f32
    %10 = vector.broadcast %cst_4 : f32 to vector<256x384xf32>
    %11 = arith.addf %10, %9 : vector<256x384xf32>
    %12 = arith.divf %10, %11 : vector<256x384xf32>
    %13 = arith.mulf %6, %12 : vector<256x384xf32>
    %14 = arith.mulf %13, %7 : vector<256x384xf32>
    %c0_5 = arith.constant 0 : index
    %c0_6 = arith.constant 0 : index
    %15 = vector.load %arg6[%c0_5, %c0_6] : memref<256x256xf32, #tpu.memory_space<vmem>>, vector<256x256xf32>
    %16 = arith.truncf %14 : vector<256x384xf32> to vector<256x384xbf16>
    %c0_7 = arith.constant 0 : index
    %c0_8 = arith.constant 0 : index
    %17 = vector.load %arg4[%c0_7, %c0_8] : memref<384x256xbf16, #tpu.memory_space<vmem>>, vector<384x256xbf16>
    %cst_9 = arith.constant dense<0.000000e+00> : vector<256x256xf32>
    %18 = tpu.matmul %16, %17, %cst_9 {dimension_numbers = #tpu.dot_dimension_numbers<[1], [0], [0], [1], [0, 0, 1, 1], [], []>} : vector<256x384xbf16>, vector<384x256xbf16>, vector<256x256xf32> -> vector<256x256xf32>
    %19 = arith.addf %15, %18 : vector<256x256xf32>
    %c0_10 = arith.constant 0 : index
    %c0_11 = arith.constant 0 : index
    %20 = vector.load %arg6[%c0_10, %c0_11] : memref<256x256xf32, #tpu.memory_space<vmem>>, vector<256x256xf32>
    tpu.vector_store %arg6[%c0_10, %c0_11], %19 {strides = array<i32>} : memref<256x256xf32, #tpu.memory_space<vmem>>, vector<256x256xf32>,
    %c0_i32_12 = arith.constant 0 : i32
    %21 = arith.cmpi eq, %arg1, %c0_i32_12 : i32
    %22 = arith.extui %21 : i1 to i32
    %c0_i32_13 = arith.constant 0 : i32
    %23 = arith.cmpi ne, %22, %c0_i32_13 : i32
    scf.if %23 {
      %c0_14 = arith.constant 0 : index
      %c0_15 = arith.constant 0 : index
      %24 = vector.load %arg6[%c0_14, %c0_15] : memref<256x256xf32, #tpu.memory_space<vmem>>, vector<256x256xf32>
      %25 = arith.truncf %24 : vector<256x256xf32> to vector<256x256xbf16>
      %c0_16 = arith.constant 0 : index
      %c0_17 = arith.constant 0 : index
      %26 = vector.load %arg5[%c0_16, %c0_17] : memref<256x256xbf16, #tpu.memory_space<vmem>>, vector<256x256xbf16>
      tpu.vector_store %arg5[%c0_16, %c0_17], %25 {strides = array<i32>} : memref<256x256xbf16, #tpu.memory_space<vmem>>, vector<256x256xbf16>,
    } else {
    }
    return
  }
  func.func @transform_0(%arg0: i32, %arg1: i32) -> (i32, i32) {
    %c0_i32 = arith.constant 0 : i32
    %c0_i32_0 = arith.constant 0 : i32
    return %arg0, %c0_i32 : i32, i32
  }
  func.func @transform_1(%arg0: i32, %arg1: i32) -> (i32, i32) {
    %c0_i32 = arith.constant 0 : i32
    %c0_i32_0 = arith.constant 0 : i32
    return %c0_i32, %arg1 : i32, i32
  }
  func.func @transform_2(%arg0: i32, %arg1: i32) -> (i32, i32) {
    %c0_i32 = arith.constant 0 : i32
    %c0_i32_0 = arith.constant 0 : i32
    return %arg1, %c0_i32 : i32, i32
  }
  func.func @transform_3(%arg0: i32, %arg1: i32) -> (i32, i32) {
    %c0_i32 = arith.constant 0 : i32
    %c0_i32_0 = arith.constant 0 : i32
    return %arg0, %c0_i32 : i32, i32
  }
}

</mosaic_0001>

<llo_original>
// kernel: glm_mlp.1
$region0: #{glm_mlp.1}
  #allocation0 [shape = 'u32[]', space=smem, size = 0x4, offset = 0x4, fixed_abs, tag = 'smem constant byte address 0x4 - core index']
  #allocation1 [shape = 'u32[144,128]{1,0:T(1,128)}', space=vmem, size = 0x12000, scoped, tag = 'internal scratch']
  #allocation2 [shape = 'f32[256,256]{1,0:T(8,128)}', space=vmem, size = 0x40000, scoped, tag = 'scratch operand']
  %s0 = inlined_call_operand.vmem [shape: bf16[256,256], index: 0, kind: input, shape index: {}]
  %s1 = inlined_call_operand.vmem [shape: bf16[256,768], index: 1, kind: input, shape index: {}]
  %s2 = inlined_call_operand.vmem [shape: bf16[384,256], index: 2, kind: input, shape index: {}]
  %s3 = inlined_call_operand.vmem [shape: bf16[256,256], index: 3, kind: output, shape index: {}]
  %s4 = sld [smem:[#allocation0]]
  $region30: #{glm_mlp.1} parent=0
    _
  %s6 = ssub.s32 1, %s4
  %s7 = scalar_select 0, %s6, %s4
  // Predicated region
  $region2: #{glm_mlp.1} parent=0 // pred_check
    _
  $region3: #{glm_mlp.1} parent=0 // pred_check_branch
    %9 = sbr.rel (0) target = $region5
  $region4: #{glm_mlp.1} parent=0 // pred_region
    _
  $region5: #{glm_mlp.1} parent=0 // pred_fallthru
    _
  // Predicated region
  $region6: #{glm_mlp.1} parent=0 // pred_check
    _
  $region7: #{glm_mlp.1} parent=0 // pred_check_branch
    %11 = sbr.rel (0) target = $region9
  $region8: #{glm_mlp.1} parent=0 // pred_region
    _
  $region9: #{glm_mlp.1} parent=0 // pred_fallthru
    _
  // Predicated region
  $region10: #{glm_mlp.1} parent=0 // pred_check
    _
  $region11: #{glm_mlp.1} parent=0 // pred_check_branch
    %13 = sbr.rel (0) target = $region13
  $region12: #{glm_mlp.1} parent=0 // pred_region
    _
  $region13: #{glm_mlp.1} parent=0 // pred_fallthru
    _
  %p15 = scmp.eq.s32.totalorder 0, 0
  // Predicated region
  $region14: #{glm_mlp.1} parent=0 // pred_check
    %p16 = pneg %p15
  $region15: #{glm_mlp.1} parent=0 // pred_check_branch
    %18 = sbr.rel (%p16) target = $region17
  $region16: #{glm_mlp.1} parent=0 // pred_region
    %19 = vst [vmem:[#allocation2] sm:$0xff] 0.0
    %20 = vst [vmem:[#allocation2 + $0x8] sm:$0xff] 0.0
    %21 = vst [vmem:[#allocation2 + $0x10] sm:$0xff] 0.0
    %22 = vst [vmem:[#allocation2 + $0x18] sm:$0xff] 0.0
    %23 = vst [vmem:[#allocation2 + $0x20] sm:$0xff] 0.0
    %24 = vst [vmem:[#allocation2 + $0x28] sm:$0xff] 0.0
    %25 = vst [vmem:[#allocation2 + $0x30] sm:$0xff] 0.0
    %26 = vst [vmem:[#allocation2 + $0x38] sm:$0xff] 0.0
    %27 = vst [vmem:[#allocation2 + $0x40] sm:$0xff] 0.0
    %28 = vst [vmem:[#allocation2 + $0x48] sm:$0xff] 0.0
    %29 = vst [vmem:[#allocation2 + $0x50] sm:$0xff] 0.0
    %30 = vst [vmem:[#allocation2 + $0x58] sm:$0xff] 0.0
    %31 = vst [vmem:[#allocation2 + $0x60] sm:$0xff] 0.0
    %32 = vst [vmem:[#allocation2 + $0x68] sm:$0xff] 0.0
    %33 = vst [vmem:[#allocation2 + $0x70] sm:$0xff] 0.0
    %34 = vst [vmem:[#allocation2 + $0x78] sm:$0xff] 0.0
    %35 = vst [vmem:[#allocation2 + $0x80] sm:$0xff] 0.0
    %36 = vst [vmem:[#allocation2 + $0x88] sm:$0xff] 0.0
    %37 = vst [vmem:[#allocation2 + $0x90] sm:$0xff] 0.0
    %38 = vst [vmem:[#allocation2 + $0x98] sm:$0xff] 0.0
    %39 = vst [vmem:[#allocation2 + $0xa0] sm:$0xff] 0.0
    %40 = vst [vmem:[#allocation2 + $0xa8] sm:$0xff] 0.0
    %41 = vst [vmem:[#allocation2 + $0xb0] sm:$0xff] 0.0
    %42 = vst [vmem:[#allocation2 + $0xb8] sm:$0xff] 0.0
    %43 = vst [vmem:[#allocation2 + $0xc0] sm:$0xff] 0.0
    %44 = vst [vmem:[#allocation2 + $0xc8] sm:$0xff] 0.0
    %45 = vst [vmem:[#allocation2 + $0xd0] sm:$0xff] 0.0
    %46 = vst [vmem:[#allocation2 + $0xd8] sm:$0xff] 0.0
    %47 = vst [vmem:[#allocation2 + $0xe0] sm:$0xff] 0.0
    %48 = vst [vmem:[#allocation2 + $0xe8] sm:$0xff] 0.0
    %49 = vst [vmem:[#allocation2 + $0xf0] sm:$0xff] 0.0
    %50 = vst [vmem:[#allocation2 + $0xf8] sm:$0xff] 0.0
    %51 = vst [vmem:[#allocation2 + $0x100] sm:$0xff] 0.0
    %52 = vst [vmem:[#allocation2 + $0x108] sm:$0xff] 0.0
    %53 = vst [vmem:[#allocation2 + $0x110] sm:$0xff] 0.0
    %54 = vst [vmem:[#allocation2 + $0x118] sm:$0xff] 0.0
    %55 = vst [vmem:[#allocation2 + $0x120] sm:$0xff] 0.0
    %56 = vst [vmem:[#allocation2 + $0x128] sm:$0xff] 0.0
    %57 = vst [vmem:[#allocation2 + $0x130] sm:$0xff] 0.0
    %58 = vst [vmem:[#allocation2 + $0x138] sm:$0xff] 0.0
    %59 = vst [vmem:[#allocation2 + $0x140] sm:$0xff] 0.0
    %60 = vst [vmem:[#allocation2 + $0x148] sm:$0xff] 0.0
    %61 = vst [vmem:[#allocation2 + $0x150] sm:$0xff] 0.0
    %62 = vst [vmem:[#allocation2 + $0x158] sm:$0xff] 0.0
    %63 = vst [vmem:[#allocation2 + $0x160] sm:$0xff] 0.0
    %64 = vst [vmem:[#allocation2 + $0x168] sm:$0xff] 0.0
    %65 = vst [vmem:[#allocation2 + $0x170] sm:$0xff] 0.0
    %66 = vst [vmem:[#allocation2 + $0x178] sm:$0xff] 0.0
    %67 = vst [vmem:[#allocation2 + $0x180] sm:$0xff] 0.0
    %68 = vst [vmem:[#allocation2 + $0x188] sm:$0xff] 0.0
    %69 = vst [vmem:[#allocation2 + $0x190] sm:$0xff] 0.0
    %70 = vst [vmem:[#allocation2 + $0x198] sm:$0xff] 0.0
    %71 = vst [vmem:[#allocation2 + $0x1a0] sm:$0xff] 0.0
    %72 = vst [vmem:[#allocation2 + $0x1a8] sm:$0xff] 0.0
    %73 = vst [vmem:[#allocation2 + $0x1b0] sm:$0xff] 0.0
    %74 = vst [vmem:[#allocation2 + $0x1b8] sm:$0xff] 0.0
    %75 = vst [vmem:[#allocation2 + $0x1c0] sm:$0xff] 0.0
    %76 = vst [vmem:[#allocation2 + $0x1c8] sm:$0xff] 0.0
    %77 = vst [vmem:[#allocation2 + $0x1d0] sm:$0xff] 0.0
    %78 = vst [vmem:[#allocation2 + $0x1d8] sm:$0xff] 0.0
    %79 = vst [vmem:[#allocation2 + $0x1e0] sm:$0xff] 0.0
    %80 = vst [vmem:[#allocation2 + $0x1e8] sm:$0xff] 0.0
    %81 = vst [vmem:[#allocation2 + $0x1f0] sm:$0xff] 0.0
    %82 = vst [vmem:[#allocation2 + $0x1f8] sm:$0xff] 0.0
  $region17: #{glm_mlp.1} parent=0 // pred_fallthru
    _
  %v83 = vld [vmem:[%s0] sm:$0xff]
  %v84 = vld [vmem:[%s0 + $0x8] sm:$0xff]
  %v85 = vld [vmem:[%s0 + $0x10] sm:$0xff]
  %v86 = vld [vmem:[%s0 + $0x18] sm:$0xff]
  %v87 = vld [vmem:[%s0 + $0x20] sm:$0xff]
  %v88 = vld [vmem:[%s0 + $0x28] sm:$0xff]
  %v89 = vld [vmem:[%s0 + $0x30] sm:$0xff]
  %v90 = vld [vmem:[%s0 + $0x38] sm:$0xff]
  %v91 = vld [vmem:[%s0 + $0x40] sm:$0xff]
  %v92 = vld [vmem:[%s0 + $0x48] sm:$0xff]
  %v93 = vld [vmem:[%s0 + $0x50] sm:$0xff]
  %v94 = vld [vmem:[%s0 + $0x58] sm:$0xff]
  %v95 = vld [vmem:[%s0 + $0x60] sm:$0xff]
  %v96 = vld [vmem:[%s0 + $0x68] sm:$0xff]
  %v97 = vld [vmem:[%s0 + $0x70] sm:$0xff]
  %v98 = vld [vmem:[%s0 + $0x78] sm:$0xff]
  %v99 = vld [vmem:[%s0 + $0x80] sm:$0xff]
  %v100 = vld [vmem:[%s0 + $0x88] sm:$0xff]
  %v101 = vld [vmem:[%s0 + $0x90] sm:$0xff]
  %v102 = vld [vmem:[%s0 + $0x98] sm:$0xff]
  %v103 = vld [vmem:[%s0 + $0xa0] sm:$0xff]
  %v104 = vld [vmem:[%s0 + $0xa8] sm:$0xff]
  %v105 = vld [vmem:[%s0 + $0xb0] sm:$0xff]
  %v106 = vld [vmem:[%s0 + $0xb8] sm:$0xff]
  %v107 = vld [vmem:[%s0 + $0xc0] sm:$0xff]
  %v108 = vld [vmem:[%s0 + $0xc8] sm:$0xff]
  %v109 = vld [vmem:[%s0 + $0xd0] sm:$0xff]
  %v110 = vld [vmem:[%s0 + $0xd8] sm:$0xff]
  %v111 = vld [vmem:[%s0 + $0xe0] sm:$0xff]
  %v112 = vld [vmem:[%s0 + $0xe8] sm:$0xff]
  %v113 = vld [vmem:[%s0 + $0xf0] sm:$0xff]
  %v114 = vld [vmem:[%s0 + $0xf8] sm:$0xff]
  %v115 = vld [vmem:[%s1] sm:$0xff]
  %v116 = vld [vmem:[%s1 + $0x8] sm:$0xff]
  %v117 = vld [vmem:[%s1 + $0x10] sm:$0xff]
  %v118 = vld [vmem:[%s1 + $0x18] sm:$0xff]
  %v119 = vld [vmem:[%s1 + $0x20] sm:$0xff]
  %v120 = vld [vmem:[%s1 + $0x28] sm:$0xff]
  %v121 = vld [vmem:[%s1 + $0x30] sm:$0xff]
  %v122 = vld [vmem:[%s1 + $0x38] sm:$0xff]
  %v123 = vld [vmem:[%s1 + $0x40] sm:$0xff]
  %v124 = vld [vmem:[%s1 + $0x48] sm:$0xff]
  %v125 = vld [vmem:[%s1 + $0x50] sm:$0xff]
  %v126 = vld [vmem:[%s1 + $0x58] sm:$0xff]
  %v127 = vld [vmem:[%s1 + $0x60] sm:$0xff]
  %v128 = vld [vmem:[%s1 + $0x68] sm:$0xff]
  %v129 = vld [vmem:[%s1 + $0x70] sm:$0xff]
  %v130 = vld [vmem:[%s1 + $0x78] sm:$0xff]
  %v131 = vld [vmem:[%s1 + $0x80] sm:$0xff]
  %v132 = vld [vmem:[%s1 + $0x88] sm:$0xff]
  %v133 = vld [vmem:[%s1 + $0x90] sm:$0xff]
  %v134 = vld [vmem:[%s1 + $0x98] sm:$0xff]
  %v135 = vld [vmem:[%s1 + $0xa0] sm:$0xff]
  %v136 = vld [vmem:[%s1 + $0xa8] sm:$0xff]
  %v137 = vld [vmem:[%s1 + $0xb0] sm:$0xff]
  %v138 = vld [vmem:[%s1 + $0xb8] sm:$0xff]
  %v139 = vld [vmem:[%s1 + $0xc0] sm:$0xff]
  %v140 = vld [vmem:[%s1 + $0xc8] sm:$0xff]
  %v141 = vld [vmem:[%s1 + $0xd0] sm:$0xff]
  %v142 = vld [vmem:[%s1 + $0xd8] sm:$0xff]
  %v143 = vld [vmem:[%s1 + $0xe0] sm:$0xff]
  %v144 = vld [vmem:[%s1 + $0xe8] sm:$0xff]
  %v145 = vld [vmem:[%s1 + $0xf0] sm:$0xff]
  %v146 = vld [vmem:[%s1 + $0xf8] sm:$0xff]
  %v147 = vld [vmem:[%s1 + $0x100] sm:$0xff]
  %v148 = vld [vmem:[%s1 + $0x108] sm:$0xff]
  %v149 = vld [vmem:[%s1 + $0x110] sm:$0xff]
  %v150 = vld [vmem:[%s1 + $0x118] sm:$0xff]
  %v151 = vld [vmem:[%s1 + $0x120] sm:$0xff]
  %v152 = vld [vmem:[%s1 + $0x128] sm:$0xff]
  %v153 = vld [vmem:[%s1 + $0x130] sm:$0xff]
  %v154 = vld [vmem:[%s1 + $0x138] sm:$0xff]
  %v155 = vld [vmem:[%s1 + $0x140] sm:$0xff]
  %v156 = vld [vmem:[%s1 + $0x148] sm:$0xff]
  %v157 = vld [vmem:[%s1 + $0x150] sm:$0xff]
  %v158 = vld [vmem:[%s1 + $0x158] sm:$0xff]
  %v159 = vld [vmem:[%s1 + $0x160] sm:$0xff]
  %v160 = vld [vmem:[%s1 + $0x168] sm:$0xff]
  %v161 = vld [vmem:[%s1 + $0x170] sm:$0xff]
  %v162 = vld [vmem:[%s1 + $0x178] sm:$0xff]
  %v163 = vld [vmem:[%s1 + $0x180] sm:$0xff]
  %v164 = vld [vmem:[%s1 + $0x188] sm:$0xff]
  %v165 = vld [vmem:[%s1 + $0x190] sm:$0xff]
  %v166 = vld [vmem:[%s1 + $0x198] sm:$0xff]
  %v167 = vld [vmem:[%s1 + $0x1a0] sm:$0xff]
  %v168 = vld [vmem:[%s1 + $0x1a8] sm:$0xff]
  %v169 = vld [vmem:[%s1 + $0x1b0] sm:$0xff]
  %v170 = vld [vmem:[%s1 + $0x1b8] sm:$0xff]
  %v171 = vld [vmem:[%s1 + $0x1c0] sm:$0xff]
  %v172 = vld [vmem:[%s1 + $0x1c8] sm:$0xff]
  %v173 = vld [vmem:[%s1 + $0x1d0] sm:$0xff]
  %v174 = vld [vmem:[%s1 + $0x1d8] sm:$0xff]
  %v175 = vld [vmem:[%s1 + $0x1e0] sm:$0xff]
  %v176 = vld [vmem:[%s1 + $0x1e8] sm:$0xff]
  %v177 = vld [vmem:[%s1 + $0x1f0] sm:$0xff]
  %v178 = vld [vmem:[%s1 + $0x1f8] sm:$0xff]
  %v179 = vld [vmem:[%s1 + $0x200] sm:$0xff]
  %v180 = vld [vmem:[%s1 + $0x208] sm:$0xff]
  %v181 = vld [vmem:[%s1 + $0x210] sm:$0xff]
  %v182 = vld [vmem:[%s1 + $0x218] sm:$0xff]
  %v183 = vld [vmem:[%s1 + $0x220] sm:$0xff]
  %v184 = vld [vmem:[%s1 + $0x228] sm:$0xff]
  %v185 = vld [vmem:[%s1 + $0x230] sm:$0xff]
  %v186 = vld [vmem:[%s1 + $0x238] sm:$0xff]
  %v187 = vld [vmem:[%s1 + $0x240] sm:$0xff]
  %v188 = vld [vmem:[%s1 + $0x248] sm:$0xff]
  %v189 = vld [vmem:[%s1 + $0x250] sm:$0xff]
  %v190 = vld [vmem:[%s1 + $0x258] sm:$0xff]
  %v191 = vld [vmem:[%s1 + $0x260] sm:$0xff]
  %v192 = vld [vmem:[%s1 + $0x268] sm:$0xff]
  %v193 = vld [vmem:[%s1 + $0x270] sm:$0xff]
  %v194 = vld [vmem:[%s1 + $0x278] sm:$0xff]
  %v195 = vld [vmem:[%s1 + $0x280] sm:$0xff]
  %v196 = vld [vmem:[%s1 + $0x288] sm:$0xff]
  %v197 = vld [vmem:[%s1 + $0x290] sm:$0xff]
  %v198 = vld [vmem:[%s1 + $0x298] sm:$0xff]
  %v199 = vld [vmem:[%s1 + $0x2a0] sm:$0xff]
  %v200 = vld [vmem:[%s1 + $0x2a8] sm:$0xff]
  %v201 = vld [vmem:[%s1 + $0x2b0] sm:$0xff]
  %v202 = vld [vmem:[%s1 + $0x2b8] sm:$0xff]
  %v203 = vld [vmem:[%s1 + $0x2c0] sm:$0xff]
  %v204 = vld [vmem:[%s1 + $0x2c8] sm:$0xff]
  %v205 = vld [vmem:[%s1 + $0x2d0] sm:$0xff]
  %v206 = vld [vmem:[%s1 + $0x2d8] sm:$0xff]
  %v207 = vld [vmem:[%s1 + $0x2e0] sm:$0xff]
  %v208 = vld [vmem:[%s1 + $0x2e8] sm:$0xff]
  %v209 = vld [vmem:[%s1 + $0x2f0] sm:$0xff]
  %v210 = vld [vmem:[%s1 + $0x2f8] sm:$0xff]
  %v243 = vunpack.c.l.b16 %v83
  %v244 = vunpack.c.h.b16 %v83
  %v245 = vunpack.c.l.b16 %v84
  %v246 = vunpack.c.h.b16 %v84
  %v247 = vunpack.c.l.b16 %v85
  %v248 = vunpack.c.h.b16 %v85
  %v249 = vunpack.c.l.b16 %v86
  %v250 = vunpack.c.h.b16 %v86
  %v251 = vunpack.c.l.b16 %v87
  %v252 = vunpack.c.h.b16 %v87
  %v253 = vunpack.c.l.b16 %v88
  %v254 = vunpack.c.h.b16 %v88
  %v255 = vunpack.c.l.b16 %v89
  %v256 = vunpack.c.h.b16 %v89
  %v257 = vunpack.c.l.b16 %v90
  %v258 = vunpack.c.h.b16 %v90
  %v259 = vunpack.c.l.b16 %v91
  %v260 = vunpack.c.h.b16 %v91
  %v261 = vunpack.c.l.b16 %v92
  %v262 = vunpack.c.h.b16 %v92
  %v263 = vunpack.c.l.b16 %v93
  %v264 = vunpack.c.h.b16 %v93
  %v265 = vunpack.c.l.b16 %v94
  %v266 = vunpack.c.h.b16 %v94
  %v267 = vunpack.c.l.b16 %v95
  %v268 = vunpack.c.h.b16 %v95
  %v269 = vunpack.c.l.b16 %v96
  %v270 = vunpack.c.h.b16 %v96
  %v271 = vunpack.c.l.b16 %v97
  %v272 = vunpack.c.h.b16 %v97
  %v273 = vunpack.c.l.b16 %v98
  %v274 = vunpack.c.h.b16 %v98
  %v275 = vunpack.c.l.b16 %v99
  %v276 = vunpack.c.h.b16 %v99
  %v277 = vunpack.c.l.b16 %v100
  %v278 = vunpack.c.h.b16 %v100
  %v279 = vunpack.c.l.b16 %v101
  %v280 = vunpack.c.h.b16 %v101
  %v281 = vunpack.c.l.b16 %v102
  %v282 = vunpack.c.h.b16 %v102
  %v283 = vunpack.c.l.b16 %v103
  %v284 = vunpack.c.h.b16 %v103
  %v285 = vunpack.c.l.b16 %v104
  %v286 = vunpack.c.h.b16 %v104
  %v287 = vunpack.c.l.b16 %v105
  %v288 = vunpack.c.h.b16 %v105
  %v289 = vunpack.c.l.b16 %v106
  %v290 = vunpack.c.h.b16 %v106
  %v291 = vunpack.c.l.b16 %v107
  %v292 = vunpack.c.h.b16 %v107
  %v293 = vunpack.c.l.b16 %v108
  %v294 = vunpack.c.h.b16 %v108
  %v295 = vunpack.c.l.b16 %v109
  %v296 = vunpack.c.h.b16 %v109
  %v297 = vunpack.c.l.b16 %v110
  %v298 = vunpack.c.h.b16 %v110
  %v299 = vunpack.c.l.b16 %v111
  %v300 = vunpack.c.h.b16 %v111
  %v301 = vunpack.c.l.b16 %v112
  %v302 = vunpack.c.h.b16 %v112
  %v303 = vunpack.c.l.b16 %v113
  %v304 = vunpack.c.h.b16 %v113
  %v305 = vunpack.c.l.b16 %v114
  %v306 = vunpack.c.h.b16 %v114
  %v307 = vpack.c.b16 %v245, %v243
  %v308 = vpack.c.b16 %v246, %v244
  %v309 = vpack.c.b16 %v249, %v247
  %v310 = vpack.c.b16 %v250, %v248
  %v311 = vpack.c.b16 %v253, %v251
  %v312 = vpack.c.b16 %v254, %v252
  %v313 = vpack.c.b16 %v257, %v255
  %v314 = vpack.c.b16 %v258, %v256
  %v315 = vpack.c.b16 %v261, %v259
  %v316 = vpack.c.b16 %v262, %v260
  %v317 = vpack.c.b16 %v265, %v263
  %v318 = vpack.c.b16 %v266, %v264
  %v319 = vpack.c.b16 %v269, %v267
  %v320 = vpack.c.b16 %v270, %v268
  %v321 = vpack.c.b16 %v273, %v271
  %v322 = vpack.c.b16 %v274, %v272
  %v323 = vpack.c.b16 %v277, %v275
  %v324 = vpack.c.b16 %v278, %v276
  %v325 = vpack.c.b16 %v281, %v279
  %v326 = vpack.c.b16 %v282, %v280
  %v327 = vpack.c.b16 %v285, %v283
  %v328 = vpack.c.b16 %v286, %v284
  %v329 = vpack.c.b16 %v289, %v287
  %v330 = vpack.c.b16 %v290, %v288
  %v331 = vpack.c.b16 %v293, %v291
  %v332 = vpack.c.b16 %v294, %v292
  %v333 = vpack.c.b16 %v297, %v295
  %v334 = vpack.c.b16 %v298, %v296
  %v335 = vpack.c.b16 %v301, %v299
  %v336 = vpack.c.b16 %v302, %v300
  %v337 = vpack.c.b16 %v305, %v303
  %v338 = vpack.c.b16 %v306, %v304
  %v467 = vunpack.c.l.b16 %v115
  %v468 = vunpack.c.h.b16 %v115
  %v469 = vunpack.c.l.b16 %v116
  %v470 = vunpack.c.h.b16 %v116
  %v471 = vunpack.c.l.b16 %v117
  %v472 = vunpack.c.h.b16 %v117
  %v473 = vunpack.c.l.b16 %v118
  %v474 = vunpack.c.h.b16 %v118
  %v475 = vunpack.c.l.b16 %v119
  %v476 = vunpack.c.h.b16 %v119
  %v477 = vunpack.c.l.b16 %v120
  %v478 = vunpack.c.h.b16 %v120
  %v479 = vunpack.c.l.b16 %v121
  %v480 = vunpack.c.h.b16 %v121
  %v481 = vunpack.c.l.b16 %v122
  %v482 = vunpack.c.h.b16 %v122
  %v483 = vunpack.c.l.b16 %v123
  %v484 = vunpack.c.h.b16 %v123
  %v485 = vunpack.c.l.b16 %v124
  %v486 = vunpack.c.h.b16 %v124
  %v487 = vunpack.c.l.b16 %v125
  %v488 = vunpack.c.h.b16 %v125
  %v489 = vunpack.c.l.b16 %v126
  %v490 = vunpack.c.h.b16 %v126
  %v491 = vunpack.c.l.b16 %v127
  %v492 = vunpack.c.h.b16 %v127
  %v493 = vunpack.c.l.b16 %v128
  %v494 = vunpack.c.h.b16 %v128
  %v495 = vunpack.c.l.b16 %v129
  %v496 = vunpack.c.h.b16 %v129
  %v497 = vunpack.c.l.b16 %v130
  %v498 = vunpack.c.h.b16 %v130
  %v499 = vunpack.c.l.b16 %v131
  %v500 = vunpack.c.h.b16 %v131
  %v501 = vunpack.c.l.b16 %v132
  %v502 = vunpack.c.h.b16 %v132
  %v503 = vunpack.c.l.b16 %v133
  %v504 = vunpack.c.h.b16 %v133
  %v505 = vunpack.c.l.b16 %v134
  %v506 = vunpack.c.h.b16 %v134
  %v507 = vunpack.c.l.b16 %v135
  %v508 = vunpack.c.h.b16 %v135
  %v509 = vunpack.c.l.b16 %v136
  %v510 = vunpack.c.h.b16 %v136
  %v511 = vunpack.c.l.b16 %v137
  %v512 = vunpack.c.h.b16 %v137
  %v513 = vunpack.c.l.b16 %v138
  %v514 = vunpack.c.h.b16 %v138
  %v515 = vunpack.c.l.b16 %v139
  %v516 = vunpack.c.h.b16 %v139
  %v517 = vunpack.c.l.b16 %v140
  %v518 = vunpack.c.h.b16 %v140
  %v519 = vunpack.c.l.b16 %v141
  %v520 = vunpack.c.h.b16 %v141
  %v521 = vunpack.c.l.b16 %v142
  %v522 = vunpack.c.h.b16 %v142
  %v523 = vunpack.c.l.b16 %v143
  %v524 = vunpack.c.h.b16 %v143
  %v525 = vunpack.c.l.b16 %v144
  %v526 = vunpack.c.h.b16 %v144
  %v527 = vunpack.c.l.b16 %v145
  %v528 = vunpack.c.h.b16 %v145
  %v529 = vunpack.c.l.b16 %v146
  %v530 = vunpack.c.h.b16 %v146
  %v531 = vunpack.c.l.b16 %v147
  %v532 = vunpack.c.h.b16 %v147
  %v533 = vunpack.c.l.b16 %v148
  %v534 = vunpack.c.h.b16 %v148
  %v535 = vunpack.c.l.b16 %v149
  %v536 = vunpack.c.h.b16 %v149
  %v537 = vunpack.c.l.b16 %v150
  %v538 = vunpack.c.h.b16 %v150
  %v539 = vunpack.c.l.b16 %v151
  %v540 = vunpack.c.h.b16 %v151
  %v541 = vunpack.c.l.b16 %v152
  %v542 = vunpack.c.h.b16 %v152
  %v543 = vunpack.c.l.b16 %v153
  %v544 = vunpack.c.h.b16 %v153
  %v545 = vunpack.c.l.b16 %v154
  %v546 = vunpack.c.h.b16 %v154
  %v547 = vunpack.c.l.b16 %v155
  %v548 = vunpack.c.h.b16 %v155
  %v549 = vunpack.c.l.b16 %v156
  %v550 = vunpack.c.h.b16 %v156
  %v551 = vunpack.c.l.b16 %v157
  %v552 = vunpack.c.h.b16 %v157
  %v553 = vunpack.c.l.b16 %v158
  %v554 = vunpack.c.h.b16 %v158
  %v555 = vunpack.c.l.b16 %v159
  %v556 = vunpack.c.h.b16 %v159
  %v557 = vunpack.c.l.b16 %v160
  %v558 = vunpack.c.h.b16 %v160
  %v559 = vunpack.c.l.b16 %v161
  %v560 = vunpack.c.h.b16 %v161
  %v561 = vunpack.c.l.b16 %v162
  %v562 = vunpack.c.h.b16 %v162
  %v563 = vunpack.c.l.b16 %v163
  %v564 = vunpack.c.h.b16 %v163
  %v565 = vunpack.c.l.b16 %v164
  %v566 = vunpack.c.h.b16 %v164
  %v567 = vunpack.c.l.b16 %v165
  %v568 = vunpack.c.h.b16 %v165
  %v569 = vunpack.c.l.b16 %v166
  %v570 = vunpack.c.h.b16 %v166
  %v571 = vunpack.c.l.b16 %v167
  %v572 = vunpack.c.h.b16 %v167
  %v573 = vunpack.c.l.b16 %v168
  %v574 = vunpack.c.h.b16 %v168
  %v575 = vunpack.c.l.b16 %v169
  %v576 = vunpack.c.h.b16 %v169
  %v577 = vunpack.c.l.b16 %v170
  %v578 = vunpack.c.h.b16 %v170
  %v579 = vunpack.c.l.b16 %v171
  %v580 = vunpack.c.h.b16 %v171
  %v581 = vunpack.c.l.b16 %v172
  %v582 = vunpack.c.h.b16 %v172
  %v583 = vunpack.c.l.b16 %v173
  %v584 = vunpack.c.h.b16 %v173
  %v585 = vunpack.c.l.b16 %v174
  %v586 = vunpack.c.h.b16 %v174
  %v587 = vunpack.c.l.b16 %v175
  %v588 = vunpack.c.h.b16 %v175
  %v589 = vunpack.c.l.b16 %v176
  %v590 = vunpack.c.h.b16 %v176
  %v591 = vunpack.c.l.b16 %v177
  %v592 = vunpack.c.h.b16 %v177
  %v593 = vunpack.c.l.b16 %v178
  %v594 = vunpack.c.h.b16 %v178
  %v595 = vunpack.c.l.b16 %v179
  %v596 = vunpack.c.h.b16 %v179
  %v597 = vunpack.c.l.b16 %v180
  %v598 = vunpack.c.h.b16 %v180
  %v599 = vunpack.c.l.b16 %v181
  %v600 = vunpack.c.h.b16 %v181
  %v601 = vunpack.c.l.b16 %v182
  %v602 = vunpack.c.h.b16 %v182
  %v603 = vunpack.c.l.b16 %v183
  %v604 = vunpack.c.h.b16 %v183
  %v605 = vunpack.c.l.b16 %v184
  %v606 = vunpack.c.h.b16 %v184
  %v607 = vunpack.c.l.b16 %v185
  %v608 = vunpack.c.h.b16 %v185
  %v609 = vunpack.c.l.b16 %v186
  %v610 = vunpack.c.h.b16 %v186
  %v611 = vunpack.c.l.b16 %v187
  %v612 = vunpack.c.h.b16 %v187
  %v613 = vunpack.c.l.b16 %v188
  %v614 = vunpack.c.h.b16 %v188
  %v615 = vunpack.c.l.b16 %v189
  %v616 = vunpack.c.h.b16 %v189
  %v617 = vunpack.c.l.b16 %v190
  %v618 = vunpack.c.h.b16 %v190
  %v619 = vunpack.c.l.b16 %v191
  %v620 = vunpack.c.h.b16 %v191
  %v621 = vunpack.c.l.b16 %v192
  %v622 = vunpack.c.h.b16 %v192
  %v623 = vunpack.c.l.b16 %v193
  %v624 = vunpack.c.h.b16 %v193
  %v625 = vunpack.c.l.b16 %v194
  %v626 = vunpack.c.h.b16 %v194
  %v627 = vunpack.c.l.b16 %v195
  %v628 = vunpack.c.h.b16 %v195
  %v629 = vunpack.c.l.b16 %v196
  %v630 = vunpack.c.h.b16 %v196
  %v631 = vunpack.c.l.b16 %v197
  %v632 = vunpack.c.h.b16 %v197
  %v633 = vunpack.c.l.b16 %v198
  %v634 = vunpack.c.h.b16 %v198
  %v635 = vunpack.c.l.b16 %v199
  %v636 = vunpack.c.h.b16 %v199
  %v637 = vunpack.c.l.b16 %v200
  %v638 = vunpack.c.h.b16 %v200
  %v639 = vunpack.c.l.b16 %v201
  %v640 = vunpack.c.h.b16 %v201
  %v641 = vunpack.c.l.b16 %v202
  %v642 = vunpack.c.h.b16 %v202
  %v643 = vunpack.c.l.b16 %v203
  %v644 = vunpack.c.h.b16 %v203
  %v645 = vunpack.c.l.b16 %v204
  %v646 = vunpack.c.h.b16 %v204
  %v647 = vunpack.c.l.b16 %v205
  %v648 = vunpack.c.h.b16 %v205
  %v649 = vunpack.c.l.b16 %v206
  %v650 = vunpack.c.h.b16 %v206
  %v651 = vunpack.c.l.b16 %v207
  %v652 = vunpack.c.h.b16 %v207
  %v653 = vunpack.c.l.b16 %v208
  %v654 = vunpack.c.h.b16 %v208
  %v655 = vunpack.c.l.b16 %v209
  %v656 = vunpack.c.h.b16 %v209
  %v657 = vunpack.c.l.b16 %v210
  %v658 = vunpack.c.h.b16 %v210
  %v659 = vpack.c.b16 %v473, %v467
  %v660 = vpack.c.b16 %v474, %v468
  %v661 = vpack.c.b16 %v475, %v469
  %v662 = vpack.c.b16 %v476, %v470
  %v663 = vpack.c.b16 %v477, %v471
  %v664 = vpack.c.b16 %v478, %v472
  %v665 = vpack.c.b16 %v485, %v479
  %v666 = vpack.c.b16 %v486, %v480
  %v667 = vpack.c.b16 %v487, %v481
  %v668 = vpack.c.b16 %v488, %v482
  %v669 = vpack.c.b16 %v489, %v483
  %v670 = vpack.c.b16 %v490, %v484
  %v671 = vpack.c.b16 %v497, %v491
  %v672 = vpack.c.b16 %v498, %v492
  %v673 = vpack.c.b16 %v499, %v493
  %v674 = vpack.c.b16 %v500, %v494
  %v675 = vpack.c.b16 %v501, %v495
  %v676 = vpack.c.b16 %v502, %v496
  %v677 = vpack.c.b16 %v509, %v503
  %v678 = vpack.c.b16 %v510, %v504
  %v679 = vpack.c.b16 %v511, %v505
  %v680 = vpack.c.b16 %v512, %v506
  %v681 = vpack.c.b16 %v513, %v507
  %v682 = vpack.c.b16 %v514, %v508
  %v683 = vpack.c.b16 %v521, %v515
  %v684 = vpack.c.b16 %v522, %v516
  %v685 = vpack.c.b16 %v523, %v517
  %v686 = vpack.c.b16 %v524, %v518
  %v687 = vpack.c.b16 %v525, %v519
  %v688 = vpack.c.b16 %v526, %v520
  %v689 = vpack.c.b16 %v533, %v527
  %v690 = vpack.c.b16 %v534, %v528
  %v691 = vpack.c.b16 %v535, %v529
  %v692 = vpack.c.b16 %v536, %v530
  %v693 = vpack.c.b16 %v537, %v531
  %v694 = vpack.c.b16 %v538, %v532
  %v695 = vpack.c.b16 %v545, %v539
  %v696 = vpack.c.b16 %v546, %v540
  %v697 = vpack.c.b16 %v547, %v541
  %v698 = vpack.c.b16 %v548, %v542
  %v699 = vpack.c.b16 %v549, %v543
  %v700 = vpack.c.b16 %v550, %v544
  %v701 = vpack.c.b16 %v557, %v551
  %v702 = vpack.c.b16 %v558, %v552
  %v703 = vpack.c.b16 %v559, %v553
  %v704 = vpack.c.b16 %v560, %v554
  %v705 = vpack.c.b16 %v561, %v555
  %v706 = vpack.c.b16 %v562, %v556
  %v707 = vpack.c.b16 %v569, %v563
  %v708 = vpack.c.b16 %v570, %v564
  %v709 = vpack.c.b16 %v571, %v565
  %v710 = vpack.c.b16 %v572, %v566
  %v711 = vpack.c.b16 %v573, %v567
  %v712 = vpack.c.b16 %v574, %v568
  %v713 = vpack.c.b16 %v581, %v575
  %v714 = vpack.c.b16 %v582, %v576
  %v715 = vpack.c.b16 %v583, %v577
  %v716 = vpack.c.b16 %v584, %v578
  %v717 = vpack.c.b16 %v585, %v579
  %v718 = vpack.c.b16 %v586, %v580
  %v719 = vpack.c.b16 %v593, %v587
  %v720 = vpack.c.b16 %v594, %v588
  %v721 = vpack.c.b16 %v595, %v589
  %v722 = vpack.c.b16 %v596, %v590
  %v723 = vpack.c.b16 %v597, %v591
  %v724 = vpack.c.b16 %v598, %v592
  %v725 = vpack.c.b16 %v605, %v599
  %v726 = vpack.c.b16 %v606, %v600
  %v727 = vpack.c.b16 %v607, %v601
  %v728 = vpack.c.b16 %v608, %v602
  %v729 = vpack.c.b16 %v609, %v603
  %v730 = vpack.c.b16 %v610, %v604
  %v731 = vpack.c.b16 %v617, %v611
  %v732 = vpack.c.b16 %v618, %v612
  %v733 = vpack.c.b16 %v619, %v613
  %v734 = vpack.c.b16 %v620, %v614
  %v735 = vpack.c.b16 %v621, %v615
  %v736 = vpack.c.b16 %v622, %v616
  %v737 = vpack.c.b16 %v629, %v623
  %v738 = vpack.c.b16 %v630, %v624
  %v739 = vpack.c.b16 %v631, %v625
  %v740 = vpack.c.b16 %v632, %v626
  %v741 = vpack.c.b16 %v633, %v627
  %v742 = vpack.c.b16 %v634, %v628
  %v743 = vpack.c.b16 %v641, %v635
  %v744 = vpack.c.b16 %v642, %v636
  %v745 = vpack.c.b16 %v643, %v637
  %v746 = vpack.c.b16 %v644, %v638
  %v747 = vpack.c.b16 %v645, %v639
  %v748 = vpack.c.b16 %v646, %v640
  %v749 = vpack.c.b16 %v653, %v647
  %v750 = vpack.c.b16 %v654, %v648
  %v751 = vpack.c.b16 %v655, %v649
  %v752 = vpack.c.b16 %v656, %v650
  %v753 = vpack.c.b16 %v657, %v651
  %v754 = vpack.c.b16 %v658, %v652
  %851 = vmatprep.subr.bf16.mxu0 %v660
  %852 = vmatpush1.bf16.msra.mxu0 %v659
  %853 = vmatprep.subr.bf16.mxu0 %v666
  %854 = vmatpush1.bf16.msra.mxu0 %v665
  %855 = vmatprep.subr.bf16.mxu0 %v672
  %856 = vmatpush1.bf16.msra.mxu0 %v671
  %857 = vmatprep.subr.bf16.mxu0 %v678
  %858 = vmatpush1.bf16.msra.mxu0 %v677
  %859 = vmatprep.subr.bf16.mxu0 %v684
  %860 = vmatpush1.bf16.msra.mxu0 %v683
  %861 = vmatprep.subr.bf16.mxu0 %v690
  %862 = vmatpush1.bf16.msra.mxu0 %v689
  %863 = vmatprep.subr.bf16.mxu0 %v696
  %864 = vmatpush1.bf16.msra.mxu0 %v695
  %865 = vmatprep.subr.bf16.mxu0 %v702
  %866 = vmatpush1.bf16.msra.mxu0 %v701
  %867 = vmatprep.subr.bf16.mxu0 %v708
  %868 = vmatpush1.bf16.msra.mxu0 %v707
  %869 = vmatprep.subr.bf16.mxu0 %v714
  %870 = vmatpush1.bf16.msra.mxu0 %v713
  %871 = vmatprep.subr.bf16.mxu0 %v720
  %872 = vmatpush1.bf16.msra.mxu0 %v719
  %873 = vmatprep.subr.bf16.mxu0 %v726
  %874 = vmatpush1.bf16.msra.mxu0 %v725
  %875 = vmatprep.subr.bf16.mxu0 %v732
  %876 = vmatpush1.bf16.msra.mxu0 %v731
  %877 = vmatprep.subr.bf16.mxu0 %v738
  %878 = vmatpush1.bf16.msra.mxu0 %v737
  %879 = vmatprep.subr.bf16.mxu0 %v744
  %880 = vmatpush1.bf16.msra.mxu0 %v743
  %881 = vmatprep.subr.bf16.mxu0 %v750
  %882 = vmatpush1.bf16.msra.mxu0 %v749
  %883 = vmatprep.mubr.bf16.mxu0 %v308
  %884 = vmatmul.mubr.bf16.gmra.mrb[0].mxu0 %v307
  %v885 = vpop.f32.mrb[0].mxu0
  %v886 = vadd.f32 0.0, %v885
  %v887 = vpop.f32.mrb[0].mxu0
  %v888 = vadd.f32 0.0, %v887
  %v889 = vpop.f32.mrb[0].mxu0
  %v890 = vadd.f32 0.0, %v889
  %v891 = vpop.f32.mrb[0].mxu0
  %v892 = vadd.f32 0.0, %v891
  %893 = vmatprep.mubr.bf16.mxu0 %v310
  %894 = vmatmul.mubr.bf16.gmra.mrb[0].mxu0 %v309
  %v895 = vpop.f32.mrb[0].mxu0
  %v896 = vadd.f32 0.0, %v895
  %v897 = vpop.f32.mrb[0].mxu0
  %v898 = vadd.f32 0.0, %v897
  %v899 = vpop.f32.mrb[0].mxu0
  %v900 = vadd.f32 0.0, %v899
  %v901 = vpop.f32.mrb[0].mxu0
  %v902 = vadd.f32 0.0, %v901
  %903 = vmatprep.mubr.bf16.mxu0 %v312
  %904 = vmatmul.mubr.bf16.gmra.mrb[0].mxu0 %v311
  %v905 = vpop.f32.mrb[0].mxu0
  %v906 = vadd.f32 0.0, %v905
  %v907 = vpop.f32.mrb[0].mxu0
  %v908 = vadd.f32 0.0, %v907
  %v909 = vpop.f32.mrb[0].mxu0
  %v910 = vadd.f32 0.0, %v909
  %v911 = vpop.f32.mrb[0].mxu0
  %v912 = vadd.f32 0.0, %v911
  %913 = vmatprep.mubr.bf16.mxu0 %v314
  %914 = vmatmul.mubr.bf16.gmra.mrb[0].mxu0 %v313
  %v915 = vpop.f32.mrb[0].mxu0
  %v916 = vadd.f32 0.0, %v915
  %v917 = vpop.f32.mrb[0].mxu0
  %v918 = vadd.f32 0.0, %v917
  %v919 = vpop.f32.mrb[0].mxu0
  %v920 = vadd.f32 0.0, %v919
  %v921 = vpop.f32.mrb[0].mxu0
  %v922 = vadd.f32 0.0, %v921
  %923 = vmatprep.mubr.bf16.mxu0 %v316
  %924 = vmatmul.mubr.bf16.gmra.mrb[0].mxu0 %v315
  %v925 = vpop.f32.mrb[0].mxu0
  %v926 = vadd.f32 0.0, %v925
  %v927 = vpop.f32.mrb[0].mxu0
  %v928 = vadd.f32 0.0, %v927
  %v929 = vpop.f32.mrb[0].mxu0
  %v930 = vadd.f32 0.0, %v929
  %v931 = vpop.f32.mrb[0].mxu0
  %v932 = vadd.f32 0.0, %v931
  %933 = vmatprep.mubr.bf16.mxu0 %v318
  %934 = vmatmul.mubr.bf16.gmra.mrb[0].mxu0 %v317
  %v935 = vpop.f32.mrb[0].mxu0
  %v936 = vadd.f32 0.0, %v935
  %v937 = vpop.f32.mrb[0].mxu0
  %v938 = vadd.f32 0.0, %v937
  %v939 = vpop.f32.mrb[0].mxu0
  %v940 = vadd.f32 0.0, %v939
  %v941 = vpop.f32.mrb[0].mxu0
  %v942 = vadd.f32 0.0, %v941
  %943 = vmatprep.mubr.bf16.mxu0 %v320
  %944 = vmatmul.mubr.bf16.gmra.mrb[0].mxu0 %v319
  %v945 = vpop.f32.mrb[0].mxu0
  %v946 = vadd.f32 0.0, %v945
  %v947 = vpop.f32.mrb[0].mxu0
  %v948 = vadd.f32 0.0, %v947
  %v949 = vpop.f32.mrb[0].mxu0
  %v950 = vadd.f32 0.0, %v949
  %v951 = vpop.f32.mrb[0].mxu0
  %v952 = vadd.f32 0.0, %v951
  %953 = vmatprep.mubr.bf16.mxu0 %v322
  %954 = vmatmul.mubr.bf16.gmra.mrb[0].mxu0 %v321
  %v955 = vpop.f32.mrb[0].mxu0
  %v956 = vadd.f32 0.0, %v955
  %v957 = vpop.f32.mrb[0].mxu0
  %v958 = vadd.f32 0.0, %v957
  %v959 = vpop.f32.mrb[0].mxu0
  %v960 = vadd.f32 0.0, %v959
  %v961 = vpop.f32.mrb[0].mxu0
  %v962 = vadd.f32 0.0, %v961
  %963 = vmatprep.mubr.bf16.mxu0 %v324
  %964 = vmatmul.mubr.bf16.gmra.mrb[0].mxu0 %v323
  %v965 = vpop.f32.mrb[0].mxu0
  %v966 = vadd.f32 0.0, %v965
  %v967 = vpop.f32.mrb[0].mxu0
  %v968 = vadd.f32 0.0, %v967
  %v969 = vpop.f32.mrb[0].mxu0
  %v970 = vadd.f32 0.0, %v969
  %v971 = vpop.f32.mrb[0].mxu0
  %v972 = vadd.f32 0.0, %v971
  %973 = vmatprep.mubr.bf16.mxu0 %v326
  %974 = vmatmul.mubr.bf16.gmra.mrb[0].mxu0 %v325
  %v975 = vpop.f32.mrb[0].mxu0
  %v976 = vadd.f32 0.0, %v975
  %v977 = vpop.f32.mrb[0].mxu0
  %v978 = vadd.f32 0.0, %v977
  %v979 = vpop.f32.mrb[0].mxu0
  %v980 = vadd.f32 0.0, %v979
  %v981 = vpop.f32.mrb[0].mxu0
  %v982 = vadd.f32 0.0, %v981
  %983 = vmatprep.mubr.bf16.mxu0 %v328
  %984 = vmatmul.mubr.bf16.gmra.mrb[0].mxu0 %v327
  %v985 = vpop.f32.mrb[0].mxu0
  %v986 = vadd.f32 0.0, %v985
  %v987 = vpop.f32.mrb[0].mxu0
  %v988 = vadd.f32 0.0, %v987
  %v989 = vpop.f32.mrb[0].mxu0
  %v990 = vadd.f32 0.0, %v989
  %v991 = vpop.f32.mrb[0].mxu0
  %v992 = vadd.f32 0.0, %v991
  %993 = vmatprep.mubr.bf16.mxu0 %v330
  %994 = vmatmul.mubr.bf16.gmra.mrb[0].mxu0 %v329
  %v995 = vpop.f32.mrb[0].mxu0
  %v996 = vadd.f32 0.0, %v995
  %v997 = vpop.f32.mrb[0].mxu0
  %v998 = vadd.f32 0.0, %v997
  %v999 = vpop.f32.mrb[0].mxu0
  %v1000 = vadd.f32 0.0, %v999
  %v1001 = vpop.f32.mrb[0].mxu0
  %v1002 = vadd.f32 0.0, %v1001
  %1003 = vmatprep.mubr.bf16.mxu0 %v332
  %1004 = vmatmul.mubr.bf16.gmra.mrb[0].mxu0 %v331
  %v1005 = vpop.f32.mrb[0].mxu0
  %v1006 = vadd.f32 0.0, %v1005
  %v1007 = vpop.f32.mrb[0].mxu0
  %v1008 = vadd.f32 0.0, %v1007
  %v1009 = vpop.f32.mrb[0].mxu0
  %v1010 = vadd.f32 0.0, %v1009
  %v1011 = vpop.f32.mrb[0].mxu0
  %v1012 = vadd.f32 0.0, %v1011
  %1013 = vmatprep.mubr.bf16.mxu0 %v334
  %1014 = vmatmul.mubr.bf16.gmra.mrb[0].mxu0 %v333
  %v1015 = vpop.f32.mrb[0].mxu0
  %v1016 = vadd.f32 0.0, %v1015
  %v1017 = vpop.f32.mrb[0].mxu0
  %v1018 = vadd.f32 0.0, %v1017
  %v1019 = vpop.f32.mrb[0].mxu0
  %v1020 = vadd.f32 0.0, %v1019
  %v1021 = vpop.f32.mrb[0].mxu0
  %v1022 = vadd.f32 0.0, %v1021
  %1023 = vmatprep.mubr.bf16.mxu0 %v336
  %1024 = vmatmul.mubr.bf16.gmra.mrb[0].mxu0 %v335
  %v1025 = vpop.f32.mrb[0].mxu0
  %v1026 = vadd.f32 0.0, %v1025
  %v1027 = vpop.f32.mrb[0].mxu0
  %v1028 = vadd.f32 0.0, %v1027
  %v1029 = vpop.f32.mrb[0].mxu0
  %v1030 = vadd.f32 0.0, %v1029
  %v1031 = vpop.f32.mrb[0].mxu0
  %v1032 = vadd.f32 0.0, %v1031
  %1033 = vmatprep.mubr.bf16.mxu0 %v338
  %1034 = vmatmul.mubr.bf16.gmra.mrb[0].mxu0 %v337
  %v1035 = vpop.f32.mrb[0].mxu0
  %v1036 = vadd.f32 0.0, %v1035
  %v1037 = vpop.f32.mrb[0].mxu0
  %v1038 = vadd.f32 0.0, %v1037
  %v1039 = vpop.f32.mrb[0].mxu0
  %v1040 = vadd.f32 0.0, %v1039
  %v1041 = vpop.f32.mrb[0].mxu0
  %v1042 = vadd.f32 0.0, %v1041
  %1043 = vdwg.mxu0
  %1044 = vmatprep.subr.bf16.mxu0 %v662
  %1045 = vmatpush1.bf16.msra.mxu0 %v661
  %1046 = vmatprep.subr.bf16.mxu0 %v668
  %1047 = vmatpush1.bf16.msra.mxu0 %v667
  %1048 = vmatprep.subr.bf16.mxu0 %v674
  %1049 = vmatpush1.bf16.msra.mxu0 %v673
  %1050 = vmatprep.subr.bf16.mxu0 %v680
  %1051 = vmatpush1.bf16.msra.mxu0 %v679
  %1052 = vmatprep.subr.bf16.mxu0 %v686
  %1053 = vmatpush1.bf16.msra.mxu0 %v685
  %1054 = vmatprep.subr.bf16.mxu0 %v692
  %1055 = vmatpush1.bf16.msra.mxu0 %v691
  %1056 = vmatprep.subr.bf16.mxu0 %v698
  %1057 = vmatpush1.bf16.msra.mxu0 %v697
  %1058 = vmatprep.subr.bf16.mxu0 %v704
  %1059 = vmatpush1.bf16.msra.mxu0 %v703
  %1060 = vmatprep.subr.bf16.mxu0 %v710
  %1061 = vmatpush1.bf16.msra.mxu0 %v709
  %1062 = vmatprep.subr.bf16.mxu0 %v716
  %1063 = vmatpush1.bf16.msra.mxu0 %v715
  %1064 = vmatprep.subr.bf16.mxu0 %v722
  %1065 = vmatpush1.bf16.msra.mxu0 %v721
  %1066 = vmatprep.subr.bf16.mxu0 %v728
  %1067 = vmatpush1.bf16.msra.mxu0 %v727
  %1068 = vmatprep.subr.bf16.mxu0 %v734
  %1069 = vmatpush1.bf16.msra.mxu0 %v733
  %1070 = vmatprep.subr.bf16.mxu0 %v740
  %1071 = vmatpush1.bf16.msra.mxu0 %v739
  %1072 = vmatprep.subr.bf16.mxu0 %v746
  %1073 = vmatpush1.bf16.msra.mxu0 %v745
  %1074 = vmatprep.subr.bf16.mxu0 %v752
  %1075 = vmatpush1.bf16.msra.mxu0 %v751
  %1076 = vmatprep.mubr.bf16.mxu0 %v308
  %1077 = vmatmul.mubr.bf16.gmra.mrb[0].mxu0 %v307
  %v1078 = vpop.f32.mrb[0].mxu0
  %v1079 = vadd.f32 0.0, %v1078
  %v1080 = vpop.f32.mrb[0].mxu0
  %v1081 = vadd.f32 0.0, %v1080
  %v1082 = vpop.f32.mrb[0].mxu0
  %v1083 = vadd.f32 0.0, %v1082
  %v1084 = vpop.f32.mrb[0].mxu0
  %v1085 = vadd.f32 0.0, %v1084
  %1086 = vmatprep.mubr.bf16.mxu0 %v310
  %1087 = vmatmul.mubr.bf16.gmra.mrb[0].mxu0 %v309
  %v1088 = vpop.f32.mrb[0].mxu0
  %v1089 = vadd.f32 0.0, %v1088
  %v1090 = vpop.f32.mrb[0].mxu0
  %v1091 = vadd.f32 0.0, %v1090
  %v1092 = vpop.f32.mrb[0].mxu0
  %v1093 = vadd.f32 0.0, %v1092
  %v1094 = vpop.f32.mrb[0].mxu0
  %v1095 = vadd.f32 0.0, %v1094
  %1096 = vmatprep.mubr.bf16.mxu0 %v312
  %1097 = vmatmul.mubr.bf16.gmra.mrb[0].mxu0 %v311
  %v1098 = vpop.f32.mrb[0].mxu0
  %v1099 = vadd.f32 0.0, %v1098
  %v1100 = vpop.f32.mrb[0].mxu0
  %v1101 = vadd.f32 0.0, %v1100
  %v1102 = vpop.f32.mrb[0].mxu0
  %v1103 = vadd.f32 0.0, %v1102
  %v1104 = vpop.f32.mrb[0].mxu0
  %v1105 = vadd.f32 0.0, %v1104
  %1106 = vmatprep.mubr.bf16.mxu0 %v314
  %1107 = vmatmul.mubr.bf16.gmra.mrb[0].mxu0 %v313
  %v1108 = vpop.f32.mrb[0].mxu0
  %v1109 = vadd.f32 0.0, %v1108
  %v1110 = vpop.f32.mrb[0].mxu0
  %v1111 = vadd.f32 0.0, %v1110
  %v1112 = vpop.f32.mrb[0].mxu0
  %v1113 = vadd.f32 0.0, %v1112
  %v1114 = vpop.f32.mrb[0].mxu0
  %v1115 = vadd.f32 0.0, %v1114
  %1116 = vmatprep.mubr.bf16.mxu0 %v316
  %1117 = vmatmul.mubr.bf16.gmra.mrb[0].mxu0 %v315
  %v1118 = vpop.f32.mrb[0].mxu0
  %v1119 = vadd.f32 0.0, %v1118
  %v1120 = vpop.f32.mrb[0].mxu0
  %v1121 = vadd.f32 0.0, %v1120
  %v1122 = vpop.f32.mrb[0].mxu0
  %v1123 = vadd.f32 0.0, %v1122
  %v1124 = vpop.f32.mrb[0].mxu0
  %v1125 = vadd.f32 0.0, %v1124
  %1126 = vmatprep.mubr.bf16.mxu0 %v318
  %1127 = vmatmul.mubr.bf16.gmra.mrb[0].mxu0 %v317
  %v1128 = vpop.f32.mrb[0].mxu0
  %v1129 = vadd.f32 0.0, %v1128
  %v1130 = vpop.f32.mrb[0].mxu0
  %v1131 = vadd.f32 0.0, %v1130
  %v1132 = vpop.f32.mrb[0].mxu0
  %v1133 = vadd.f32 0.0, %v1132
  %v1134 = vpop.f32.mrb[0].mxu0
  %v1135 = vadd.f32 0.0, %v1134
  %1136 = vmatprep.mubr.bf16.mxu0 %v320
  %1137 = vmatmul.mubr.bf16.gmra.mrb[0].mxu0 %v319
  %v1138 = vpop.f32.mrb[0].mxu0
  %v1139 = vadd.f32 0.0, %v1138
  %v1140 = vpop.f32.mrb[0].mxu0
  %v1141 = vadd.f32 0.0, %v1140
  %v1142 = vpop.f32.mrb[0].mxu0
  %v1143 = vadd.f32 0.0, %v1142
  %v1144 = vpop.f32.mrb[0].mxu0
  %v1145 = vadd.f32 0.0, %v1144
  %1146 = vmatprep.mubr.bf16.mxu0 %v322
  %1147 = vmatmul.mubr.bf16.gmra.mrb[0].mxu0 %v321
  %v1148 = vpop.f32.mrb[0].mxu0
  %v1149 = vadd.f32 0.0, %v1148
  %v1150 = vpop.f32.mrb[0].mxu0
  %v1151 = vadd.f32 0.0, %v1150
  %v1152 = vpop.f32.mrb[0].mxu0
  %v1153 = vadd.f32 0.0, %v1152
  %v1154 = vpop.f32.mrb[0].mxu0
  %v1155 = vadd.f32 0.0, %v1154
  %1156 = vmatprep.mubr.bf16.mxu0 %v324
  %1157 = vmatmul.mubr.bf16.gmra.mrb[0].mxu0 %v323
  %v1158 = vpop.f32.mrb[0].mxu0
  %v1159 = vadd.f32 0.0, %v1158
  %v1160 = vpop.f32.mrb[0].mxu0
  %v1161 = vadd.f32 0.0, %v1160
  %v1162 = vpop.f32.mrb[0].mxu0
  %v1163 = vadd.f32 0.0, %v1162
  %v1164 = vpop.f32.mrb[0].mxu0
  %v1165 = vadd.f32 0.0, %v1164
  %1166 = vmatprep.mubr.bf16.mxu0 %v326
  %1167 = vmatmul.mubr.bf16.gmra.mrb[0].mxu0 %v325
  %v1168 = vpop.f32.mrb[0].mxu0
  %v1169 = vadd.f32 0.0, %v1168
  %v1170 = vpop.f32.mrb[0].mxu0
  %v1171 = vadd.f32 0.0, %v1170
  %v1172 = vpop.f32.mrb[0].mxu0
  %v1173 = vadd.f32 0.0, %v1172
  %v1174 = vpop.f32.mrb[0].mxu0
  %v1175 = vadd.f32 0.0, %v1174
  %1176 = vmatprep.mubr.bf16.mxu0 %v328
  %1177 = vmatmul.mubr.bf16.gmra.mrb[0].mxu0 %v327
  %v1178 = vpop.f32.mrb[0].mxu0
  %v1179 = vadd.f32 0.0, %v1178
  %v1180 = vpop.f32.mrb[0].mxu0
  %v1181 = vadd.f32 0.0, %v1180
  %v1182 = vpop.f32.mrb[0].mxu0
  %v1183 = vadd.f32 0.0, %v1182
  %v1184 = vpop.f32.mrb[0].mxu0
  %v1185 = vadd.f32 0.0, %v1184
  %1186 = vmatprep.mubr.bf16.mxu0 %v330
  %1187 = vmatmul.mubr.bf16.gmra.mrb[0].mxu0 %v329
  %v1188 = vpop.f32.mrb[0].mxu0
  %v1189 = vadd.f32 0.0, %v1188
  %v1190 = vpop.f32.mrb[0].mxu0
  %v1191 = vadd.f32 0.0, %v1190
  %v1192 = vpop.f32.mrb[0].mxu0
  %v1193 = vadd.f32 0.0, %v1192
  %v1194 = vpop.f32.mrb[0].mxu0
  %v1195 = vadd.f32 0.0, %v1194
  %1196 = vmatprep.mubr.bf16.mxu0 %v332
  %1197 = vmatmul.mubr.bf16.gmra.mrb[0].mxu0 %v331
  %v1198 = vpop.f32.mrb[0].mxu0
  %v1199 = vadd.f32 0.0, %v1198
  %v1200 = vpop.f32.mrb[0].mxu0
  %v1201 = vadd.f32 0.0, %v1200
  %v1202 = vpop.f32.mrb[0].mxu0
  %v1203 = vadd.f32 0.0, %v1202
  %v1204 = vpop.f32.mrb[0].mxu0
  %v1205 = vadd.f32 0.0, %v1204
  %1206 = vmatprep.mubr.bf16.mxu0 %v334
  %1207 = vmatmul.mubr.bf16.gmra.mrb[0].mxu0 %v333
  %v1208 = vpop.f32.mrb[0].mxu0
  %v1209 = vadd.f32 0.0, %v1208
  %v1210 = vpop.f32.mrb[0].mxu0
  %v1211 = vadd.f32 0.0, %v1210
  %v1212 = vpop.f32.mrb[0].mxu0
  %v1213 = vadd.f32 0.0, %v1212
  %v1214 = vpop.f32.mrb[0].mxu0
  %v1215 = vadd.f32 0.0, %v1214
  %1216 = vmatprep.mubr.bf16.mxu0 %v336
  %1217 = vmatmul.mubr.bf16.gmra.mrb[0].mxu0 %v335
  %v1218 = vpop.f32.mrb[0].mxu0
  %v1219 = vadd.f32 0.0, %v1218
  %v1220 = vpop.f32.mrb[0].mxu0
  %v1221 = vadd.f32 0.0, %v1220
  %v1222 = vpop.f32.mrb[0].mxu0
  %v1223 = vadd.f32 0.0, %v1222
  %v1224 = vpop.f32.mrb[0].mxu0
  %v1225 = vadd.f32 0.0, %v1224
  %1226 = vmatprep.mubr.bf16.mxu0 %v338
  %1227 = vmatmul.mubr.bf16.gmra.mrb[0].mxu0 %v337
  %v1228 = vpop.f32.mrb[0].mxu0
  %v1229 = vadd.f32 0.0, %v1228
  %v1230 = vpop.f32.mrb[0].mxu0
  %v1231 = vadd.f32 0.0, %v1230
  %v1232 = vpop.f32.mrb[0].mxu0
  %v1233 = vadd.f32 0.0, %v1232
  %v1234 = vpop.f32.mrb[0].mxu0
  %v1235 = vadd.f32 0.0, %v1234
  %1236 = vdwg.mxu0
  %1237 = vmatprep.subr.bf16.mxu0 %v664
  %1238 = vmatpush1.bf16.msra.mxu0 %v663
  %1239 = vmatprep.subr.bf16.mxu0 %v670
  %1240 = vmatpush1.bf16.msra.mxu0 %v669
  %1241 = vmatprep.subr.bf16.mxu0 %v676
  %1242 = vmatpush1.bf16.msra.mxu0 %v675
  %1243 = vmatprep.subr.bf16.mxu0 %v682
  %1244 = vmatpush1.bf16.msra.mxu0 %v681
  %1245 = vmatprep.subr.bf16.mxu0 %v688
  %1246 = vmatpush1.bf16.msra.mxu0 %v687
  %1247 = vmatprep.subr.bf16.mxu0 %v694
  %1248 = vmatpush1.bf16.msra.mxu0 %v693
  %1249 = vmatprep.subr.bf16.mxu0 %v700
  %1250 = vmatpush1.bf16.msra.mxu0 %v699
  %1251 = vmatprep.subr.bf16.mxu0 %v706
  %1252 = vmatpush1.bf16.msra.mxu0 %v705
  %1253 = vmatprep.subr.bf16.mxu0 %v712
  %1254 = vmatpush1.bf16.msra.mxu0 %v711
  %1255 = vmatprep.subr.bf16.mxu0 %v718
  %1256 = vmatpush1.bf16.msra.mxu0 %v717
  %1257 = vmatprep.subr.bf16.mxu0 %v724
  %1258 = vmatpush1.bf16.msra.mxu0 %v723
  %1259 = vmatprep.subr.bf16.mxu0 %v730
  %1260 = vmatpush1.bf16.msra.mxu0 %v729
  %1261 = vmatprep.subr.bf16.mxu0 %v736
  %1262 = vmatpush1.bf16.msra.mxu0 %v735
  %1263 = vmatprep.subr.bf16.mxu0 %v742
  %1264 = vmatpush1.bf16.msra.mxu0 %v741
  %1265 = vmatprep.subr.bf16.mxu0 %v748
  %1266 = vmatpush1.bf16.msra.mxu0 %v747
  %1267 = vmatprep.subr.bf16.mxu0 %v754
  %1268 = vmatpush1.bf16.msra.mxu0 %v753
  %1269 = vmatprep.mubr.bf16.mxu0 %v308
  %1270 = vmatmul.mubr.bf16.gmra.mrb[0].mxu0 %v307
  %v1271 = vpop.f32.mrb[0].mxu0
  %v1272 = vadd.f32 0.0, %v1271
  %v1273 = vpop.f32.mrb[0].mxu0
  %v1274 = vadd.f32 0.0, %v1273
  %v1275 = vpop.f32.mrb[0].mxu0
  %v1276 = vadd.f32 0.0, %v1275
  %v1277 = vpop.f32.mrb[0].mxu0
  %v1278 = vadd.f32 0.0, %v1277
  %1279 = vmatprep.mubr.bf16.mxu0 %v310
  %1280 = vmatmul.mubr.bf16.gmra.mrb[0].mxu0 %v309
  %v1281 = vpop.f32.mrb[0].mxu0
  %v1282 = vadd.f32 0.0, %v1281
  %v1283 = vpop.f32.mrb[0].mxu0
  %v1284 = vadd.f32 0.0, %v1283
  %v1285 = vpop.f32.mrb[0].mxu0
  %v1286 = vadd.f32 0.0, %v1285
  %v1287 = vpop.f32.mrb[0].mxu0
  %v1288 = vadd.f32 0.0, %v1287
  %1289 = vmatprep.mubr.bf16.mxu0 %v312
  %1290 = vmatmul.mubr.bf16.gmra.mrb[0].mxu0 %v311
  %v1291 = vpop.f32.mrb[0].mxu0
  %v1292 = vadd.f32 0.0, %v1291
  %v1293 = vpop.f32.mrb[0].mxu0
  %v1294 = vadd.f32 0.0, %v1293
  %v1295 = vpop.f32.mrb[0].mxu0
  %v1296 = vadd.f32 0.0, %v1295
  %v1297 = vpop.f32.mrb[0].mxu0
  %v1298 = vadd.f32 0.0, %v1297
  %1299 = vmatprep.mubr.bf16.mxu0 %v314
  %1300 = vmatmul.mubr.bf16.gmra.mrb[0].mxu0 %v313
  %v1301 = vpop.f32.mrb[0].mxu0
  %v1302 = vadd.f32 0.0, %v1301
  %v1303 = vpop.f32.mrb[0].mxu0
  %v1304 = vadd.f32 0.0, %v1303
  %v1305 = vpop.f32.mrb[0].mxu0
  %v1306 = vadd.f32 0.0, %v1305
  %v1307 = vpop.f32.mrb[0].mxu0
  %v1308 = vadd.f32 0.0, %v1307
  %1309 = vmatprep.mubr.bf16.mxu0 %v316
  %1310 = vmatmul.mubr.bf16.gmra.mrb[0].mxu0 %v315
  %v1311 = vpop.f32.mrb[0].mxu0
  %v1312 = vadd.f32 0.0, %v1311
  %v1313 = vpop.f32.mrb[0].mxu0
  %v1314 = vadd.f32 0.0, %v1313
  %v1315 = vpop.f32.mrb[0].mxu0
  %v1316 = vadd.f32 0.0, %v1315
  %v1317 = vpop.f32.mrb[0].mxu0
  %v1318 = vadd.f32 0.0, %v1317
  %1319 = vmatprep.mubr.bf16.mxu0 %v318
  %1320 = vmatmul.mubr.bf16.gmra.mrb[0].mxu0 %v317
  %v1321 = vpop.f32.mrb[0].mxu0
  %v1322 = vadd.f32 0.0, %v1321
  %v1323 = vpop.f32.mrb[0].mxu0
  %v1324 = vadd.f32 0.0, %v1323
  %v1325 = vpop.f32.mrb[0].mxu0
  %v1326 = vadd.f32 0.0, %v1325
  %v1327 = vpop.f32.mrb[0].mxu0
  %v1328 = vadd.f32 0.0, %v1327
  %1329 = vmatprep.mubr.bf16.mxu0 %v320
  %1330 = vmatmul.mubr.bf16.gmra.mrb[0].mxu0 %v319
  %v1331 = vpop.f32.mrb[0].mxu0
  %v1332 = vadd.f32 0.0, %v1331
  %v1333 = vpop.f32.mrb[0].mxu0
  %v1334 = vadd.f32 0.0, %v1333
  %v1335 = vpop.f32.mrb[0].mxu0
  %v1336 = vadd.f32 0.0, %v1335
  %v1337 = vpop.f32.mrb[0].mxu0
  %v1338 = vadd.f32 0.0, %v1337
  %1339 = vmatprep.mubr.bf16.mxu0 %v322
  %1340 = vmatmul.mubr.bf16.gmra.mrb[0].mxu0 %v321
  %v1341 = vpop.f32.mrb[0].mxu0
  %v1342 = vadd.f32 0.0, %v1341
  %v1343 = vpop.f32.mrb[0].mxu0
  %v1344 = vadd.f32 0.0, %v1343
  %v1345 = vpop.f32.mrb[0].mxu0
  %v1346 = vadd.f32 0.0, %v1345
  %v1347 = vpop.f32.mrb[0].mxu0
  %v1348 = vadd.f32 0.0, %v1347
  %1349 = vmatprep.mubr.bf16.mxu0 %v324
  %1350 = vmatmul.mubr.bf16.gmra.mrb[0].mxu0 %v323
  %v1351 = vpop.f32.mrb[0].mxu0
  %v1352 = vadd.f32 0.0, %v1351
  %v1353 = vpop.f32.mrb[0].mxu0
  %v1354 = vadd.f32 0.0, %v1353
  %v1355 = vpop.f32.mrb[0].mxu0
  %v1356 = vadd.f32 0.0, %v1355
  %v1357 = vpop.f32.mrb[0].mxu0
  %v1358 = vadd.f32 0.0, %v1357
  %1359 = vmatprep.mubr.bf16.mxu0 %v326
  %1360 = vmatmul.mubr.bf16.gmra.mrb[0].mxu0 %v325
  %v1361 = vpop.f32.mrb[0].mxu0
  %v1362 = vadd.f32 0.0, %v1361
  %v1363 = vpop.f32.mrb[0].mxu0
  %v1364 = vadd.f32 0.0, %v1363
  %v1365 = vpop.f32.mrb[0].mxu0
  %v1366 = vadd.f32 0.0, %v1365
  %v1367 = vpop.f32.mrb[0].mxu0
  %v1368 = vadd.f32 0.0, %v1367
  %1369 = vmatprep.mubr.bf16.mxu0 %v328
  %1370 = vmatmul.mubr.bf16.gmra.mrb[0].mxu0 %v327
  %v1371 = vpop.f32.mrb[0].mxu0
  %v1372 = vadd.f32 0.0, %v1371
  %v1373 = vpop.f32.mrb[0].mxu0
  %v1374 = vadd.f32 0.0, %v1373
  %v1375 = vpop.f32.mrb[0].mxu0
  %v1376 = vadd.f32 0.0, %v1375
  %v1377 = vpop.f32.mrb[0].mxu0
  %v1378 = vadd.f32 0.0, %v1377
  %1379 = vmatprep.mubr.bf16.mxu0 %v330
  %1380 = vmatmul.mubr.bf16.gmra.mrb[0].mxu0 %v329
  %v1381 = vpop.f32.mrb[0].mxu0
  %v1382 = vadd.f32 0.0, %v1381
  %v1383 = vpop.f32.mrb[0].mxu0
  %v1384 = vadd.f32 0.0, %v1383
  %v1385 = vpop.f32.mrb[0].mxu0
  %v1386 = vadd.f32 0.0, %v1385
  %v1387 = vpop.f32.mrb[0].mxu0
  %v1388 = vadd.f32 0.0, %v1387
  %1389 = vmatprep.mubr.bf16.mxu0 %v332
  %1390 = vmatmul.mubr.bf16.gmra.mrb[0].mxu0 %v331
  %v1391 = vpop.f32.mrb[0].mxu0
  %v1392 = vadd.f32 0.0, %v1391
  %v1393 = vpop.f32.mrb[0].mxu0
  %v1394 = vadd.f32 0.0, %v1393
  %v1395 = vpop.f32.mrb[0].mxu0
  %v1396 = vadd.f32 0.0, %v1395
  %v1397 = vpop.f32.mrb[0].mxu0
  %v1398 = vadd.f32 0.0, %v1397
  %1399 = vmatprep.mubr.bf16.mxu0 %v334
  %1400 = vmatmul.mubr.bf16.gmra.mrb[0].mxu0 %v333
  %v1401 = vpop.f32.mrb[0].mxu0
  %v1402 = vadd.f32 0.0, %v1401
  %v1403 = vpop.f32.mrb[0].mxu0
  %v1404 = vadd.f32 0.0, %v1403
  %v1405 = vpop.f32.mrb[0].mxu0
  %v1406 = vadd.f32 0.0, %v1405
  %v1407 = vpop.f32.mrb[0].mxu0
  %v1408 = vadd.f32 0.0, %v1407
  %1409 = vmatprep.mubr.bf16.mxu0 %v336
  %1410 = vmatmul.mubr.bf16.gmra.mrb[0].mxu0 %v335
  %v1411 = vpop.f32.mrb[0].mxu0
  %v1412 = vadd.f32 0.0, %v1411
  %v1413 = vpop.f32.mrb[0].mxu0
  %v1414 = vadd.f32 0.0, %v1413
  %v1415 = vpop.f32.mrb[0].mxu0
  %v1416 = vadd.f32 0.0, %v1415
  %v1417 = vpop.f32.mrb[0].mxu0
  %v1418 = vadd.f32 0.0, %v1417
  %1419 = vmatprep.mubr.bf16.mxu0 %v338
  %1420 = vmatmul.mubr.bf16.gmra.mrb[0].mxu0 %v337
  %v1421 = vpop.f32.mrb[0].mxu0
  %v1422 = vadd.f32 0.0, %v1421
  %v1423 = vpop.f32.mrb[0].mxu0
  %v1424 = vadd.f32 0.0, %v1423
  %v1425 = vpop.f32.mrb[0].mxu0
  %v1426 = vadd.f32 0.0, %v1425
  %v1427 = vpop.f32.mrb[0].mxu0
  %v1428 = vadd.f32 0.0, %v1427
  %1429 = vdwg.mxu0
  %v1430 = vxor.u32 %v886, 2147483648
  %v1431 = vxor.u32 %v888, 2147483648
  %v1432 = vxor.u32 %v1079, 2147483648
  %v1433 = vxor.u32 %v890, 2147483648
  %v1434 = vxor.u32 %v892, 2147483648
  %v1435 = vxor.u32 %v1083, 2147483648
  %v1436 = vxor.u32 %v896, 2147483648
  %v1437 = vxor.u32 %v898, 2147483648
  %v1438 = vxor.u32 %v1089, 2147483648
  %v1439 = vxor.u32 %v900, 2147483648
  %v1440 = vxor.u32 %v902, 2147483648
  %v1441 = vxor.u32 %v1093, 2147483648
  %v1442 = vxor.u32 %v906, 2147483648
  %v1443 = vxor.u32 %v908, 2147483648
  %v1444 = vxor.u32 %v1099, 2147483648
  %v1445 = vxor.u32 %v910, 2147483648
  %v1446 = vxor.u32 %v912, 2147483648
  %v1447 = vxor.u32 %v1103, 2147483648
  %v1448 = vxor.u32 %v916, 2147483648
  %v1449 = vxor.u32 %v918, 2147483648
  %v1450 = vxor.u32 %v1109, 2147483648
  %v1451 = vxor.u32 %v920, 2147483648
  %v1452 = vxor.u32 %v922, 2147483648
  %v1453 = vxor.u32 %v1113, 2147483648
  %v1454 = vxor.u32 %v926, 2147483648
  %v1455 = vxor.u32 %v928, 2147483648
  %v1456 = vxor.u32 %v1119, 2147483648
  %v1457 = vxor.u32 %v930, 2147483648
  %v1458 = vxor.u32 %v932, 2147483648
  %v1459 = vxor.u32 %v1123, 2147483648
  %v1460 = vxor.u32 %v936, 2147483648
  %v1461 = vxor.u32 %v938, 2147483648
  %v1462 = vxor.u32 %v1129, 2147483648
  %v1463 = vxor.u32 %v940, 2147483648
  %v1464 = vxor.u32 %v942, 2147483648
  %v1465 = vxor.u32 %v1133, 2147483648
  %v1466 = vxor.u32 %v946, 2147483648
  %v1467 = vxor.u32 %v948, 2147483648
  %v1468 = vxor.u32 %v1139, 2147483648
  %v1469 = vxor.u32 %v950, 2147483648
  %v1470 = vxor.u32 %v952, 2147483648
  %v1471 = vxor.u32 %v1143, 2147483648
  %v1472 = vxor.u32 %v956, 2147483648
  %v1473 = vxor.u32 %v958, 2147483648
  %v1474 = vxor.u32 %v1149, 2147483648
  %v1475 = vxor.u32 %v960, 2147483648
  %v1476 = vxor.u32 %v962, 2147483648
  %v1477 = vxor.u32 %v1153, 2147483648
  %v1478 = vxor.u32 %v966, 2147483648
  %v1479 = vxor.u32 %v968, 2147483648
  %v1480 = vxor.u32 %v1159, 2147483648
  %v1481 = vxor.u32 %v970, 2147483648
  %v1482 = vxor.u32 %v972, 2147483648
  %v1483 = vxor.u32 %v1163, 2147483648
  %v1484 = vxor.u32 %v976, 2147483648
  %v1485 = vxor.u32 %v978, 2147483648
  %v1486 = vxor.u32 %v1169, 2147483648
  %v1487 = vxor.u32 %v980, 2147483648
  %v1488 = vxor.u32 %v982, 2147483648
  %v1489 = vxor.u32 %v1173, 2147483648
  %v1490 = vxor.u32 %v986, 2147483648
  %v1491 = vxor.u32 %v988, 2147483648
  %v1492 = vxor.u32 %v1179, 2147483648
  %v1493 = vxor.u32 %v990, 2147483648
  %v1494 = vxor.u32 %v992, 2147483648
  %v1495 = vxor.u32 %v1183, 2147483648
  %v1496 = vxor.u32 %v996, 2147483648
  %v1497 = vxor.u32 %v998, 2147483648
  %v1498 = vxor.u32 %v1189, 2147483648
  %v1499 = vxor.u32 %v1000, 2147483648
  %v1500 = vxor.u32 %v1002, 2147483648
  %v1501 = vxor.u32 %v1193, 2147483648
  %v1502 = vxor.u32 %v1006, 2147483648
  %v1503 = vxor.u32 %v1008, 2147483648
  %v1504 = vxor.u32 %v1199, 2147483648
  %v1505 = vxor.u32 %v1010, 2147483648
  %v1506 = vxor.u32 %v1012, 2147483648
  %v1507 = vxor.u32 %v1203, 2147483648
  %v1508 = vxor.u32 %v1016, 2147483648
  %v1509 = vxor.u32 %v1018, 2147483648
  %v1510 = vxor.u32 %v1209, 2147483648
  %v1511 = vxor.u32 %v1020, 2147483648
  %v1512 = vxor.u32 %v1022, 2147483648
  %v1513 = vxor.u32 %v1213, 2147483648
  %v1514 = vxor.u32 %v1026, 2147483648
  %v1515 = vxor.u32 %v1028, 2147483648
  %v1516 = vxor.u32 %v1219, 2147483648
  %v1517 = vxor.u32 %v1030, 2147483648
  %v1518 = vxor.u32 %v1032, 2147483648
  %v1519 = vxor.u32 %v1223, 2147483648
  %v1520 = vxor.u32 %v1036, 2147483648
  %v1521 = vxor.u32 %v1038, 2147483648
  %v1522 = vxor.u32 %v1229, 2147483648
  %v1523 = vxor.u32 %v1040, 2147483648
  %v1524 = vxor.u32 %v1042, 2147483648
  %v1525 = vxor.u32 %v1233, 2147483648
  %v1526 = vmul.f32 %v1430, 1.442695
  %v1527 = vpow.pop %v1526
  %v1528 = vmul.f32 %v1431, 1.442695
  %v1529 = vpow.pop %v1528
  %v1530 = vmul.f32 %v1432, 1.442695
  %v1531 = vpow.pop %v1530
  %v1532 = vmul.f32 %v1433, 1.442695
  %v1533 = vpow.pop %v1532
  %v1534 = vmul.f32 %v1434, 1.442695
  %v1535 = vpow.pop %v1534
  %v1536 = vmul.f32 %v1435, 1.442695
  %v1537 = vpow.pop %v1536
  %v1538 = vmul.f32 %v1436, 1.442695
  %v1539 = vpow.pop %v1538
  %v1540 = vmul.f32 %v1437, 1.442695
  %v1541 = vpow.pop %v1540
  %v1542 = vmul.f32 %v1438, 1.442695
  %v1543 = vpow.pop %v1542
  %v1544 = vmul.f32 %v1439, 1.442695
  %v1545 = vpow.pop %v1544
  %v1546 = vmul.f32 %v1440, 1.442695
  %v1547 = vpow.pop %v1546
  %v1548 = vmul.f32 %v1441, 1.442695
  %v1549 = vpow.pop %v1548
  %v1550 = vmul.f32 %v1442, 1.442695
  %v1551 = vpow.pop %v1550
  %v1552 = vmul.f32 %v1443, 1.442695
  %v1553 = vpow.pop %v1552
  %v1554 = vmul.f32 %v1444, 1.442695
  %v1555 = vpow.pop %v1554
  %v1556 = vmul.f32 %v1445, 1.442695
  %v1557 = vpow.pop %v1556
  %v1558 = vmul.f32 %v1446, 1.442695
  %v1559 = vpow.pop %v1558
  %v1560 = vmul.f32 %v1447, 1.442695
  %v1561 = vpow.pop %v1560
  %v1562 = vmul.f32 %v1448, 1.442695
  %v1563 = vpow.pop %v1562
  %v1564 = vmul.f32 %v1449, 1.442695
  %v1565 = vpow.pop %v1564
  %v1566 = vmul.f32 %v1450, 1.442695
  %v1567 = vpow.pop %v1566
  %v1568 = vmul.f32 %v1451, 1.442695
  %v1569 = vpow.pop %v1568
  %v1570 = vmul.f32 %v1452, 1.442695
  %v1571 = vpow.pop %v1570
  %v1572 = vmul.f32 %v1453, 1.442695
  %v1573 = vpow.pop %v1572
  %v1574 = vmul.f32 %v1454, 1.442695
  %v1575 = vpow.pop %v1574
  %v1576 = vmul.f32 %v1455, 1.442695
  %v1577 = vpow.pop %v1576
  %v1578 = vmul.f32 %v1456, 1.442695
  %v1579 = vpow.pop %v1578
  %v1580 = vmul.f32 %v1457, 1.442695
  %v1581 = vpow.pop %v1580
  %v1582 = vmul.f32 %v1458, 1.442695
  %v1583 = vpow.pop %v1582
  %v1584 = vmul.f32 %v1459, 1.442695
  %v1585 = vpow.pop %v1584
  %v1586 = vmul.f32 %v1460, 1.442695
  %v1587 = vpow.pop %v1586
  %v1588 = vmul.f32 %v1461, 1.442695
  %v1589 = vpow.pop %v1588
  %v1590 = vmul.f32 %v1462, 1.442695
  %v1591 = vpow.pop %v1590
  %v1592 = vmul.f32 %v1463, 1.442695
  %v1593 = vpow.pop %v1592
  %v1594 = vmul.f32 %v1464, 1.442695
  %v1595 = vpow.pop %v1594
  %v1596 = vmul.f32 %v1465, 1.442695
  %v1597 = vpow.pop %v1596
  %v1598 = vmul.f32 %v1466, 1.442695
  %v1599 = vpow.pop %v1598
  %v1600 = vmul.f32 %v1467, 1.442695
  %v1601 = vpow.pop %v1600
  %v1602 = vmul.f32 %v1468, 1.442695
  %v1603 = vpow.pop %v1602
  %v1604 = vmul.f32 %v1469, 1.442695
  %v1605 = vpow.pop %v1604
  %v1606 = vmul.f32 %v1470, 1.442695
  %v1607 = vpow.pop %v1606
  %v1608 = vmul.f32 %v1471, 1.442695
  %v1609 = vpow.pop %v1608
  %v1610 = vmul.f32 %v1472, 1.442695
  %v1611 = vpow.pop %v1610
  %v1612 = vmul.f32 %v1473, 1.442695
  %v1613 = vpow.pop %v1612
  %v1614 = vmul.f32 %v1474, 1.442695
  %v1615 = vpow.pop %v1614
  %v1616 = vmul.f32 %v1475, 1.442695
  %v1617 = vpow.pop %v1616
  %v1618 = vmul.f32 %v1476, 1.442695
  %v1619 = vpow.pop %v1618
  %v1620 = vmul.f32 %v1477, 1.442695
  %v1621 = vpow.pop %v1620
  %v1622 = vmul.f32 %v1478, 1.442695
  %v1623 = vpow.pop %v1622
  %v1624 = vmul.f32 %v1479, 1.442695
  %v1625 = vpow.pop %v1624
  %v1626 = vmul.f32 %v1480, 1.442695
  %v1627 = vpow.pop %v1626
  %v1628 = vmul.f32 %v1481, 1.442695
  %v1629 = vpow.pop %v1628
  %v1630 = vmul.f32 %v1482, 1.442695
  %v1631 = vpow.pop %v1630
  %v1632 = vmul.f32 %v1483, 1.442695
  %v1633 = vpow.pop %v1632
  %v1634 = vmul.f32 %v1484, 1.442695
  %v1635 = vpow.pop %v1634
  %v1636 = vmul.f32 %v1485, 1.442695
  %v1637 = vpow.pop %v1636
  %v1638 = vmul.f32 %v1486, 1.442695
  %v1639 = vpow.pop %v1638
  %v1640 = vmul.f32 %v1487, 1.442695
  %v1641 = vpow.pop %v1640
  %v1642 = vmul.f32 %v1488, 1.442695
  %v1643 = vpow.pop %v1642
  %v1644 = vmul.f32 %v1489, 1.442695
  %v1645 = vpow.pop %v1644
  %v1646 = vmul.f32 %v1490, 1.442695
  %v1647 = vpow.pop %v1646
  %v1648 = vmul.f32 %v1491, 1.442695
  %v1649 = vpow.pop %v1648
  %v1650 = vmul.f32 %v1492, 1.442695
  %v1651 = vpow.pop %v1650
  %v1652 = vmul.f32 %v1493, 1.442695
  %v1653 = vpow.pop %v1652
  %v1654 = vmul.f32 %v1494, 1.442695
  %v1655 = vpow.pop %v1654
  %v1656 = vmul.f32 %v1495, 1.442695
  %v1657 = vpow.pop %v1656
  %v1658 = vmul.f32 %v1496, 1.442695
  %v1659 = vpow.pop %v1658
  %v1660 = vmul.f32 %v1497, 1.442695
  %v1661 = vpow.pop %v1660
  %v1662 = vmul.f32 %v1498, 1.442695
  %v1663 = vpow.pop %v1662
  %v1664 = vmul.f32 %v1499, 1.442695
  %v1665 = vpow.pop %v1664
  %v1666 = vmul.f32 %v1500, 1.442695
  %v1667 = vpow.pop %v1666
  %v1668 = vmul.f32 %v1501, 1.442695
  %v1669 = vpow.pop %v1668
  %v1670 = vmul.f32 %v1502, 1.442695
  %v1671 = vpow.pop %v1670
  %v1672 = vmul.f32 %v1503, 1.442695
  %v1673 = vpow.pop %v1672
  %v1674 = vmul.f32 %v1504, 1.442695
  %v1675 = vpow.pop %v1674
  %v1676 = vmul.f32 %v1505, 1.442695
  %v1677 = vpow.pop %v1676
  %v1678 = vmul.f32 %v1506, 1.442695
  %v1679 = vpow.pop %v1678
  %v1680 = vmul.f32 %v1507, 1.442695
  %v1681 = vpow.pop %v1680
  %v1682 = vmul.f32 %v1508, 1.442695
  %v1683 = vpow.pop %v1682
  %v1684 = vmul.f32 %v1509, 1.442695
  %v1685 = vpow.pop %v1684
  %v1686 = vmul.f32 %v1510, 1.442695
  %v1687 = vpow.pop %v1686
  %v1688 = vmul.f32 %v1511, 1.442695
  %v1689 = vpow.pop %v1688
  %v1690 = vmul.f32 %v1512, 1.442695
  %v1691 = vpow.pop %v1690
  %v1692 = vmul.f32 %v1513, 1.442695
  %v1693 = vpow.pop %v1692
  %v1694 = vmul.f32 %v1514, 1.442695
  %v1695 = vpow.pop %v1694
  %v1696 = vmul.f32 %v1515, 1.442695
  %v1697 = vpow.pop %v1696
  %v1698 = vmul.f32 %v1516, 1.442695
  %v1699 = vpow.pop %v1698
  %v1700 = vmul.f32 %v1517, 1.442695
  %v1701 = vpow.pop %v1700
  %v1702 = vmul.f32 %v1518, 1.442695
  %v1703 = vpow.pop %v1702
  %v1704 = vmul.f32 %v1519, 1.442695
  %v1705 = vpow.pop %v1704
  %v1706 = vmul.f32 %v1520, 1.442695
  %v1707 = vpow.pop %v1706
  %v1708 = vmul.f32 %v1521, 1.442695
  %v1709 = vpow.pop %v1708
  %v1710 = vmul.f32 %v1522, 1.442695
  %v1711 = vpow.pop %v1710
  %v1712 = vmul.f32 %v1523, 1.442695
  %v1713 = vpow.pop %v1712
  %v1714 = vmul.f32 %v1524, 1.442695
  %v1715 = vpow.pop %v1714
  %v1716 = vmul.f32 %v1525, 1.442695
  %v1717 = vpow.pop %v1716
  %v1718 = vadd.f32 %v1527, 1.0
  %v1719 = vadd.f32 %v1529, 1.0
  %v1720 = vadd.f32 %v1531, 1.0
  %v1721 = vadd.f32 %v1533, 1.0
  %v1722 = vadd.f32 %v1535, 1.0
  %v1723 = vadd.f32 %v1537, 1.0
  %v1724 = vadd.f32 %v1539, 1.0
  %v1725 = vadd.f32 %v1541, 1.0
  %v1726 = vadd.f32 %v1543, 1.0
  %v1727 = vadd.f32 %v1545, 1.0
  %v1728 = vadd.f32 %v1547, 1.0
  %v1729 = vadd.f32 %v1549, 1.0
  %v1730 = vadd.f32 %v1551, 1.0
  %v1731 = vadd.f32 %v1553, 1.0
  %v1732 = vadd.f32 %v1555, 1.0
  %v1733 = vadd.f32 %v1557, 1.0
  %v1734 = vadd.f32 %v1559, 1.0
  %v1735 = vadd.f32 %v1561, 1.0
  %v1736 = vadd.f32 %v1563, 1.0
  %v1737 = vadd.f32 %v1565, 1.0
  %v1738 = vadd.f32 %v1567, 1.0
  %v1739 = vadd.f32 %v1569, 1.0
  %v1740 = vadd.f32 %v1571, 1.0
  %v1741 = vadd.f32 %v1573, 1.0
  %v1742 = vadd.f32 %v1575, 1.0
  %v1743 = vadd.f32 %v1577, 1.0
  %v1744 = vadd.f32 %v1579, 1.0
  %v1745 = vadd.f32 %v1581, 1.0
  %v1746 = vadd.f32 %v1583, 1.0
  %v1747 = vadd.f32 %v1585, 1.0
  %v1748 = vadd.f32 %v1587, 1.0
  %v1749 = vadd.f32 %v1589, 1.0
  %v1750 = vadd.f32 %v1591, 1.0
  %v1751 = vadd.f32 %v1593, 1.0
  %v1752 = vadd.f32 %v1595, 1.0
  %v1753 = vadd.f32 %v1597, 1.0
  %v1754 = vadd.f32 %v1599, 1.0
  %v1755 = vadd.f32 %v1601, 1.0
  %v1756 = vadd.f32 %v1603, 1.0
  %v1757 = vadd.f32 %v1605, 1.0
  %v1758 = vadd.f32 %v1607, 1.0
  %v1759 = vadd.f32 %v1609, 1.0
  %v1760 = vadd.f32 %v1611, 1.0
  %v1761 = vadd.f32 %v1613, 1.0
  %v1762 = vadd.f32 %v1615, 1.0
  %v1763 = vadd.f32 %v1617, 1.0
  %v1764 = vadd.f32 %v1619, 1.0
  %v1765 = vadd.f32 %v1621, 1.0
  %v1766 = vadd.f32 %v1623, 1.0
  %v1767 = vadd.f32 %v1625, 1.0
  %v1768 = vadd.f32 %v1627, 1.0
  %v1769 = vadd.f32 %v1629, 1.0
  %v1770 = vadd.f32 %v1631, 1.0
  %v1771 = vadd.f32 %v1633, 1.0
  %v1772 = vadd.f32 %v1635, 1.0
  %v1773 = vadd.f32 %v1637, 1.0
  %v1774 = vadd.f32 %v1639, 1.0
  %v1775 = vadd.f32 %v1641, 1.0
  %v1776 = vadd.f32 %v1643, 1.0
  %v1777 = vadd.f32 %v1645, 1.0
  %v1778 = vadd.f32 %v1647, 1.0
  %v1779 = vadd.f32 %v1649, 1.0
  %v1780 = vadd.f32 %v1651, 1.0
  %v1781 = vadd.f32 %v1653, 1.0
  %v1782 = vadd.f32 %v1655, 1.0
  %v1783 = vadd.f32 %v1657, 1.0
  %v1784 = vadd.f32 %v1659, 1.0
  %v1785 = vadd.f32 %v1661, 1.0
  %v1786 = vadd.f32 %v1663, 1.0
  %v1787 = vadd.f32 %v1665, 1.0
  %v1788 = vadd.f32 %v1667, 1.0
  %v1789 = vadd.f32 %v1669, 1.0
  %v1790 = vadd.f32 %v1671, 1.0
  %v1791 = vadd.f32 %v1673, 1.0
  %v1792 = vadd.f32 %v1675, 1.0
  %v1793 = vadd.f32 %v1677, 1.0
  %v1794 = vadd.f32 %v1679, 1.0
  %v1795 = vadd.f32 %v1681, 1.0
  %v1796 = vadd.f32 %v1683, 1.0
  %v1797 = vadd.f32 %v1685, 1.0
  %v1798 = vadd.f32 %v1687, 1.0
  %v1799 = vadd.f32 %v1689, 1.0
  %v1800 = vadd.f32 %v1691, 1.0
  %v1801 = vadd.f32 %v1693, 1.0
  %v1802 = vadd.f32 %v1695, 1.0
  %v1803 = vadd.f32 %v1697, 1.0
  %v1804 = vadd.f32 %v1699, 1.0
  %v1805 = vadd.f32 %v1701, 1.0
  %v1806 = vadd.f32 %v1703, 1.0
  %v1807 = vadd.f32 %v1705, 1.0
  %v1808 = vadd.f32 %v1707, 1.0
  %v1809 = vadd.f32 %v1709, 1.0
  %v1810 = vadd.f32 %v1711, 1.0
  %v1811 = vadd.f32 %v1713, 1.0
  %v1812 = vadd.f32 %v1715, 1.0
  %v1813 = vadd.f32 %v1717, 1.0
  %v1814 = vrcp.pop %v1718
  %v1815 = vmul.f32 1.0, %v1814
  %v1816 = vrcp.pop %v1719
  %v1817 = vmul.f32 1.0, %v1816
  %v1818 = vrcp.pop %v1720
  %v1819 = vmul.f32 1.0, %v1818
  %v1820 = vrcp.pop %v1721
  %v1821 = vmul.f32 1.0, %v1820
  %v1822 = vrcp.pop %v1722
  %v1823 = vmul.f32 1.0, %v1822
  %v1824 = vrcp.pop %v1723
  %v1825 = vmul.f32 1.0, %v1824
  %v1826 = vrcp.pop %v1724
  %v1827 = vmul.f32 1.0, %v1826
  %v1828 = vrcp.pop %v1725
  %v1829 = vmul.f32 1.0, %v1828
  %v1830 = vrcp.pop %v1726
  %v1831 = vmul.f32 1.0, %v1830
  %v1832 = vrcp.pop %v1727
  %v1833 = vmul.f32 1.0, %v1832
  %v1834 = vrcp.pop %v1728
  %v1835 = vmul.f32 1.0, %v1834
  %v1836 = vrcp.pop %v1729
  %v1837 = vmul.f32 1.0, %v1836
  %v1838 = vrcp.pop %v1730
  %v1839 = vmul.f32 1.0, %v1838
  %v1840 = vrcp.pop %v1731
  %v1841 = vmul.f32 1.0, %v1840
  %v1842 = vrcp.pop %v1732
  %v1843 = vmul.f32 1.0, %v1842
  %v1844 = vrcp.pop %v1733
  %v1845 = vmul.f32 1.0, %v1844
  %v1846 = vrcp.pop %v1734
  %v1847 = vmul.f32 1.0, %v1846
  %v1848 = vrcp.pop %v1735
  %v1849 = vmul.f32 1.0, %v1848
  %v1850 = vrcp.pop %v1736
  %v1851 = vmul.f32 1.0, %v1850
  %v1852 = vrcp.pop %v1737
  %v1853 = vmul.f32 1.0, %v1852
  %v1854 = vrcp.pop %v1738
  %v1855 = vmul.f32 1.0, %v1854
  %v1856 = vrcp.pop %v1739
  %v1857 = vmul.f32 1.0, %v1856
  %v1858 = vrcp.pop %v1740
  %v1859 = vmul.f32 1.0, %v1858
  %v1860 = vrcp.pop %v1741
  %v1861 = vmul.f32 1.0, %v1860
  %v1862 = vrcp.pop %v1742
  %v1863 = vmul.f32 1.0, %v1862
  %v1864 = vrcp.pop %v1743
  %v1865 = vmul.f32 1.0, %v1864
  %v1866 = vrcp.pop %v1744
  %v1867 = vmul.f32 1.0, %v1866
  %v1868 = vrcp.pop %v1745
  %v1869 = vmul.f32 1.0, %v1868
  %v1870 = vrcp.pop %v1746
  %v1871 = vmul.f32 1.0, %v1870
  %v1872 = vrcp.pop %v1747
  %v1873 = vmul.f32 1.0, %v1872
  %v1874 = vrcp.pop %v1748
  %v1875 = vmul.f32 1.0, %v1874
  %v1876 = vrcp.pop %v1749
  %v1877 = vmul.f32 1.0, %v1876
  %v1878 = vrcp.pop %v1750
  %v1879 = vmul.f32 1.0, %v1878
  %v1880 = vrcp.pop %v1751
  %v1881 = vmul.f32 1.0, %v1880
  %v1882 = vrcp.pop %v1752
  %v1883 = vmul.f32 1.0, %v1882
  %v1884 = vrcp.pop %v1753
  %v1885 = vmul.f32 1.0, %v1884
  %v1886 = vrcp.pop %v1754
  %v1887 = vmul.f32 1.0, %v1886
  %v1888 = vrcp.pop %v1755
  %v1889 = vmul.f32 1.0, %v1888
  %v1890 = vrcp.pop %v1756
  %v1891 = vmul.f32 1.0, %v1890
  %v1892 = vrcp.pop %v1757
  %v1893 = vmul.f32 1.0, %v1892
  %v1894 = vrcp.pop %v1758
  %v1895 = vmul.f32 1.0, %v1894
  %v1896 = vrcp.pop %v1759
  %v1897 = vmul.f32 1.0, %v1896
  %v1898 = vrcp.pop %v1760
  %v1899 = vmul.f32 1.0, %v1898
  %v1900 = vrcp.pop %v1761
  %v1901 = vmul.f32 1.0, %v1900
  %v1902 = vrcp.pop %v1762
  %v1903 = vmul.f32 1.0, %v1902
  %v1904 = vrcp.pop %v1763
  %v1905 = vmul.f32 1.0, %v1904
  %v1906 = vrcp.pop %v1764
  %v1907 = vmul.f32 1.0, %v1906
  %v1908 = vrcp.pop %v1765
  %v1909 = vmul.f32 1.0, %v1908
  %v1910 = vrcp.pop %v1766
  %v1911 = vmul.f32 1.0, %v1910
  %v1912 = vrcp.pop %v1767
  %v1913 = vmul.f32 1.0, %v1912
  %v1914 = vrcp.pop %v1768
  %v1915 = vmul.f32 1.0, %v1914
  %v1916 = vrcp.pop %v1769
  %v1917 = vmul.f32 1.0, %v1916
  %v1918 = vrcp.pop %v1770
  %v1919 = vmul.f32 1.0, %v1918
  %v1920 = vrcp.pop %v1771
  %v1921 = vmul.f32 1.0, %v1920
  %v1922 = vrcp.pop %v1772
  %v1923 = vmul.f32 1.0, %v1922
  %v1924 = vrcp.pop %v1773
  %v1925 = vmul.f32 1.0, %v1924
  %v1926 = vrcp.pop %v1774
  %v1927 = vmul.f32 1.0, %v1926
  %v1928 = vrcp.pop %v1775
  %v1929 = vmul.f32 1.0, %v1928
  %v1930 = vrcp.pop %v1776
  %v1931 = vmul.f32 1.0, %v1930
  %v1932 = vrcp.pop %v1777
  %v1933 = vmul.f32 1.0, %v1932
  %v1934 = vrcp.pop %v1778
  %v1935 = vmul.f32 1.0, %v1934
  %v1936 = vrcp.pop %v1779
  %v1937 = vmul.f32 1.0, %v1936
  %v1938 = vrcp.pop %v1780
  %v1939 = vmul.f32 1.0, %v1938
  %v1940 = vrcp.pop %v1781
  %v1941 = vmul.f32 1.0, %v1940
  %v1942 = vrcp.pop %v1782
  %v1943 = vmul.f32 1.0, %v1942
  %v1944 = vrcp.pop %v1783
  %v1945 = vmul.f32 1.0, %v1944
  %v1946 = vrcp.pop %v1784
  %v1947 = vmul.f32 1.0, %v1946
  %v1948 = vrcp.pop %v1785
  %v1949 = vmul.f32 1.0, %v1948
  %v1950 = vrcp.pop %v1786
  %v1951 = vmul.f32 1.0, %v1950
  %v1952 = vrcp.pop %v1787
  %v1953 = vmul.f32 1.0, %v1952
  %v1954 = vrcp.pop %v1788
  %v1955 = vmul.f32 1.0, %v1954
  %v1956 = vrcp.pop %v1789
  %v1957 = vmul.f32 1.0, %v1956
  %v1958 = vrcp.pop %v1790
  %v1959 = vmul.f32 1.0, %v1958
  %v1960 = vrcp.pop %v1791
  %v1961 = vmul.f32 1.0, %v1960
  %v1962 = vrcp.pop %v1792
  %v1963 = vmul.f32 1.0, %v1962
  %v1964 = vrcp.pop %v1793
  %v1965 = vmul.f32 1.0, %v1964
  %v1966 = vrcp.pop %v1794
  %v1967 = vmul.f32 1.0, %v1966
  %v1968 = vrcp.pop %v1795
  %v1969 = vmul.f32 1.0, %v1968
  %v1970 = vrcp.pop %v1796
  %v1971 = vmul.f32 1.0, %v1970
  %v1972 = vrcp.pop %v1797
  %v1973 = vmul.f32 1.0, %v1972
  %v1974 = vrcp.pop %v1798
  %v1975 = vmul.f32 1.0, %v1974
  %v1976 = vrcp.pop %v1799
  %v1977 = vmul.f32 1.0, %v1976
  %v1978 = vrcp.pop %v1800
  %v1979 = vmul.f32 1.0, %v1978
  %v1980 = vrcp.pop %v1801
  %v1981 = vmul.f32 1.0, %v1980
  %v1982 = vrcp.pop %v1802
  %v1983 = vmul.f32 1.0, %v1982
  %v1984 = vrcp.pop %v1803
  %v1985 = vmul.f32 1.0, %v1984
  %v1986 = vrcp.pop %v1804
  %v1987 = vmul.f32 1.0, %v1986
  %v1988 = vrcp.pop %v1805
  %v1989 = vmul.f32 1.0, %v1988
  %v1990 = vrcp.pop %v1806
  %v1991 = vmul.f32 1.0, %v1990
  %v1992 = vrcp.pop %v1807
  %v1993 = vmul.f32 1.0, %v1992
  %v1994 = vrcp.pop %v1808
  %v1995 = vmul.f32 1.0, %v1994
  %v1996 = vrcp.pop %v1809
  %v1997 = vmul.f32 1.0, %v1996
  %v1998 = vrcp.pop %v1810
  %v1999 = vmul.f32 1.0, %v1998
  %v2000 = vrcp.pop %v1811
  %v2001 = vmul.f32 1.0, %v2000
  %v2002 = vrcp.pop %v1812
  %v2003 = vmul.f32 1.0, %v2002
  %v2004 = vrcp.pop %v1813
  %v2005 = vmul.f32 1.0, %v2004
  %v2006 = vmul.f32 %v886, %v1815
  %v2007 = vmul.f32 %v888, %v1817
  %v2008 = vmul.f32 %v1079, %v1819
  %v2009 = vmul.f32 %v890, %v1821
  %v2010 = vmul.f32 %v892, %v1823
  %v2011 = vmul.f32 %v1083, %v1825
  %v2012 = vmul.f32 %v896, %v1827
  %v2013 = vmul.f32 %v898, %v1829
  %v2014 = vmul.f32 %v1089, %v1831
  %v2015 = vmul.f32 %v900, %v1833
  %v2016 = vmul.f32 %v902, %v1835
  %v2017 = vmul.f32 %v1093, %v1837
  %v2018 = vmul.f32 %v906, %v1839
  %v2019 = vmul.f32 %v908, %v1841
  %v2020 = vmul.f32 %v1099, %v1843
  %v2021 = vmul.f32 %v910, %v1845
  %v2022 = vmul.f32 %v912, %v1847
  %v2023 = vmul.f32 %v1103, %v1849
  %v2024 = vmul.f32 %v916, %v1851
  %v2025 = vmul.f32 %v918, %v1853
  %v2026 = vmul.f32 %v1109, %v1855
  %v2027 = vmul.f32 %v920, %v1857
  %v2028 = vmul.f32 %v922, %v1859
  %v2029 = vmul.f32 %v1113, %v1861
  %v2030 = vmul.f32 %v926, %v1863
  %v2031 = vmul.f32 %v928, %v1865
  %v2032 = vmul.f32 %v1119, %v1867
  %v2033 = vmul.f32 %v930, %v1869
  %v2034 = vmul.f32 %v932, %v1871
  %v2035 = vmul.f32 %v1123, %v1873
  %v2036 = vmul.f32 %v936, %v1875
  %v2037 = vmul.f32 %v938, %v1877
  %v2038 = vmul.f32 %v1129, %v1879
  %v2039 = vmul.f32 %v940, %v1881
  %v2040 = vmul.f32 %v942, %v1883
  %v2041 = vmul.f32 %v1133, %v1885
  %v2042 = vmul.f32 %v946, %v1887
  %v2043 = vmul.f32 %v948, %v1889
  %v2044 = vmul.f32 %v1139, %v1891
  %v2045 = vmul.f32 %v950, %v1893
  %v2046 = vmul.f32 %v952, %v1895
  %v2047 = vmul.f32 %v1143, %v1897
  %v2048 = vmul.f32 %v956, %v1899
  %v2049 = vmul.f32 %v958, %v1901
  %v2050 = vmul.f32 %v1149, %v1903
  %v2051 = vmul.f32 %v960, %v1905
  %v2052 = vmul.f32 %v962, %v1907
  %v2053 = vmul.f32 %v1153, %v1909
  %v2054 = vmul.f32 %v966, %v1911
  %v2055 = vmul.f32 %v968, %v1913
  %v2056 = vmul.f32 %v1159, %v1915
  %v2057 = vmul.f32 %v970, %v1917
  %v2058 = vmul.f32 %v972, %v1919
  %v2059 = vmul.f32 %v1163, %v1921
  %v2060 = vmul.f32 %v976, %v1923
  %v2061 = vmul.f32 %v978, %v1925
  %v2062 = vmul.f32 %v1169, %v1927
  %v2063 = vmul.f32 %v980, %v1929
  %v2064 = vmul.f32 %v982, %v1931
  %v2065 = vmul.f32 %v1173, %v1933
  %v2066 = vmul.f32 %v986, %v1935
  %v2067 = vmul.f32 %v988, %v1937
  %v2068 = vmul.f32 %v1179, %v1939
  %v2069 = vmul.f32 %v990, %v1941
  %v2070 = vmul.f32 %v992, %v1943
  %v2071 = vmul.f32 %v1183, %v1945
  %v2072 = vmul.f32 %v996, %v1947
  %v2073 = vmul.f32 %v998, %v1949
  %v2074 = vmul.f32 %v1189, %v1951
  %v2075 = vmul.f32 %v1000, %v1953
  %v2076 = vmul.f32 %v1002, %v1955
  %v2077 = vmul.f32 %v1193, %v1957
  %v2078 = vmul.f32 %v1006, %v1959
  %v2079 = vmul.f32 %v1008, %v1961
  %v2080 = vmul.f32 %v1199, %v1963
  %v2081 = vmul.f32 %v1010, %v1965
  %v2082 = vmul.f32 %v1012, %v1967
  %v2083 = vmul.f32 %v1203, %v1969
  %v2084 = vmul.f32 %v1016, %v1971
  %v2085 = vmul.f32 %v1018, %v1973
  %v2086 = vmul.f32 %v1209, %v1975
  %v2087 = vmul.f32 %v1020, %v1977
  %v2088 = vmul.f32 %v1022, %v1979
  %v2089 = vmul.f32 %v1213, %v1981
  %v2090 = vmul.f32 %v1026, %v1983
  %v2091 = vmul.f32 %v1028, %v1985
  %v2092 = vmul.f32 %v1219, %v1987
  %v2093 = vmul.f32 %v1030, %v1989
  %v2094 = vmul.f32 %v1032, %v1991
  %v2095 = vmul.f32 %v1223, %v1993
  %v2096 = vmul.f32 %v1036, %v1995
  %v2097 = vmul.f32 %v1038, %v1997
  %v2098 = vmul.f32 %v1229, %v1999
  %v2099 = vmul.f32 %v1040, %v2001
  %v2100 = vmul.f32 %v1042, %v2003
  %v2101 = vmul.f32 %v1233, %v2005
  %v2102 = vmul.f32 %v2006, %v1081
  %v2103 = vmul.f32 %v2007, %v1272
  %v2104 = vmul.f32 %v2008, %v1274
  %v2105 = vmul.f32 %v2009, %v1085
  %v2106 = vmul.f32 %v2010, %v1276
  %v2107 = vmul.f32 %v2011, %v1278
  %v2108 = vmul.f32 %v2012, %v1091
  %v2109 = vmul.f32 %v2013, %v1282
  %v2110 = vmul.f32 %v2014, %v1284
  %v2111 = vmul.f32 %v2015, %v1095
  %v2112 = vmul.f32 %v2016, %v1286
  %v2113 = vmul.f32 %v2017, %v1288
  %v2114 = vmul.f32 %v2018, %v1101
  %v2115 = vmul.f32 %v2019, %v1292
  %v2116 = vmul.f32 %v2020, %v1294
  %v2117 = vmul.f32 %v2021, %v1105
  %v2118 = vmul.f32 %v2022, %v1296
  %v2119 = vmul.f32 %v2023, %v1298
  %v2120 = vmul.f32 %v2024, %v1111
  %v2121 = vmul.f32 %v2025, %v1302
  %v2122 = vmul.f32 %v2026, %v1304
  %v2123 = vmul.f32 %v2027, %v1115
  %v2124 = vmul.f32 %v2028, %v1306
  %v2125 = vmul.f32 %v2029, %v1308
  %v2126 = vmul.f32 %v2030, %v1121
  %v2127 = vmul.f32 %v2031, %v1312
  %v2128 = vmul.f32 %v2032, %v1314
  %v2129 = vmul.f32 %v2033, %v1125
  %v2130 = vmul.f32 %v2034, %v1316
  %v2131 = vmul.f32 %v2035, %v1318
  %v2132 = vmul.f32 %v2036, %v1131
  %v2133 = vmul.f32 %v2037, %v1322
  %v2134 = vmul.f32 %v2038, %v1324
  %v2135 = vmul.f32 %v2039, %v1135
  %v2136 = vmul.f32 %v2040, %v1326
  %v2137 = vmul.f32 %v2041, %v1328
  %v2138 = vmul.f32 %v2042, %v1141
  %v2139 = vmul.f32 %v2043, %v1332
  %v2140 = vmul.f32 %v2044, %v1334
  %v2141 = vmul.f32 %v2045, %v1145
  %v2142 = vmul.f32 %v2046, %v1336
  %v2143 = vmul.f32 %v2047, %v1338
  %v2144 = vmul.f32 %v2048, %v1151
  %v2145 = vmul.f32 %v2049, %v1342
  %v2146 = vmul.f32 %v2050, %v1344
  %v2147 = vmul.f32 %v2051, %v1155
  %v2148 = vmul.f32 %v2052, %v1346
  %v2149 = vmul.f32 %v2053, %v1348
  %v2150 = vmul.f32 %v2054, %v1161
  %v2151 = vmul.f32 %v2055, %v1352
  %v2152 = vmul.f32 %v2056, %v1354
  %v2153 = vmul.f32 %v2057, %v1165
  %v2154 = vmul.f32 %v2058, %v1356
  %v2155 = vmul.f32 %v2059, %v1358
  %v2156 = vmul.f32 %v2060, %v1171
  %v2157 = vmul.f32 %v2061, %v1362
  %v2158 = vmul.f32 %v2062, %v1364
  %v2159 = vmul.f32 %v2063, %v1175
  %v2160 = vmul.f32 %v2064, %v1366
  %v2161 = vmul.f32 %v2065, %v1368
  %v2162 = vmul.f32 %v2066, %v1181
  %v2163 = vmul.f32 %v2067, %v1372
  %v2164 = vmul.f32 %v2068, %v1374
  %v2165 = vmul.f32 %v2069, %v1185
  %v2166 = vmul.f32 %v2070, %v1376
  %v2167 = vmul.f32 %v2071, %v1378
  %v2168 = vmul.f32 %v2072, %v1191
  %v2169 = vmul.f32 %v2073, %v1382
  %v2170 = vmul.f32 %v2074, %v1384
  %v2171 = vmul.f32 %v2075, %v1195
  %v2172 = vmul.f32 %v2076, %v1386
  %v2173 = vmul.f32 %v2077, %v1388
  %v2174 = vmul.f32 %v2078, %v1201
  %v2175 = vmul.f32 %v2079, %v1392
  %v2176 = vmul.f32 %v2080, %v1394
  %v2177 = vmul.f32 %v2081, %v1205
  %v2178 = vmul.f32 %v2082, %v1396
  %v2179 = vmul.f32 %v2083, %v1398
  %v2180 = vmul.f32 %v2084, %v1211
  %v2181 = vmul.f32 %v2085, %v1402
  %v2182 = vmul.f32 %v2086, %v1404
  %v2183 = vmul.f32 %v2087, %v1215
  %v2184 = vmul.f32 %v2088, %v1406
  %v2185 = vmul.f32 %v2089, %v1408
  %v2186 = vmul.f32 %v2090, %v1221
  %v2187 = vmul.f32 %v2091, %v1412
  %v2188 = vmul.f32 %v2092, %v1414
  %v2189 = vmul.f32 %v2093, %v1225
  %v2190 = vmul.f32 %v2094, %v1416
  %v2191 = vmul.f32 %v2095, %v1418
  %v2192 = vmul.f32 %v2096, %v1231
  %v2193 = vmul.f32 %v2097, %v1422
  %v2194 = vmul.f32 %v2098, %v1424
  %v2195 = vmul.f32 %v2099, %v1235
  %v2196 = vmul.f32 %v2100, %v1426
  %v2197 = vmul.f32 %v2101, %v1428
  %v2198 = vld [vmem:[#allocation2] sm:$0xff]
  %v2199 = vld [vmem:[#allocation2 + $0x8] sm:$0xff]
  %v2200 = vld [vmem:[#allocation2 + $0x10] sm:$0xff]
  %v2201 = vld [vmem:[#allocation2 + $0x18] sm:$0xff]
  %v2202 = vld [vmem:[#allocation2 + $0x20] sm:$0xff]
  %v2203 = vld [vmem:[#allocation2 + $0x28] sm:$0xff]
  %v2204 = vld [vmem:[#allocation2 + $0x30] sm:$0xff]
  %v2205 = vld [vmem:[#allocation2 + $0x38] sm:$0xff]
  %v2206 = vld [vmem:[#allocation2 + $0x40] sm:$0xff]
  %v2207 = vld [vmem:[#allocation2 + $0x48] sm:$0xff]
  %v2208 = vld [vmem:[#allocation2 + $0x50] sm:$0xff]
  %v2209 = vld [vmem:[#allocation2 + $0x58] sm:$0xff]
  %v2210 = vld [vmem:[#allocation2 + $0x60] sm:$0xff]
  %v2211 = vld [vmem:[#allocation2 + $0x68] sm:$0xff]
  %v2212 = vld [vmem:[#allocation2 + $0x70] sm:$0xff]
  %v2213 = vld [vmem:[#allocation2 + $0x78] sm:$0xff]
  %v2214 = vld [vmem:[#allocation2 + $0x80] sm:$0xff]
  %v2215 = vld [vmem:[#allocation2 + $0x88] sm:$0xff]
  %v2216 = vld [vmem:[#allocation2 + $0x90] sm:$0xff]
  %v2217 = vld [vmem:[#allocation2 + $0x98] sm:$0xff]
  %v2218 = vld [vmem:[#allocation2 + $0xa0] sm:$0xff]
  %v2219 = vld [vmem:[#allocation2 + $0xa8] sm:$0xff]
  %v2220 = vld [vmem:[#allocation2 + $0xb0] sm:$0xff]
  %v2221 = vld [vmem:[#allocation2 + $0xb8] sm:$0xff]
  %v2222 = vld [vmem:[#allocation2 + $0xc0] sm:$0xff]
  %v2223 = vld [vmem:[#allocation2 + $0xc8] sm:$0xff]
  %v2224 = vld [vmem:[#allocation2 + $0xd0] sm:$0xff]
  %v2225 = vld [vmem:[#allocation2 + $0xd8] sm:$0xff]
  %v2226 = vld [vmem:[#allocation2 + $0xe0] sm:$0xff]
  %v2227 = vld [vmem:[#allocation2 + $0xe8] sm:$0xff]
  %v2228 = vld [vmem:[#allocation2 + $0xf0] sm:$0xff]
  %v2229 = vld [vmem:[#allocation2 + $0xf8] sm:$0xff]
  %v2230 = vld [vmem:[#allocation2 + $0x100] sm:$0xff]
  %v2231 = vld [vmem:[#allocation2 + $0x108] sm:$0xff]
  %v2232 = vld [vmem:[#allocation2 + $0x110] sm:$0xff]
  %v2233 = vld [vmem:[#allocation2 + $0x118] sm:$0xff]
  %v2234 = vld [vmem:[#allocation2 + $0x120] sm:$0xff]
  %v2235 = vld [vmem:[#allocation2 + $0x128] sm:$0xff]
  %v2236 = vld [vmem:[#allocation2 + $0x130] sm:$0xff]
  %v2237 = vld [vmem:[#allocation2 + $0x138] sm:$0xff]
  %v2238 = vld [vmem:[#allocation2 + $0x140] sm:$0xff]
  %v2239 = vld [vmem:[#allocation2 + $0x148] sm:$0xff]
  %v2240 = vld [vmem:[#allocation2 + $0x150] sm:$0xff]
  %v2241 = vld [vmem:[#allocation2 + $0x158] sm:$0xff]
  %v2242 = vld [vmem:[#allocation2 + $0x160] sm:$0xff]
  %v2243 = vld [vmem:[#allocation2 + $0x168] sm:$0xff]
  %v2244 = vld [vmem:[#allocation2 + $0x170] sm:$0xff]
  %v2245 = vld [vmem:[#allocation2 + $0x178] sm:$0xff]
  %v2246 = vld [vmem:[#allocation2 + $0x180] sm:$0xff]
  %v2247 = vld [vmem:[#allocation2 + $0x188] sm:$0xff]
  %v2248 = vld [vmem:[#allocation2 + $0x190] sm:$0xff]
  %v2249 = vld [vmem:[#allocation2 + $0x198] sm:$0xff]
  %v2250 = vld [vmem:[#allocation2 + $0x1a0] sm:$0xff]
  %v2251 = vld [vmem:[#allocation2 + $0x1a8] sm:$0xff]
  %v2252 = vld [vmem:[#allocation2 + $0x1b0] sm:$0xff]
  %v2253 = vld [vmem:[#allocation2 + $0x1b8] sm:$0xff]
  %v2254 = vld [vmem:[#allocation2 + $0x1c0] sm:$0xff]
  %v2255 = vld [vmem:[#allocation2 + $0x1c8] sm:$0xff]
  %v2256 = vld [vmem:[#allocation2 + $0x1d0] sm:$0xff]
  %v2257 = vld [vmem:[#allocation2 + $0x1d8] sm:$0xff]
  %v2258 = vld [vmem:[#allocation2 + $0x1e0] sm:$0xff]
  %v2259 = vld [vmem:[#allocation2 + $0x1e8] sm:$0xff]
  %v2260 = vld [vmem:[#allocation2 + $0x1f0] sm:$0xff]
  %v2261 = vld [vmem:[#allocation2 + $0x1f8] sm:$0xff]
  %v2262 = vpack.c.bf16 %v2105, %v2102
  %v2263 = vpack.c.bf16 %v2106, %v2103
  %v2264 = vpack.c.bf16 %v2107, %v2104
  %v2265 = vpack.c.bf16 %v2111, %v2108
  %v2266 = vpack.c.bf16 %v2112, %v2109
  %v2267 = vpack.c.bf16 %v2113, %v2110
  %v2268 = vpack.c.bf16 %v2117, %v2114
  %v2269 = vpack.c.bf16 %v2118, %v2115
  %v2270 = vpack.c.bf16 %v2119, %v2116
  %v2271 = vpack.c.bf16 %v2123, %v2120
  %v2272 = vpack.c.bf16 %v2124, %v2121
  %v2273 = vpack.c.bf16 %v2125, %v2122
  %v2274 = vpack.c.bf16 %v2129, %v2126
  %v2275 = vpack.c.bf16 %v2130, %v2127
  %v2276 = vpack.c.bf16 %v2131, %v2128
  %v2277 = vpack.c.bf16 %v2135, %v2132
  %v2278 = vpack.c.bf16 %v2136, %v2133
  %v2279 = vpack.c.bf16 %v2137, %v2134
  %v2280 = vpack.c.bf16 %v2141, %v2138
  %v2281 = vpack.c.bf16 %v2142, %v2139
  %v2282 = vpack.c.bf16 %v2143, %v2140
  %v2283 = vpack.c.bf16 %v2147, %v2144
  %v2284 = vpack.c.bf16 %v2148, %v2145
  %v2285 = vpack.c.bf16 %v2149, %v2146
  %v2286 = vpack.c.bf16 %v2153, %v2150
  %v2287 = vpack.c.bf16 %v2154, %v2151
  %v2288 = vpack.c.bf16 %v2155, %v2152
  %v2289 = vpack.c.bf16 %v2159, %v2156
  %v2290 = vpack.c.bf16 %v2160, %v2157
  %v2291 = vpack.c.bf16 %v2161, %v2158
  %v2292 = vpack.c.bf16 %v2165, %v2162
  %v2293 = vpack.c.bf16 %v2166, %v2163
  %v2294 = vpack.c.bf16 %v2167, %v2164
  %v2295 = vpack.c.bf16 %v2171, %v2168
  %v2296 = vpack.c.bf16 %v2172, %v2169
  %v2297 = vpack.c.bf16 %v2173, %v2170
  %v2298 = vpack.c.bf16 %v2177, %v2174
  %v2299 = vpack.c.bf16 %v2178, %v2175
  %v2300 = vpack.c.bf16 %v2179, %v2176
  %v2301 = vpack.c.bf16 %v2183, %v2180
  %v2302 = vpack.c.bf16 %v2184, %v2181
  %v2303 = vpack.c.bf16 %v2185, %v2182
  %v2304 = vpack.c.bf16 %v2189, %v2186
  %v2305 = vpack.c.bf16 %v2190, %v2187
  %v2306 = vpack.c.bf16 %v2191, %v2188
  %v2307 = vpack.c.bf16 %v2195, %v2192
  %v2308 = vpack.c.bf16 %v2196, %v2193
  %v2309 = vpack.c.bf16 %v2197, %v2194
  %v2310 = vld [vmem:[%s2] sm:$0xff]
  %v2311 = vld [vmem:[%s2 + $0x8] sm:$0xff]
  %v2312 = vld [vmem:[%s2 + $0x10] sm:$0xff]
  %v2313 = vld [vmem:[%s2 + $0x18] sm:$0xff]
  %v2314 = vld [vmem:[%s2 + $0x20] sm:$0xff]
  %v2315 = vld [vmem:[%s2 + $0x28] sm:$0xff]
  %v2316 = vld [vmem:[%s2 + $0x30] sm:$0xff]
  %v2317 = vld [vmem:[%s2 + $0x38] sm:$0xff]
  %v2318 = vld [vmem:[%s2 + $0x40] sm:$0xff]
  %v2319 = vld [vmem:[%s2 + $0x48] sm:$0xff]
  %v2320 = vld [vmem:[%s2 + $0x50] sm:$0xff]
  %v2321 = vld [vmem:[%s2 + $0x58] sm:$0xff]
  %v2322 = vld [vmem:[%s2 + $0x60] sm:$0xff]
  %v2323 = vld [vmem:[%s2 + $0x68] sm:$0xff]
  %v2324 = vld [vmem:[%s2 + $0x70] sm:$0xff]
  %v2325 = vld [vmem:[%s2 + $0x78] sm:$0xff]
  %v2326 = vld [vmem:[%s2 + $0x80] sm:$0xff]
  %v2327 = vld [vmem:[%s2 + $0x88] sm:$0xff]
  %v2328 = vld [vmem:[%s2 + $0x90] sm:$0xff]
  %v2329 = vld [vmem:[%s2 + $0x98] sm:$0xff]
  %v2330 = vld [vmem:[%s2 + $0xa0] sm:$0xff]
  %v2331 = vld [vmem:[%s2 + $0xa8] sm:$0xff]
  %v2332 = vld [vmem:[%s2 + $0xb0] sm:$0xff]
  %v2333 = vld [vmem:[%s2 + $0xb8] sm:$0xff]
  %v2334 = vld [vmem:[%s2 + $0xc0] sm:$0xff]
  %v2335 = vld [vmem:[%s2 + $0xc8] sm:$0xff]
  %v2336 = vld [vmem:[%s2 + $0xd0] sm:$0xff]
  %v2337 = vld [vmem:[%s2 + $0xd8] sm:$0xff]
  %v2338 = vld [vmem:[%s2 + $0xe0] sm:$0xff]
  %v2339 = vld [vmem:[%s2 + $0xe8] sm:$0xff]
  %v2340 = vld [vmem:[%s2 + $0xf0] sm:$0xff]
  %v2341 = vld [vmem:[%s2 + $0xf8] sm:$0xff]
  %v2342 = vld [vmem:[%s2 + $0x100] sm:$0xff]
  %v2343 = vld [vmem:[%s2 + $0x108] sm:$0xff]
  %v2344 = vld [vmem:[%s2 + $0x110] sm:$0xff]
  %v2345 = vld [vmem:[%s2 + $0x118] sm:$0xff]
  %v2346 = vld [vmem:[%s2 + $0x120] sm:$0xff]
  %v2347 = vld [vmem:[%s2 + $0x128] sm:$0xff]
  %v2348 = vld [vmem:[%s2 + $0x130] sm:$0xff]
  %v2349 = vld [vmem:[%s2 + $0x138] sm:$0xff]
  %v2350 = vld [vmem:[%s2 + $0x140] sm:$0xff]
  %v2351 = vld [vmem:[%s2 + $0x148] sm:$0xff]
  %v2352 = vld [vmem:[%s2 + $0x150] sm:$0xff]
  %v2353 = vld [vmem:[%s2 + $0x158] sm:$0xff]
  %v2354 = vld [vmem:[%s2 + $0x160] sm:$0xff]
  %v2355 = vld [vmem:[%s2 + $0x168] sm:$0xff]
  %v2356 = vld [vmem:[%s2 + $0x170] sm:$0xff]
  %v2357 = vld [vmem:[%s2 + $0x178] sm:$0xff]
  %v2406 = vunpack.c.l.b16 %v2310
  %v2407 = vunpack.c.h.b16 %v2310
  %v2408 = vunpack.c.l.b16 %v2311
  %v2409 = vunpack.c.h.b16 %v2311
  %v2410 = vunpack.c.l.b16 %v2312
  %v2411 = vunpack.c.h.b16 %v2312
  %v2412 = vunpack.c.l.b16 %v2313
  %v2413 = vunpack.c.h.b16 %v2313
  %v2414 = vunpack.c.l.b16 %v2314
  %v2415 = vunpack.c.h.b16 %v2314
  %v2416 = vunpack.c.l.b16 %v2315
  %v2417 = vunpack.c.h.b16 %v2315
  %v2418 = vunpack.c.l.b16 %v2316
  %v2419 = vunpack.c.h.b16 %v2316
  %v2420 = vunpack.c.l.b16 %v2317
  %v2421 = vunpack.c.h.b16 %v2317
  %v2422 = vunpack.c.l.b16 %v2318
  %v2423 = vunpack.c.h.b16 %v2318
  %v2424 = vunpack.c.l.b16 %v2319
  %v2425 = vunpack.c.h.b16 %v2319
  %v2426 = vunpack.c.l.b16 %v2320
  %v2427 = vunpack.c.h.b16 %v2320
  %v2428 = vunpack.c.l.b16 %v2321
  %v2429 = vunpack.c.h.b16 %v2321
  %v2430 = vunpack.c.l.b16 %v2322
  %v2431 = vunpack.c.h.b16 %v2322
  %v2432 = vunpack.c.l.b16 %v2323
  %v2433 = vunpack.c.h.b16 %v2323
  %v2434 = vunpack.c.l.b16 %v2324
  %v2435 = vunpack.c.h.b16 %v2324
  %v2436 = vunpack.c.l.b16 %v2325
  %v2437 = vunpack.c.h.b16 %v2325
  %v2438 = vunpack.c.l.b16 %v2326
  %v2439 = vunpack.c.h.b16 %v2326
  %v2440 = vunpack.c.l.b16 %v2327
  %v2441 = vunpack.c.h.b16 %v2327
  %v2442 = vunpack.c.l.b16 %v2328
  %v2443 = vunpack.c.h.b16 %v2328
  %v2444 = vunpack.c.l.b16 %v2329
  %v2445 = vunpack.c.h.b16 %v2329
  %v2446 = vunpack.c.l.b16 %v2330
  %v2447 = vunpack.c.h.b16 %v2330
  %v2448 = vunpack.c.l.b16 %v2331
  %v2449 = vunpack.c.h.b16 %v2331
  %v2450 = vunpack.c.l.b16 %v2332
  %v2451 = vunpack.c.h.b16 %v2332
  %v2452 = vunpack.c.l.b16 %v2333
  %v2453 = vunpack.c.h.b16 %v2333
  %v2454 = vunpack.c.l.b16 %v2334
  %v2455 = vunpack.c.h.b16 %v2334
  %v2456 = vunpack.c.l.b16 %v2335
  %v2457 = vunpack.c.h.b16 %v2335
  %v2458 = vunpack.c.l.b16 %v2336
  %v2459 = vunpack.c.h.b16 %v2336
  %v2460 = vunpack.c.l.b16 %v2337
  %v2461 = vunpack.c.h.b16 %v2337
  %v2462 = vunpack.c.l.b16 %v2338
  %v2463 = vunpack.c.h.b16 %v2338
  %v2464 = vunpack.c.l.b16 %v2339
  %v2465 = vunpack.c.h.b16 %v2339
  %v2466 = vunpack.c.l.b16 %v2340
  %v2467 = vunpack.c.h.b16 %v2340
  %v2468 = vunpack.c.l.b16 %v2341
  %v2469 = vunpack.c.h.b16 %v2341
  %v2470 = vunpack.c.l.b16 %v2342
  %v2471 = vunpack.c.h.b16 %v2342
  %v2472 = vunpack.c.l.b16 %v2343
  %v2473 = vunpack.c.h.b16 %v2343
  %v2474 = vunpack.c.l.b16 %v2344
  %v2475 = vunpack.c.h.b16 %v2344
  %v2476 = vunpack.c.l.b16 %v2345
  %v2477 = vunpack.c.h.b16 %v2345
  %v2478 = vunpack.c.l.b16 %v2346
  %v2479 = vunpack.c.h.b16 %v2346
  %v2480 = vunpack.c.l.b16 %v2347
  %v2481 = vunpack.c.h.b16 %v2347
  %v2482 = vunpack.c.l.b16 %v2348
  %v2483 = vunpack.c.h.b16 %v2348
  %v2484 = vunpack.c.l.b16 %v2349
  %v2485 = vunpack.c.h.b16 %v2349
  %v2486 = vunpack.c.l.b16 %v2350
  %v2487 = vunpack.c.h.b16 %v2350
  %v2488 = vunpack.c.l.b16 %v2351
  %v2489 = vunpack.c.h.b16 %v2351
  %v2490 = vunpack.c.l.b16 %v2352
  %v2491 = vunpack.c.h.b16 %v2352
  %v2492 = vunpack.c.l.b16 %v2353
  %v2493 = vunpack.c.h.b16 %v2353
  %v2494 = vunpack.c.l.b16 %v2354
  %v2495 = vunpack.c.h.b16 %v2354
  %v2496 = vunpack.c.l.b16 %v2355
  %v2497 = vunpack.c.h.b16 %v2355
  %v2498 = vunpack.c.l.b16 %v2356
  %v2499 = vunpack.c.h.b16 %v2356
  %v2500 = vunpack.c.l.b16 %v2357
  %v2501 = vunpack.c.h.b16 %v2357
  %v2502 = vpack.c.b16 %v2408, %v2406
  %v2503 = vpack.c.b16 %v2409, %v2407
  %v2504 = vpack.c.b16 %v2412, %v2410
  %v2505 = vpack.c.b16 %v2413, %v2411
  %v2506 = vpack.c.b16 %v2416, %v2414
  %v2507 = vpack.c.b16 %v2417, %v2415
  %v2508 = vpack.c.b16 %v2420, %v2418
  %v2509 = vpack.c.b16 %v2421, %v2419
  %v2510 = vpack.c.b16 %v2424, %v2422
  %v2511 = vpack.c.b16 %v2425, %v2423
  %v2512 = vpack.c.b16 %v2428, %v2426
  %v2513 = vpack.c.b16 %v2429, %v2427
  %v2514 = vpack.c.b16 %v2432, %v2430
  %v2515 = vpack.c.b16 %v2433, %v2431
  %v2516 = vpack.c.b16 %v2436, %v2434
  %v2517 = vpack.c.b16 %v2437, %v2435
  %v2518 = vpack.c.b16 %v2440, %v2438
  %v2519 = vpack.c.b16 %v2441, %v2439
  %v2520 = vpack.c.b16 %v2444, %v2442
  %v2521 = vpack.c.b16 %v2445, %v2443
  %v2522 = vpack.c.b16 %v2448, %v2446
  %v2523 = vpack.c.b16 %v2449, %v2447
  %v2524 = vpack.c.b16 %v2452, %v2450
  %v2525 = vpack.c.b16 %v2453, %v2451
  %v2526 = vpack.c.b16 %v2456, %v2454
  %v2527 = vpack.c.b16 %v2457, %v2455
  %v2528 = vpack.c.b16 %v2460, %v2458
  %v2529 = vpack.c.b16 %v2461, %v2459
  %v2530 = vpack.c.b16 %v2464, %v2462
  %v2531 = vpack.c.b16 %v2465, %v2463
  %v2532 = vpack.c.b16 %v2468, %v2466
  %v2533 = vpack.c.b16 %v2469, %v2467
  %v2534 = vpack.c.b16 %v2472, %v2470
  %v2535 = vpack.c.b16 %v2473, %v2471
  %v2536 = vpack.c.b16 %v2476, %v2474
  %v2537 = vpack.c.b16 %v2477, %v2475
  %v2538 = vpack.c.b16 %v2480, %v2478
  %v2539 = vpack.c.b16 %v2481, %v2479
  %v2540 = vpack.c.b16 %v2484, %v2482
  %v2541 = vpack.c.b16 %v2485, %v2483
  %v2542 = vpack.c.b16 %v2488, %v2486
  %v2543 = vpack.c.b16 %v2489, %v2487
  %v2544 = vpack.c.b16 %v2492, %v2490
  %v2545 = vpack.c.b16 %v2493, %v2491
  %v2546 = vpack.c.b16 %v2496, %v2494
  %v2547 = vpack.c.b16 %v2497, %v2495
  %v2548 = vpack.c.b16 %v2500, %v2498
  %v2549 = vpack.c.b16 %v2501, %v2499
  %2598 = vmatprep.subr.bf16.mxu0 %v2503
  %2599 = vmatpush1.bf16.msra.mxu0 %v2502
  %2600 = vmatprep.subr.bf16.mxu0 %v2505
  %2601 = vmatpush1.bf16.msra.mxu0 %v2504
  %2602 = vmatprep.subr.bf16.mxu0 %v2507
  %2603 = vmatpush1.bf16.msra.mxu0 %v2506
  %2604 = vmatprep.subr.bf16.mxu0 %v2509
  %2605 = vmatpush1.bf16.msra.mxu0 %v2508
  %2606 = vmatprep.subr.bf16.mxu0 %v2511
  %2607 = vmatpush1.bf16.msra.mxu0 %v2510
  %2608 = vmatprep.subr.bf16.mxu0 %v2513
  %2609 = vmatpush1.bf16.msra.mxu0 %v2512
  %2610 = vmatprep.subr.bf16.mxu0 %v2515
  %2611 = vmatpush1.bf16.msra.mxu0 %v2514
  %2612 = vmatprep.subr.bf16.mxu0 %v2517
  %2613 = vmatpush1.bf16.msra.mxu0 %v2516
  %2614 = vmatprep.subr.bf16.mxu0 %v2519
  %2615 = vmatpush1.bf16.msra.mxu0 %v2518
  %2616 = vmatprep.subr.bf16.mxu0 %v2521
  %2617 = vmatpush1.bf16.msra.mxu0 %v2520
  %2618 = vmatprep.subr.bf16.mxu0 %v2523
  %2619 = vmatpush1.bf16.msra.mxu0 %v2522
  %2620 = vmatprep.subr.bf16.mxu0 %v2525
  %2621 = vmatpush1.bf16.msra.mxu0 %v2524
  %2622 = vmatprep.subr.bf16.mxu0 %v2527
  %2623 = vmatpush1.bf16.msra.mxu0 %v2526
  %2624 = vmatprep.subr.bf16.mxu0 %v2529
  %2625 = vmatpush1.bf16.msra.mxu0 %v2528
  %2626 = vmatprep.subr.bf16.mxu0 %v2531
  %2627 = vmatpush1.bf16.msra.mxu0 %v2530
  %2628 = vmatprep.subr.bf16.mxu0 %v2533
  %2629 = vmatpush1.bf16.msra.mxu0 %v2532
  %2630 = vmatprep.mubr.bf16.mxu0 %v2263
  %2631 = vmatmul.mubr.bf16.gmra.mrb[0].mxu0 %v2262
  %v2632 = vpop.f32.mrb[0].mxu0
  %v2633 = vadd.f32 0.0, %v2632
  %v2634 = vpop.f32.mrb[0].mxu0
  %v2635 = vadd.f32 0.0, %v2634
  %v2636 = vpop.f32.mrb[0].mxu0
  %v2637 = vadd.f32 0.0, %v2636
  %v2638 = vpop.f32.mrb[0].mxu0
  %v2639 = vadd.f32 0.0, %v2638
  %2640 = vmatprep.mubr.bf16.mxu0 %v2266
  %2641 = vmatmul.mubr.bf16.gmra.mrb[0].mxu0 %v2265
  %v2642 = vpop.f32.mrb[0].mxu0
  %v2643 = vadd.f32 0.0, %v2642
  %v2644 = vpop.f32.mrb[0].mxu0
  %v2645 = vadd.f32 0.0, %v2644
  %v2646 = vpop.f32.mrb[0].mxu0
  %v2647 = vadd.f32 0.0, %v2646
  %v2648 = vpop.f32.mrb[0].mxu0
  %v2649 = vadd.f32 0.0, %v2648
  %2650 = vmatprep.mubr.bf16.mxu0 %v2269
  %2651 = vmatmul.mubr.bf16.gmra.mrb[0].mxu0 %v2268
  %v2652 = vpop.f32.mrb[0].mxu0
  %v2653 = vadd.f32 0.0, %v2652
  %v2654 = vpop.f32.mrb[0].mxu0
  %v2655 = vadd.f32 0.0, %v2654
  %v2656 = vpop.f32.mrb[0].mxu0
  %v2657 = vadd.f32 0.0, %v2656
  %v2658 = vpop.f32.mrb[0].mxu0
  %v2659 = vadd.f32 0.0, %v2658
  %2660 = vmatprep.mubr.bf16.mxu0 %v2272
  %2661 = vmatmul.mubr.bf16.gmra.mrb[0].mxu0 %v2271
  %v2662 = vpop.f32.mrb[0].mxu0
  %v2663 = vadd.f32 0.0, %v2662
  %v2664 = vpop.f32.mrb[0].mxu0
  %v2665 = vadd.f32 0.0, %v2664
  %v2666 = vpop.f32.mrb[0].mxu0
  %v2667 = vadd.f32 0.0, %v2666
  %v2668 = vpop.f32.mrb[0].mxu0
  %v2669 = vadd.f32 0.0, %v2668
  %2670 = vmatprep.mubr.bf16.mxu0 %v2275
  %2671 = vmatmul.mubr.bf16.gmra.mrb[0].mxu0 %v2274
  %v2672 = vpop.f32.mrb[0].mxu0
  %v2673 = vadd.f32 0.0, %v2672
  %v2674 = vpop.f32.mrb[0].mxu0
  %v2675 = vadd.f32 0.0, %v2674
  %v2676 = vpop.f32.mrb[0].mxu0
  %v2677 = vadd.f32 0.0, %v2676
  %v2678 = vpop.f32.mrb[0].mxu0
  %v2679 = vadd.f32 0.0, %v2678
  %2680 = vmatprep.mubr.bf16.mxu0 %v2278
  %2681 = vmatmul.mubr.bf16.gmra.mrb[0].mxu0 %v2277
  %v2682 = vpop.f32.mrb[0].mxu0
  %v2683 = vadd.f32 0.0, %v2682
  %v2684 = vpop.f32.mrb[0].mxu0
  %v2685 = vadd.f32 0.0, %v2684
  %v2686 = vpop.f32.mrb[0].mxu0
  %v2687 = vadd.f32 0.0, %v2686
  %v2688 = vpop.f32.mrb[0].mxu0
  %v2689 = vadd.f32 0.0, %v2688
  %2690 = vmatprep.mubr.bf16.mxu0 %v2281
  %2691 = vmatmul.mubr.bf16.gmra.mrb[0].mxu0 %v2280
  %v2692 = vpop.f32.mrb[0].mxu0
  %v2693 = vadd.f32 0.0, %v2692
  %v2694 = vpop.f32.mrb[0].mxu0
  %v2695 = vadd.f32 0.0, %v2694
  %v2696 = vpop.f32.mrb[0].mxu0
  %v2697 = vadd.f32 0.0, %v2696
  %v2698 = vpop.f32.mrb[0].mxu0
  %v2699 = vadd.f32 0.0, %v2698
  %2700 = vmatprep.mubr.bf16.mxu0 %v2284
  %2701 = vmatmul.mubr.bf16.gmra.mrb[0].mxu0 %v2283
  %v2702 = vpop.f32.mrb[0].mxu0
  %v2703 = vadd.f32 0.0, %v2702
  %v2704 = vpop.f32.mrb[0].mxu0
  %v2705 = vadd.f32 0.0, %v2704
  %v2706 = vpop.f32.mrb[0].mxu0
  %v2707 = vadd.f32 0.0, %v2706
  %v2708 = vpop.f32.mrb[0].mxu0
  %v2709 = vadd.f32 0.0, %v2708
  %2710 = vmatprep.mubr.bf16.mxu0 %v2287
  %2711 = vmatmul.mubr.bf16.gmra.mrb[0].mxu0 %v2286
  %v2712 = vpop.f32.mrb[0].mxu0
  %v2713 = vadd.f32 0.0, %v2712
  %v2714 = vpop.f32.mrb[0].mxu0
  %v2715 = vadd.f32 0.0, %v2714
  %v2716 = vpop.f32.mrb[0].mxu0
  %v2717 = vadd.f32 0.0, %v2716
  %v2718 = vpop.f32.mrb[0].mxu0
  %v2719 = vadd.f32 0.0, %v2718
  %2720 = vmatprep.mubr.bf16.mxu0 %v2290
  %2721 = vmatmul.mubr.bf16.gmra.mrb[0].mxu0 %v2289
  %v2722 = vpop.f32.mrb[0].mxu0
  %v2723 = vadd.f32 0.0, %v2722
  %v2724 = vpop.f32.mrb[0].mxu0
  %v2725 = vadd.f32 0.0, %v2724
  %v2726 = vpop.f32.mrb[0].mxu0
  %v2727 = vadd.f32 0.0, %v2726
  %v2728 = vpop.f32.mrb[0].mxu0
  %v2729 = vadd.f32 0.0, %v2728
  %2730 = vmatprep.mubr.bf16.mxu0 %v2293
  %2731 = vmatmul.mubr.bf16.gmra.mrb[0].mxu0 %v2292
  %v2732 = vpop.f32.mrb[0].mxu0
  %v2733 = vadd.f32 0.0, %v2732
  %v2734 = vpop.f32.mrb[0].mxu0
  %v2735 = vadd.f32 0.0, %v2734
  %v2736 = vpop.f32.mrb[0].mxu0
  %v2737 = vadd.f32 0.0, %v2736
  %v2738 = vpop.f32.mrb[0].mxu0
  %v2739 = vadd.f32 0.0, %v2738
  %2740 = vmatprep.mubr.bf16.mxu0 %v2296
  %2741 = vmatmul.mubr.bf16.gmra.mrb[0].mxu0 %v2295
  %v2742 = vpop.f32.mrb[0].mxu0
  %v2743 = vadd.f32 0.0, %v2742
  %v2744 = vpop.f32.mrb[0].mxu0
  %v2745 = vadd.f32 0.0, %v2744
  %v2746 = vpop.f32.mrb[0].mxu0
  %v2747 = vadd.f32 0.0, %v2746
  %v2748 = vpop.f32.mrb[0].mxu0
  %v2749 = vadd.f32 0.0, %v2748
  %2750 = vmatprep.mubr.bf16.mxu0 %v2299
  %2751 = vmatmul.mubr.bf16.gmra.mrb[0].mxu0 %v2298
  %v2752 = vpop.f32.mrb[0].mxu0
  %v2753 = vadd.f32 0.0, %v2752
  %v2754 = vpop.f32.mrb[0].mxu0
  %v2755 = vadd.f32 0.0, %v2754
  %v2756 = vpop.f32.mrb[0].mxu0
  %v2757 = vadd.f32 0.0, %v2756
  %v2758 = vpop.f32.mrb[0].mxu0
  %v2759 = vadd.f32 0.0, %v2758
  %2760 = vmatprep.mubr.bf16.mxu0 %v2302
  %2761 = vmatmul.mubr.bf16.gmra.mrb[0].mxu0 %v2301
  %v2762 = vpop.f32.mrb[0].mxu0
  %v2763 = vadd.f32 0.0, %v2762
  %v2764 = vpop.f32.mrb[0].mxu0
  %v2765 = vadd.f32 0.0, %v2764
  %v2766 = vpop.f32.mrb[0].mxu0
  %v2767 = vadd.f32 0.0, %v2766
  %v2768 = vpop.f32.mrb[0].mxu0
  %v2769 = vadd.f32 0.0, %v2768
  %2770 = vmatprep.mubr.bf16.mxu0 %v2305
  %2771 = vmatmul.mubr.bf16.gmra.mrb[0].mxu0 %v2304
  %v2772 = vpop.f32.mrb[0].mxu0
  %v2773 = vadd.f32 0.0, %v2772
  %v2774 = vpop.f32.mrb[0].mxu0
  %v2775 = vadd.f32 0.0, %v2774
  %v2776 = vpop.f32.mrb[0].mxu0
  %v2777 = vadd.f32 0.0, %v2776
  %v2778 = vpop.f32.mrb[0].mxu0
  %v2779 = vadd.f32 0.0, %v2778
  %2780 = vmatprep.mubr.bf16.mxu0 %v2308
  %2781 = vmatmul.mubr.bf16.gmra.mrb[0].mxu0 %v2307
  %v2782 = vpop.f32.mrb[0].mxu0
  %v2783 = vadd.f32 0.0, %v2782
  %v2784 = vpop.f32.mrb[0].mxu0
  %v2785 = vadd.f32 0.0, %v2784
  %v2786 = vpop.f32.mrb[0].mxu0
  %v2787 = vadd.f32 0.0, %v2786
  %v2788 = vpop.f32.mrb[0].mxu0
  %v2789 = vadd.f32 0.0, %v2788
  %2790 = vdwg.mxu0
  %2791 = vmatprep.subr.bf16.mxu0 %v2535
  %2792 = vmatpush1.bf16.msra.mxu0 %v2534
  %2793 = vmatprep.subr.bf16.mxu0 %v2537
  %2794 = vmatpush1.bf16.msra.mxu0 %v2536
  %2795 = vmatprep.subr.bf16.mxu0 %v2539
  %2796 = vmatpush1.bf16.msra.mxu0 %v2538
  %2797 = vmatprep.subr.bf16.mxu0 %v2541
  %2798 = vmatpush1.bf16.msra.mxu0 %v2540
  %2799 = vmatprep.subr.bf16.mxu0 %v2543
  %2800 = vmatpush1.bf16.msra.mxu0 %v2542
  %2801 = vmatprep.subr.bf16.mxu0 %v2545
  %2802 = vmatpush1.bf16.msra.mxu0 %v2544
  %2803 = vmatprep.subr.bf16.mxu0 %v2547
  %2804 = vmatpush1.bf16.msra.mxu0 %v2546
  %2805 = vmatprep.subr.bf16.mxu0 %v2549
  %2806 = vmatpush1.bf16.msra.mxu0 %v2548
  %2807 = vmatprep.subr.bf16.mxu0 0
  %2808 = vmatpush1.bf16.msra.mxu0 0
  %2809 = vmatprep.subr.bf16.mxu0 0
  %2810 = vmatpush1.bf16.msra.mxu0 0
  %2811 = vmatprep.subr.bf16.mxu0 0
  %2812 = vmatpush1.bf16.msra.mxu0 0
  %2813 = vmatprep.subr.bf16.mxu0 0
  %2814 = vmatpush1.bf16.msra.mxu0 0
  %2815 = vmatprep.subr.bf16.mxu0 0
  %2816 = vmatpush1.bf16.msra.mxu0 0
  %2817 = vmatprep.subr.bf16.mxu0 0
  %2818 = vmatpush1.bf16.msra.mxu0 0
  %2819 = vmatprep.subr.bf16.mxu0 0
  %2820 = vmatpush1.bf16.msra.mxu0 0
  %2821 = vmatprep.subr.bf16.mxu0 0
  %2822 = vmatpush1.bf16.msra.mxu0 0
  %2823 = vmatprep.mubr.bf16.mxu0 0
  %2824 = vmatmul.mubr.bf16.gmra.mrb[0].mxu0 %v2264
  %v2825 = vpop.f32.mrb[0].mxu0
  %v2826 = vadd.f32 %v2633, %v2825
  %v2827 = vpop.f32.mrb[0].mxu0
  %v2828 = vadd.f32 %v2635, %v2827
  %v2829 = vpop.f32.mrb[0].mxu0
  %v2830 = vadd.f32 %v2637, %v2829
  %v2831 = vpop.f32.mrb[0].mxu0
  %v2832 = vadd.f32 %v2639, %v2831
  %2833 = vmatprep.mubr.bf16.mxu0 0
  %2834 = vmatmul.mubr.bf16.gmra.mrb[0].mxu0 %v2267
  %v2835 = vpop.f32.mrb[0].mxu0
  %v2836 = vadd.f32 %v2643, %v2835
  %v2837 = vpop.f32.mrb[0].mxu0
  %v2838 = vadd.f32 %v2645, %v2837
  %v2839 = vpop.f32.mrb[0].mxu0
  %v2840 = vadd.f32 %v2647, %v2839
  %v2841 = vpop.f32.mrb[0].mxu0
  %v2842 = vadd.f32 %v2649, %v2841
  %2843 = vmatprep.mubr.bf16.mxu0 0
  %2844 = vmatmul.mubr.bf16.gmra.mrb[0].mxu0 %v2270
  %v2845 = vpop.f32.mrb[0].mxu0
  %v2846 = vadd.f32 %v2653, %v2845
  %v2847 = vpop.f32.mrb[0].mxu0
  %v2848 = vadd.f32 %v2655, %v2847
  %v2849 = vpop.f32.mrb[0].mxu0
  %v2850 = vadd.f32 %v2657, %v2849
  %v2851 = vpop.f32.mrb[0].mxu0
  %v2852 = vadd.f32 %v2659, %v2851
  %2853 = vmatprep.mubr.bf16.mxu0 0
  %2854 = vmatmul.mubr.bf16.gmra.mrb[0].mxu0 %v2273
  %v2855 = vpop.f32.mrb[0].mxu0
  %v2856 = vadd.f32 %v2663, %v2855
  %v2857 = vpop.f32.mrb[0].mxu0
  %v2858 = vadd.f32 %v2665, %v2857
  %v2859 = vpop.f32.mrb[0].mxu0
  %v2860 = vadd.f32 %v2667, %v2859
  %v2861 = vpop.f32.mrb[0].mxu0
  %v2862 = vadd.f32 %v2669, %v2861
  %2863 = vmatprep.mubr.bf16.mxu0 0
  %2864 = vmatmul.mubr.bf16.gmra.mrb[0].mxu0 %v2276
  %v2865 = vpop.f32.mrb[0].mxu0
  %v2866 = vadd.f32 %v2673, %v2865
  %v2867 = vpop.f32.mrb[0].mxu0
  %v2868 = vadd.f32 %v2675, %v2867
  %v2869 = vpop.f32.mrb[0].mxu0
  %v2870 = vadd.f32 %v2677, %v2869
  %v2871 = vpop.f32.mrb[0].mxu0
  %v2872 = vadd.f32 %v2679, %v2871
  %2873 = vmatprep.mubr.bf16.mxu0 0
  %2874 = vmatmul.mubr.bf16.gmra.mrb[0].mxu0 %v2279
  %v2875 = vpop.f32.mrb[0].mxu0
  %v2876 = vadd.f32 %v2683, %v2875
  %v2877 = vpop.f32.mrb[0].mxu0
  %v2878 = vadd.f32 %v2685, %v2877
  %v2879 = vpop.f32.mrb[0].mxu0
  %v2880 = vadd.f32 %v2687, %v2879
  %v2881 = vpop.f32.mrb[0].mxu0
  %v2882 = vadd.f32 %v2689, %v2881
  %2883 = vmatprep.mubr.bf16.mxu0 0
  %2884 = vmatmul.mubr.bf16.gmra.mrb[0].mxu0 %v2282
  %v2885 = vpop.f32.mrb[0].mxu0
  %v2886 = vadd.f32 %v2693, %v2885
  %v2887 = vpop.f32.mrb[0].mxu0
  %v2888 = vadd.f32 %v2695, %v2887
  %v2889 = vpop.f32.mrb[0].mxu0
  %v2890 = vadd.f32 %v2697, %v2889
  %v2891 = vpop.f32.mrb[0].mxu0
  %v2892 = vadd.f32 %v2699, %v2891
  %2893 = vmatprep.mubr.bf16.mxu0 0
  %2894 = vmatmul.mubr.bf16.gmra.mrb[0].mxu0 %v2285
  %v2895 = vpop.f32.mrb[0].mxu0
  %v2896 = vadd.f32 %v2703, %v2895
  %v2897 = vpop.f32.mrb[0].mxu0
  %v2898 = vadd.f32 %v2705, %v2897
  %v2899 = vpop.f32.mrb[0].mxu0
  %v2900 = vadd.f32 %v2707, %v2899
  %v2901 = vpop.f32.mrb[0].mxu0
  %v2902 = vadd.f32 %v2709, %v2901
  %2903 = vmatprep.mubr.bf16.mxu0 0
  %2904 = vmatmul.mubr.bf16.gmra.mrb[0].mxu0 %v2288
  %v2905 = vpop.f32.mrb[0].mxu0
  %v2906 = vadd.f32 %v2713, %v2905
  %v2907 = vpop.f32.mrb[0].mxu0
  %v2908 = vadd.f32 %v2715, %v2907
  %v2909 = vpop.f32.mrb[0].mxu0
  %v2910 = vadd.f32 %v2717, %v2909
  %v2911 = vpop.f32.mrb[0].mxu0
  %v2912 = vadd.f32 %v2719, %v2911
  %2913 = vmatprep.mubr.bf16.mxu0 0
  %2914 = vmatmul.mubr.bf16.gmra.mrb[0].mxu0 %v2291
  %v2915 = vpop.f32.mrb[0].mxu0
  %v2916 = vadd.f32 %v2723, %v2915
  %v2917 = vpop.f32.mrb[0].mxu0
  %v2918 = vadd.f32 %v2725, %v2917
  %v2919 = vpop.f32.mrb[0].mxu0
  %v2920 = vadd.f32 %v2727, %v2919
  %v2921 = vpop.f32.mrb[0].mxu0
  %v2922 = vadd.f32 %v2729, %v2921
  %2923 = vmatprep.mubr.bf16.mxu0 0
  %2924 = vmatmul.mubr.bf16.gmra.mrb[0].mxu0 %v2294
  %v2925 = vpop.f32.mrb[0].mxu0
  %v2926 = vadd.f32 %v2733, %v2925
  %v2927 = vpop.f32.mrb[0].mxu0
  %v2928 = vadd.f32 %v2735, %v2927
  %v2929 = vpop.f32.mrb[0].mxu0
  %v2930 = vadd.f32 %v2737, %v2929
  %v2931 = vpop.f32.mrb[0].mxu0
  %v2932 = vadd.f32 %v2739, %v2931
  %2933 = vmatprep.mubr.bf16.mxu0 0
  %2934 = vmatmul.mubr.bf16.gmra.mrb[0].mxu0 %v2297
  %v2935 = vpop.f32.mrb[0].mxu0
  %v2936 = vadd.f32 %v2743, %v2935
  %v2937 = vpop.f32.mrb[0].mxu0
  %v2938 = vadd.f32 %v2745, %v2937
  %v2939 = vpop.f32.mrb[0].mxu0
  %v2940 = vadd.f32 %v2747, %v2939
  %v2941 = vpop.f32.mrb[0].mxu0
  %v2942 = vadd.f32 %v2749, %v2941
  %2943 = vmatprep.mubr.bf16.mxu0 0
  %2944 = vmatmul.mubr.bf16.gmra.mrb[0].mxu0 %v2300
  %v2945 = vpop.f32.mrb[0].mxu0
  %v2946 = vadd.f32 %v2753, %v2945
  %v2947 = vpop.f32.mrb[0].mxu0
  %v2948 = vadd.f32 %v2755, %v2947
  %v2949 = vpop.f32.mrb[0].mxu0
  %v2950 = vadd.f32 %v2757, %v2949
  %v2951 = vpop.f32.mrb[0].mxu0
  %v2952 = vadd.f32 %v2759, %v2951
  %2953 = vmatprep.mubr.bf16.mxu0 0
  %2954 = vmatmul.mubr.bf16.gmra.mrb[0].mxu0 %v2303
  %v2955 = vpop.f32.mrb[0].mxu0
  %v2956 = vadd.f32 %v2763, %v2955
  %v2957 = vpop.f32.mrb[0].mxu0
  %v2958 = vadd.f32 %v2765, %v2957
  %v2959 = vpop.f32.mrb[0].mxu0
  %v2960 = vadd.f32 %v2767, %v2959
  %v2961 = vpop.f32.mrb[0].mxu0
  %v2962 = vadd.f32 %v2769, %v2961
  %2963 = vmatprep.mubr.bf16.mxu0 0
  %2964 = vmatmul.mubr.bf16.gmra.mrb[0].mxu0 %v2306
  %v2965 = vpop.f32.mrb[0].mxu0
  %v2966 = vadd.f32 %v2773, %v2965
  %v2967 = vpop.f32.mrb[0].mxu0
  %v2968 = vadd.f32 %v2775, %v2967
  %v2969 = vpop.f32.mrb[0].mxu0
  %v2970 = vadd.f32 %v2777, %v2969
  %v2971 = vpop.f32.mrb[0].mxu0
  %v2972 = vadd.f32 %v2779, %v2971
  %2973 = vmatprep.mubr.bf16.mxu0 0
  %2974 = vmatmul.mubr.bf16.gmra.mrb[0].mxu0 %v2309
  %v2975 = vpop.f32.mrb[0].mxu0
  %v2976 = vadd.f32 %v2783, %v2975
  %v2977 = vpop.f32.mrb[0].mxu0
  %v2978 = vadd.f32 %v2785, %v2977
  %v2979 = vpop.f32.mrb[0].mxu0
  %v2980 = vadd.f32 %v2787, %v2979
  %v2981 = vpop.f32.mrb[0].mxu0
  %v2982 = vadd.f32 %v2789, %v2981
  %2983 = vdwg.mxu0
  %v2984 = vadd.f32 %v2198, %v2826
  %v2985 = vadd.f32 %v2199, %v2828
  %v2986 = vadd.f32 %v2200, %v2830
  %v2987 = vadd.f32 %v2201, %v2832
  %v2988 = vadd.f32 %v2202, %v2836
  %v2989 = vadd.f32 %v2203, %v2838
  %v2990 = vadd.f32 %v2204, %v2840
  %v2991 = vadd.f32 %v2205, %v2842
  %v2992 = vadd.f32 %v2206, %v2846
  %v2993 = vadd.f32 %v2207, %v2848
  %v2994 = vadd.f32 %v2208, %v2850
  %v2995 = vadd.f32 %v2209, %v2852
  %v2996 = vadd.f32 %v2210, %v2856
  %v2997 = vadd.f32 %v2211, %v2858
  %v2998 = vadd.f32 %v2212, %v2860
  %v2999 = vadd.f32 %v2213, %v2862
  %v3000 = vadd.f32 %v2214, %v2866
  %v3001 = vadd.f32 %v2215, %v2868
  %v3002 = vadd.f32 %v2216, %v2870
  %v3003 = vadd.f32 %v2217, %v2872
  %v3004 = vadd.f32 %v2218, %v2876
  %v3005 = vadd.f32 %v2219, %v2878
  %v3006 = vadd.f32 %v2220, %v2880
  %v3007 = vadd.f32 %v2221, %v2882
  %v3008 = vadd.f32 %v2222, %v2886
  %v3009 = vadd.f32 %v2223, %v2888
  %v3010 = vadd.f32 %v2224, %v2890
  %v3011 = vadd.f32 %v2225, %v2892
  %v3012 = vadd.f32 %v2226, %v2896
  %v3013 = vadd.f32 %v2227, %v2898
  %v3014 = vadd.f32 %v2228, %v2900
  %v3015 = vadd.f32 %v2229, %v2902
  %v3016 = vadd.f32 %v2230, %v2906
  %v3017 = vadd.f32 %v2231, %v2908
  %v3018 = vadd.f32 %v2232, %v2910
  %v3019 = vadd.f32 %v2233, %v2912
  %v3020 = vadd.f32 %v2234, %v2916
  %v3021 = vadd.f32 %v2235, %v2918
  %v3022 = vadd.f32 %v2236, %v2920
  %v3023 = vadd.f32 %v2237, %v2922
  %v3024 = vadd.f32 %v2238, %v2926
  %v3025 = vadd.f32 %v2239, %v2928
  %v3026 = vadd.f32 %v2240, %v2930
  %v3027 = vadd.f32 %v2241, %v2932
  %v3028 = vadd.f32 %v2242, %v2936
  %v3029 = vadd.f32 %v2243, %v2938
  %v3030 = vadd.f32 %v2244, %v2940
  %v3031 = vadd.f32 %v2245, %v2942
  %v3032 = vadd.f32 %v2246, %v2946
  %v3033 = vadd.f32 %v2247, %v2948
  %v3034 = vadd.f32 %v2248, %v2950
  %v3035 = vadd.f32 %v2249, %v2952
  %v3036 = vadd.f32 %v2250, %v2956
  %v3037 = vadd.f32 %v2251, %v2958
  %v3038 = vadd.f32 %v2252, %v2960
  %v3039 = vadd.f32 %v2253, %v2962
  %v3040 = vadd.f32 %v2254, %v2966
  %v3041 = vadd.f32 %v2255, %v2968
  %v3042 = vadd.f32 %v2256, %v2970
  %v3043 = vadd.f32 %v2257, %v2972
  %v3044 = vadd.f32 %v2258, %v2976
  %v3045 = vadd.f32 %v2259, %v2978
  %v3046 = vadd.f32 %v2260, %v2980
  %v3047 = vadd.f32 %v2261, %v2982
  %3048 = vst [vmem:[#allocation2] sm:$0xff] %v2984
  %3049 = vst [vmem:[#allocation2 + $0x8] sm:$0xff] %v2985
  %3050 = vst [vmem:[#allocation2 + $0x10] sm:$0xff] %v2986
  %3051 = vst [vmem:[#allocation2 + $0x18] sm:$0xff] %v2987
  %3052 = vst [vmem:[#allocation2 + $0x20] sm:$0xff] %v2988
  %3053 = vst [vmem:[#allocation2 + $0x28] sm:$0xff] %v2989
  %3054 = vst [vmem:[#allocation2 + $0x30] sm:$0xff] %v2990
  %3055 = vst [vmem:[#allocation2 + $0x38] sm:$0xff] %v2991
  %3056 = vst [vmem:[#allocation2 + $0x40] sm:$0xff] %v2992
  %3057 = vst [vmem:[#allocation2 + $0x48] sm:$0xff] %v2993
  %3058 = vst [vmem:[#allocation2 + $0x50] sm:$0xff] %v2994
  %3059 = vst [vmem:[#allocation2 + $0x58] sm:$0xff] %v2995
  %3060 = vst [vmem:[#allocation2 + $0x60] sm:$0xff] %v2996
  %3061 = vst [vmem:[#allocation2 + $0x68] sm:$0xff] %v2997
  %3062 = vst [vmem:[#allocation2 + $0x70] sm:$0xff] %v2998
  %3063 = vst [vmem:[#allocation2 + $0x78] sm:$0xff] %v2999
  %3064 = vst [vmem:[#allocation2 + $0x80] sm:$0xff] %v3000
  %3065 = vst [vmem:[#allocation2 + $0x88] sm:$0xff] %v3001
  %3066 = vst [vmem:[#allocation2 + $0x90] sm:$0xff] %v3002
  %3067 = vst [vmem:[#allocation2 + $0x98] sm:$0xff] %v3003
  %3068 = vst [vmem:[#allocation2 + $0xa0] sm:$0xff] %v3004
  %3069 = vst [vmem:[#allocation2 + $0xa8] sm:$0xff] %v3005
  %3070 = vst [vmem:[#allocation2 + $0xb0] sm:$0xff] %v3006
  %3071 = vst [vmem:[#allocation2 + $0xb8] sm:$0xff] %v3007
  %3072 = vst [vmem:[#allocation2 + $0xc0] sm:$0xff] %v3008
  %3073 = vst [vmem:[#allocation2 + $0xc8] sm:$0xff] %v3009
  %3074 = vst [vmem:[#allocation2 + $0xd0] sm:$0xff] %v3010
  %3075 = vst [vmem:[#allocation2 + $0xd8] sm:$0xff] %v3011
  %3076 = vst [vmem:[#allocation2 + $0xe0] sm:$0xff] %v3012
  %3077 = vst [vmem:[#allocation2 + $0xe8] sm:$0xff] %v3013
  %3078 = vst [vmem:[#allocation2 + $0xf0] sm:$0xff] %v3014
  %3079 = vst [vmem:[#allocation2 + $0xf8] sm:$0xff] %v3015
  %3080 = vst [vmem:[#allocation2 + $0x100] sm:$0xff] %v3016
  %3081 = vst [vmem:[#allocation2 + $0x108] sm:$0xff] %v3017
  %3082 = vst [vmem:[#allocation2 + $0x110] sm:$0xff] %v3018
  %3083 = vst [vmem:[#allocation2 + $0x118] sm:$0xff] %v3019
  %3084 = vst [vmem:[#allocation2 + $0x120] sm:$0xff] %v3020
  %3085 = vst [vmem:[#allocation2 + $0x128] sm:$0xff] %v3021
  %3086 = vst [vmem:[#allocation2 + $0x130] sm:$0xff] %v3022
  %3087 = vst [vmem:[#allocation2 + $0x138] sm:$0xff] %v3023
  %3088 = vst [vmem:[#allocation2 + $0x140] sm:$0xff] %v3024
  %3089 = vst [vmem:[#allocation2 + $0x148] sm:$0xff] %v3025
  %3090 = vst [vmem:[#allocation2 + $0x150] sm:$0xff] %v3026
  %3091 = vst [vmem:[#allocation2 + $0x158] sm:$0xff] %v3027
  %3092 = vst [vmem:[#allocation2 + $0x160] sm:$0xff] %v3028
  %3093 = vst [vmem:[#allocation2 + $0x168] sm:$0xff] %v3029
  %3094 = vst [vmem:[#allocation2 + $0x170] sm:$0xff] %v3030
  %3095 = vst [vmem:[#allocation2 + $0x178] sm:$0xff] %v3031
  %3096 = vst [vmem:[#allocation2 + $0x180] sm:$0xff] %v3032
  %3097 = vst [vmem:[#allocation2 + $0x188] sm:$0xff] %v3033
  %3098 = vst [vmem:[#allocation2 + $0x190] sm:$0xff] %v3034
  %3099 = vst [vmem:[#allocation2 + $0x198] sm:$0xff] %v3035
  %3100 = vst [vmem:[#allocation2 + $0x1a0] sm:$0xff] %v3036
  %3101 = vst [vmem:[#allocation2 + $0x1a8] sm:$0xff] %v3037
  %3102 = vst [vmem:[#allocation2 + $0x1b0] sm:$0xff] %v3038
  %3103 = vst [vmem:[#allocation2 + $0x1b8] sm:$0xff] %v3039
  %3104 = vst [vmem:[#allocation2 + $0x1c0] sm:$0xff] %v3040
  %3105 = vst [vmem:[#allocation2 + $0x1c8] sm:$0xff] %v3041
  %3106 = vst [vmem:[#allocation2 + $0x1d0] sm:$0xff] %v3042
  %3107 = vst [vmem:[#allocation2 + $0x1d8] sm:$0xff] %v3043
  %3108 = vst [vmem:[#allocation2 + $0x1e0] sm:$0xff] %v3044
  %3109 = vst [vmem:[#allocation2 + $0x1e8] sm:$0xff] %v3045
  %3110 = vst [vmem:[#allocation2 + $0x1f0] sm:$0xff] %v3046
  %3111 = vst [vmem:[#allocation2 + $0x1f8] sm:$0xff] %v3047
  // Predicated region
  $region18: #{glm_mlp.1} parent=0 // pred_check
    %p3112 = pneg %p15
  $region19: #{glm_mlp.1} parent=0 // pred_check_branch
    %3114 = sbr.rel (%p3112) target = $region21
  $region20: #{glm_mlp.1} parent=0 // pred_region
    %v3115 = vld [vmem:[#allocation2] sm:$0xff]
    %v3116 = vld [vmem:[#allocation2 + $0x8] sm:$0xff]
    %v3117 = vld [vmem:[#allocation2 + $0x10] sm:$0xff]
    %v3118 = vld [vmem:[#allocation2 + $0x18] sm:$0xff]
    %v3119 = vld [vmem:[#allocation2 + $0x20] sm:$0xff]
    %v3120 = vld [vmem:[#allocation2 + $0x28] sm:$0xff]
    %v3121 = vld [vmem:[#allocation2 + $0x30] sm:$0xff]
    %v3122 = vld [vmem:[#allocation2 + $0x38] sm:$0xff]
    %v3123 = vld [vmem:[#allocation2 + $0x40] sm:$0xff]
    %v3124 = vld [vmem:[#allocation2 + $0x48] sm:$0xff]
    %v3125 = vld [vmem:[#allocation2 + $0x50] sm:$0xff]
    %v3126 = vld [vmem:[#allocation2 + $0x58] sm:$0xff]
    %v3127 = vld [vmem:[#allocation2 + $0x60] sm:$0xff]
    %v3128 = vld [vmem:[#allocation2 + $0x68] sm:$0xff]
    %v3129 = vld [vmem:[#allocation2 + $0x70] sm:$0xff]
    %v3130 = vld [vmem:[#allocation2 + $0x78] sm:$0xff]
    %v3131 = vld [vmem:[#allocation2 + $0x80] sm:$0xff]
    %v3132 = vld [vmem:[#allocation2 + $0x88] sm:$0xff]
    %v3133 = vld [vmem:[#allocation2 + $0x90] sm:$0xff]
    %v3134 = vld [vmem:[#allocation2 + $0x98] sm:$0xff]
    %v3135 = vld [vmem:[#allocation2 + $0xa0] sm:$0xff]
    %v3136 = vld [vmem:[#allocation2 + $0xa8] sm:$0xff]
    %v3137 = vld [vmem:[#allocation2 + $0xb0] sm:$0xff]
    %v3138 = vld [vmem:[#allocation2 + $0xb8] sm:$0xff]
    %v3139 = vld [vmem:[#allocation2 + $0xc0] sm:$0xff]
    %v3140 = vld [vmem:[#allocation2 + $0xc8] sm:$0xff]
    %v3141 = vld [vmem:[#allocation2 + $0xd0] sm:$0xff]
    %v3142 = vld [vmem:[#allocation2 + $0xd8] sm:$0xff]
    %v3143 = vld [vmem:[#allocation2 + $0xe0] sm:$0xff]
    %v3144 = vld [vmem:[#allocation2 + $0xe8] sm:$0xff]
    %v3145 = vld [vmem:[#allocation2 + $0xf0] sm:$0xff]
    %v3146 = vld [vmem:[#allocation2 + $0xf8] sm:$0xff]
    %v3147 = vld [vmem:[#allocation2 + $0x100] sm:$0xff]
    %v3148 = vld [vmem:[#allocation2 + $0x108] sm:$0xff]
    %v3149 = vld [vmem:[#allocation2 + $0x110] sm:$0xff]
    %v3150 = vld [vmem:[#allocation2 + $0x118] sm:$0xff]
    %v3151 = vld [vmem:[#allocation2 + $0x120] sm:$0xff]
    %v3152 = vld [vmem:[#allocation2 + $0x128] sm:$0xff]
    %v3153 = vld [vmem:[#allocation2 + $0x130] sm:$0xff]
    %v3154 = vld [vmem:[#allocation2 + $0x138] sm:$0xff]
    %v3155 = vld [vmem:[#allocation2 + $0x140] sm:$0xff]
    %v3156 = vld [vmem:[#allocation2 + $0x148] sm:$0xff]
    %v3157 = vld [vmem:[#allocation2 + $0x150] sm:$0xff]
    %v3158 = vld [vmem:[#allocation2 + $0x158] sm:$0xff]
    %v3159 = vld [vmem:[#allocation2 + $0x160] sm:$0xff]
    %v3160 = vld [vmem:[#allocation2 + $0x168] sm:$0xff]
    %v3161 = vld [vmem:[#allocation2 + $0x170] sm:$0xff]
    %v3162 = vld [vmem:[#allocation2 + $0x178] sm:$0xff]
    %v3163 = vld [vmem:[#allocation2 + $0x180] sm:$0xff]
    %v3164 = vld [vmem:[#allocation2 + $0x188] sm:$0xff]
    %v3165 = vld [vmem:[#allocation2 + $0x190] sm:$0xff]
    %v3166 = vld [vmem:[#allocation2 + $0x198] sm:$0xff]
    %v3167 = vld [vmem:[#allocation2 + $0x1a0] sm:$0xff]
    %v3168 = vld [vmem:[#allocation2 + $0x1a8] sm:$0xff]
    %v3169 = vld [vmem:[#allocation2 + $0x1b0] sm:$0xff]
    %v3170 = vld [vmem:[#allocation2 + $0x1b8] sm:$0xff]
    %v3171 = vld [vmem:[#allocation2 + $0x1c0] sm:$0xff]
    %v3172 = vld [vmem:[#allocation2 + $0x1c8] sm:$0xff]
    %v3173 = vld [vmem:[#allocation2 + $0x1d0] sm:$0xff]
    %v3174 = vld [vmem:[#allocation2 + $0x1d8] sm:$0xff]
    %v3175 = vld [vmem:[#allocation2 + $0x1e0] sm:$0xff]
    %v3176 = vld [vmem:[#allocation2 + $0x1e8] sm:$0xff]
    %v3177 = vld [vmem:[#allocation2 + $0x1f0] sm:$0xff]
    %v3178 = vld [vmem:[#allocation2 + $0x1f8] sm:$0xff]
    %v3179 = vpack.c.bf16 %v3117, %v3115
    %v3180 = vpack.c.bf16 %v3118, %v3116
    %v3181 = vpack.c.bf16 %v3121, %v3119
    %v3182 = vpack.c.bf16 %v3122, %v3120
    %v3183 = vpack.c.bf16 %v3125, %v3123
    %v3184 = vpack.c.bf16 %v3126, %v3124
    %v3185 = vpack.c.bf16 %v3129, %v3127
    %v3186 = vpack.c.bf16 %v3130, %v3128
    %v3187 = vpack.c.bf16 %v3133, %v3131
    %v3188 = vpack.c.bf16 %v3134, %v3132
    %v3189 = vpack.c.bf16 %v3137, %v3135
    %v3190 = vpack.c.bf16 %v3138, %v3136
    %v3191 = vpack.c.bf16 %v3141, %v3139
    %v3192 = vpack.c.bf16 %v3142, %v3140
    %v3193 = vpack.c.bf16 %v3145, %v3143
    %v3194 = vpack.c.bf16 %v3146, %v3144
    %v3195 = vpack.c.bf16 %v3149, %v3147
    %v3196 = vpack.c.bf16 %v3150, %v3148
    %v3197 = vpack.c.bf16 %v3153, %v3151
    %v3198 = vpack.c.bf16 %v3154, %v3152
    %v3199 = vpack.c.bf16 %v3157, %v3155
    %v3200 = vpack.c.bf16 %v3158, %v3156
    %v3201 = vpack.c.bf16 %v3161, %v3159
    %v3202 = vpack.c.bf16 %v3162, %v3160
    %v3203 = vpack.c.bf16 %v3165, %v3163
    %v3204 = vpack.c.bf16 %v3166, %v3164
    %v3205 = vpack.c.bf16 %v3169, %v3167
    %v3206 = vpack.c.bf16 %v3170, %v3168
    %v3207 = vpack.c.bf16 %v3173, %v3171
    %v3208 = vpack.c.bf16 %v3174, %v3172
    %v3209 = vpack.c.bf16 %v3177, %v3175
    %v3210 = vpack.c.bf16 %v3178, %v3176
    %v3243 = vunpack.c.l.b16 %v3179
    %v3244 = vunpack.c.l.b16 %v3180
    %v3245 = vunpack.c.h.b16 %v3179
    %v3246 = vunpack.c.h.b16 %v3180
    %v3247 = vunpack.c.l.b16 %v3181
    %v3248 = vunpack.c.l.b16 %v3182
    %v3249 = vunpack.c.h.b16 %v3181
    %v3250 = vunpack.c.h.b16 %v3182
    %v3251 = vunpack.c.l.b16 %v3183
    %v3252 = vunpack.c.l.b16 %v3184
    %v3253 = vunpack.c.h.b16 %v3183
    %v3254 = vunpack.c.h.b16 %v3184
    %v3255 = vunpack.c.l.b16 %v3185
    %v3256 = vunpack.c.l.b16 %v3186
    %v3257 = vunpack.c.h.b16 %v3185
    %v3258 = vunpack.c.h.b16 %v3186
    %v3259 = vunpack.c.l.b16 %v3187
    %v3260 = vunpack.c.l.b16 %v3188
    %v3261 = vunpack.c.h.b16 %v3187
    %v3262 = vunpack.c.h.b16 %v3188
    %v3263 = vunpack.c.l.b16 %v3189
    %v3264 = vunpack.c.l.b16 %v3190
    %v3265 = vunpack.c.h.b16 %v3189
    %v3266 = vunpack.c.h.b16 %v3190
    %v3267 = vunpack.c.l.b16 %v3191
    %v3268 = vunpack.c.l.b16 %v3192
    %v3269 = vunpack.c.h.b16 %v3191
    %v3270 = vunpack.c.h.b16 %v3192
    %v3271 = vunpack.c.l.b16 %v3193
    %v3272 = vunpack.c.l.b16 %v3194
    %v3273 = vunpack.c.h.b16 %v3193
    %v3274 = vunpack.c.h.b16 %v3194
    %v3275 = vunpack.c.l.b16 %v3195
    %v3276 = vunpack.c.l.b16 %v3196
    %v3277 = vunpack.c.h.b16 %v3195
    %v3278 = vunpack.c.h.b16 %v3196
    %v3279 = vunpack.c.l.b16 %v3197
    %v3280 = vunpack.c.l.b16 %v3198
    %v3281 = vunpack.c.h.b16 %v3197
    %v3282 = vunpack.c.h.b16 %v3198
    %v3283 = vunpack.c.l.b16 %v3199
    %v3284 = vunpack.c.l.b16 %v3200
    %v3285 = vunpack.c.h.b16 %v3199
    %v3286 = vunpack.c.h.b16 %v3200
    %v3287 = vunpack.c.l.b16 %v3201
    %v3288 = vunpack.c.l.b16 %v3202
    %v3289 = vunpack.c.h.b16 %v3201
    %v3290 = vunpack.c.h.b16 %v3202
    %v3291 = vunpack.c.l.b16 %v3203
    %v3292 = vunpack.c.l.b16 %v3204
    %v3293 = vunpack.c.h.b16 %v3203
    %v3294 = vunpack.c.h.b16 %v3204
    %v3295 = vunpack.c.l.b16 %v3205
    %v3296 = vunpack.c.l.b16 %v3206
    %v3297 = vunpack.c.h.b16 %v3205
    %v3298 = vunpack.c.h.b16 %v3206
    %v3299 = vunpack.c.l.b16 %v3207
    %v3300 = vunpack.c.l.b16 %v3208
    %v3301 = vunpack.c.h.b16 %v3207
    %v3302 = vunpack.c.h.b16 %v3208
    %v3303 = vunpack.c.l.b16 %v3209
    %v3304 = vunpack.c.l.b16 %v3210
    %v3305 = vunpack.c.h.b16 %v3209
    %v3306 = vunpack.c.h.b16 %v3210
    %v3307 = vpack.c.b16 %v3244, %v3243
    %v3308 = vpack.c.b16 %v3246, %v3245
    %v3309 = vpack.c.b16 %v3248, %v3247
    %v3310 = vpack.c.b16 %v3250, %v3249
    %v3311 = vpack.c.b16 %v3252, %v3251
    %v3312 = vpack.c.b16 %v3254, %v3253
    %v3313 = vpack.c.b16 %v3256, %v3255
    %v3314 = vpack.c.b16 %v3258, %v3257
    %v3315 = vpack.c.b16 %v3260, %v3259
    %v3316 = vpack.c.b16 %v3262, %v3261
    %v3317 = vpack.c.b16 %v3264, %v3263
    %v3318 = vpack.c.b16 %v3266, %v3265
    %v3319 = vpack.c.b16 %v3268, %v3267
    %v3320 = vpack.c.b16 %v3270, %v3269
    %v3321 = vpack.c.b16 %v3272, %v3271
    %v3322 = vpack.c.b16 %v3274, %v3273
    %v3323 = vpack.c.b16 %v3276, %v3275
    %v3324 = vpack.c.b16 %v3278, %v3277
    %v3325 = vpack.c.b16 %v3280, %v3279
    %v3326 = vpack.c.b16 %v3282, %v3281
    %v3327 = vpack.c.b16 %v3284, %v3283
    %v3328 = vpack.c.b16 %v3286, %v3285
    %v3329 = vpack.c.b16 %v3288, %v3287
    %v3330 = vpack.c.b16 %v3290, %v3289
    %v3331 = vpack.c.b16 %v3292, %v3291
    %v3332 = vpack.c.b16 %v3294, %v3293
    %v3333 = vpack.c.b16 %v3296, %v3295
    %v3334 = vpack.c.b16 %v3298, %v3297
    %v3335 = vpack.c.b16 %v3300, %v3299
    %v3336 = vpack.c.b16 %v3302, %v3301
    %v3337 = vpack.c.b16 %v3304, %v3303
    %v3338 = vpack.c.b16 %v3306, %v3305
    %3371 = vst [vmem:[%s3] sm:$0xff] %v3307
    %3372 = vst [vmem:[%s3 + $0x8] sm:$0xff] %v3308
    %3373 = vst [vmem:[%s3 + $0x10] sm:$0xff] %v3309
    %3374 = vst [vmem:[%s3 + $0x18] sm:$0xff] %v3310
    %3375 = vst [vmem:[%s3 + $0x20] sm:$0xff] %v3311
    %3376 = vst [vmem:[%s3 + $0x28] sm:$0xff] %v3312
    %3377 = vst [vmem:[%s3 + $0x30] sm:$0xff] %v3313
    %3378 = vst [vmem:[%s3 + $0x38] sm:$0xff] %v3314
    %3379 = vst [vmem:[%s3 + $0x40] sm:$0xff] %v3315
    %3380 = vst [vmem:[%s3 + $0x48] sm:$0xff] %v3316
    %3381 = vst [vmem:[%s3 + $0x50] sm:$0xff] %v3317
    %3382 = vst [vmem:[%s3 + $0x58] sm:$0xff] %v3318
    %3383 = vst [vmem:[%s3 + $0x60] sm:$0xff] %v3319
    %3384 = vst [vmem:[%s3 + $0x68] sm:$0xff] %v3320
    %3385 = vst [vmem:[%s3 + $0x70] sm:$0xff] %v3321
    %3386 = vst [vmem:[%s3 + $0x78] sm:$0xff] %v3322
    %3387 = vst [vmem:[%s3 + $0x80] sm:$0xff] %v3323
    %3388 = vst [vmem:[%s3 + $0x88] sm:$0xff] %v3324
    %3389 = vst [vmem:[%s3 + $0x90] sm:$0xff] %v3325
    %3390 = vst [vmem:[%s3 + $0x98] sm:$0xff] %v3326
    %3391 = vst [vmem:[%s3 + $0xa0] sm:$0xff] %v3327
    %3392 = vst [vmem:[%s3 + $0xa8] sm:$0xff] %v3328
    %3393 = vst [vmem:[%s3 + $0xb0] sm:$0xff] %v3329
    %3394 = vst [vmem:[%s3 + $0xb8] sm:$0xff] %v3330
    %3395 = vst [vmem:[%s3 + $0xc0] sm:$0xff] %v3331
    %3396 = vst [vmem:[%s3 + $0xc8] sm:$0xff] %v3332
    %3397 = vst [vmem:[%s3 + $0xd0] sm:$0xff] %v3333
    %3398 = vst [vmem:[%s3 + $0xd8] sm:$0xff] %v3334
    %3399 = vst [vmem:[%s3 + $0xe0] sm:$0xff] %v3335
    %3400 = vst [vmem:[%s3 + $0xe8] sm:$0xff] %v3336
    %3401 = vst [vmem:[%s3 + $0xf0] sm:$0xff] %v3337
    %3402 = vst [vmem:[%s3 + $0xf8] sm:$0xff] %v3338
  $region21: #{glm_mlp.1} parent=0 // pred_fallthru
    _
  // Predicated region
  $region22: #{glm_mlp.1} parent=0 // pred_check
    _
  $region23: #{glm_mlp.1} parent=0 // pred_check_branch
    %3404 = sbr.rel (0) target = $region25
  $region24: #{glm_mlp.1} parent=0 // pred_region
    _
  $region25: #{glm_mlp.1} parent=0 // pred_fallthru
    _
  // Predicated region
  $region26: #{glm_mlp.1} parent=0 // pred_check
    _
  $region27: #{glm_mlp.1} parent=0 // pred_check_branch
    %3406 = sbr.rel (0) target = $region29
  $region28: #{glm_mlp.1} parent=0 // pred_region
    _
  $region29: #{glm_mlp.1} parent=0 // pred_fallthru
    _

</llo_original>
